<compile_context>
chip_gen: v7x
topology: tpu7x:2x2x1
jax: 0.10.0
libtpu: 0.0.40
codegen_flags: <defaults>
</compile_context>

<pallas_src>
import functools
import math

import jax
import jax.numpy as jnp
from jax import lax
from jax.experimental import pallas as pl
from jax.experimental.pallas import tpu as pltpu


def _layer_norm_f32(h, gamma, beta, eps):
    mu = jnp.mean(h, axis=-1, keepdims=True)
    var = jnp.mean(jnp.square(h - mu), axis=-1, keepdims=True)
    return (h - mu) * lax.rsqrt(var + eps) * gamma + beta


def _encoder_layer_kernel(
    x_ref,                               # [TQ, D]        f32  residual tile
    q_ref,                               # [H, TQ, dk]    bf16 (pre-scaled by 1/sqrt(dk))
    kt_ref,                              # [H, dk, S]     bf16 (K pre-transposed)
    v_ref,                               # [H, S, dk]     bf16
    wo_ref, bo_ref,                      # [D, D] bf16, [1, D] f32
    g1_ref, be1_ref,                     # [1, D] f32
    w1_ref, b1_ref,                      # [D, d_inner] bf16, [1, d_inner] f32
    w2_ref, b2_ref,                      # [d_inner, D] bf16, [1, D] f32
    g2_ref, be2_ref,                     # [1, D] f32
    out_ref,                             # [TQ, D]
    ctx_scr,                             # VMEM [TQ, D] bf16: lane-concatenated head contexts
    *, n_head, eps,
):
    tq, D = x_ref.shape
    dk = D // n_head

    # ---- multi-head self attention ----
    # TODO(synk): static unroll over heads; switch to lax.fori_loop for n_head >= 8
    # and to flash-style KV tiling for long sequences.
    for h in range(n_head):
        s = jnp.dot(q_ref[h], kt_ref[h],
                    preferred_element_type=jnp.float32)              # [TQ, S]
        s = s - jnp.max(s, axis=-1, keepdims=True)
        p = jnp.exp(s)                                               # unnormalized, <= 1
        l = jnp.sum(p, axis=-1, keepdims=True)
        ctx = jnp.dot(p.astype(jnp.bfloat16), v_ref[h],
                      preferred_element_type=jnp.float32)            # [TQ, dk]
        ctx = ctx * pl.reciprocal(l, approx=True)                    # normalize after PV
        ctx_scr[:, h * dk:(h + 1) * dk] = ctx.astype(jnp.bfloat16)

    # Single full-depth (K = D) output projection.
    attn = jnp.dot(ctx_scr[...], wo_ref[...],
                   preferred_element_type=jnp.float32) + bo_ref[...]
    # TODO(synk): dropout omitted (eval-mode identity); attn_mask=None path only.
    h1 = _layer_norm_f32(x_ref[...] + attn, g1_ref[...], be1_ref[...], eps)

    # ---- position-wise feed-forward ----
    f = jnp.dot(h1.astype(jnp.bfloat16), w1_ref[...],
                preferred_element_type=jnp.float32) + b1_ref[...]
    f = jnp.maximum(f, 0.0)                                          # ReLU
    f = jnp.dot(f.astype(jnp.bfloat16), w2_ref[...],
                preferred_element_type=jnp.float32) + b2_ref[...]
    h2 = _layer_norm_f32(h1 + f, g2_ref[...], be2_ref[...], eps)

    out_ref[...] = h2.astype(out_ref.dtype)


def _vmem_capacity_bytes(default=64 * 1024 * 1024):
    try:
        return int(pltpu.get_tpu_info().vmem_capacity_bytes)
    except Exception:
        return default


def encoder_layer(x, params, *, n_head, eps=1e-6, tq=None, single_buffer_weights=True):
    """x: [B, S, D] float32. params: dict of f32 weights (see init_params)."""
    B, S, D = x.shape
    d_inner = params["w1"].shape[1]
    assert D % n_head == 0
    dk = D // n_head
    scale = 1.0 / math.sqrt(dk)

    cap = _vmem_capacity_bytes()
    if tq is None:
        # Bigger q-tiles on 128-MiB chips (v5e/v6e); 128 on v7x (64 MiB VMEM).
        tq = min(S, 256 if cap >= 96 * 1024 * 1024 else 128)
    assert S % tq == 0
    nq = S // tq
    # ~56 MiB on v7x, ~112 MiB on v5e/v6e.
    vmem_limit = int(max(32 * 1024 * 1024,
                         min(cap - 8 * 1024 * 1024, 112 * 1024 * 1024)))

    bf = lambda w: w.astype(jnp.bfloat16)

    # ---- QKV projection hoisted out of the kernel (plain XLA; bf16 MXU, f32 acc).
    # 1/sqrt(dk) is folded into the Q columns BEFORE the bf16 cast; heads are laid
    # out head-major and K is pre-transposed so in-kernel per-head access is a
    # leading-axis index and the score matmul is a plain NN matmul.
    wqkv = bf(jnp.concatenate([params["wq"] * scale, params["wk"], params["wv"]], axis=1))
    bqkv = jnp.concatenate([params["bq"] * scale, params["bk"], params["bv"]], axis=1)
    qkv = jnp.dot(x.astype(jnp.bfloat16), wqkv,
                  preferred_element_type=jnp.float32) + bqkv                   # [B, S, 3D]
    q = qkv[..., 0 * D:1 * D].reshape(B, S, n_head, dk)
    k = qkv[..., 1 * D:2 * D].reshape(B, S, n_head, dk)
    v = qkv[..., 2 * D:3 * D].reshape(B, S, n_head, dk)
    q_hm = bf(q.transpose(0, 2, 1, 3))       # [B, H, S, dk]
    kt_hm = bf(k.transpose(0, 2, 3, 1))      # [B, H, dk, S]
    v_hm = bf(v.transpose(0, 2, 1, 3))       # [B, H, S, dk]

    kernel = functools.partial(_encoder_layer_kernel, n_head=n_head, eps=eps)

    def call(single_buffer):
        # Constant-index weights: single-buffer (they are DMA'd once) if supported.
        kw = {"pipeline_mode": pl.Buffered(1)} if single_buffer else {}
        const = lambda shp: pl.BlockSpec(shp, lambda b, qt: (0, 0), **kw)
        weight_specs = [
            const((D, D)), const((1, D)),                   # wo, bo
            const((1, D)), const((1, D)),                   # ln1 gamma, beta
            const((D, d_inner)), const((1, d_inner)),       # w1, b1
            const((d_inner, D)), const((1, D)),             # w2, b2
            const((1, D)), const((1, D)),                   # ln2 gamma, beta
        ]
        return pl.pallas_call(
            kernel,
            out_shape=jax.ShapeDtypeStruct((B, S, D), x.dtype),
            grid_spec=pltpu.PrefetchScalarGridSpec(
                num_scalar_prefetch=0,
                grid=(B, nq),
                in_specs=[
                    pl.BlockSpec((None, tq, D), lambda b, qt: (b, qt, 0)),          # x residual tile
                    pl.BlockSpec((None, n_head, tq, dk), lambda b, qt: (b, 0, qt, 0)),  # Q (head-major)
                    pl.BlockSpec((None, n_head, dk, S), lambda b, qt: (b, 0, 0, 0)),    # K^T (per-batch resident)
                    pl.BlockSpec((None, n_head, S, dk), lambda b, qt: (b, 0, 0, 0)),    # V   (per-batch resident)
                ] + weight_specs,
                out_specs=pl.BlockSpec((None, tq, D), lambda b, qt: (b, qt, 0)),
                scratch_shapes=[
                    pltpu.VMEM((tq, D), jnp.bfloat16),   # lane-concatenated head contexts
                ],
            ),
            compiler_params=pltpu.CompilerParams(
                dimension_semantics=("parallel", "parallel"),
                vmem_limit_bytes=vmem_limit,
            ),
        )(
            x, q_hm, kt_hm, v_hm,
            bf(params["wo"]), params["bo"],
            params["ln1_g"], params["ln1_b"],
            bf(params["w1"]), params["b1"],
            bf(params["w2"]), params["b2"],
            params["ln2_g"], params["ln2_b"],
        )

    if single_buffer_weights:
        try:
            return call(True)
        except Exception:
            # TODO(synk): pl.Buffered(1) (single-buffered constant weights) not
            # accepted by this JAX build; fall back to default double buffering.
            return call(False)
    return call(False)


def encoder_layer_ref(x, params, *, n_head, eps=1e-6):
    """Pure-JAX f32 reference (same math as the PyTorch module, eval mode)."""
    B, S, D = x.shape
    dk = D // n_head
    q = x @ params["wq"] + params["bq"]
    k = x @ params["wk"] + params["bk"]
    v = x @ params["wv"] + params["bv"]
    qh = q.reshape(B, S, n_head, dk).transpose(0, 2, 1, 3)
    kh = k.reshape(B, S, n_head, dk).transpose(0, 2, 1, 3)
    vh = v.reshape(B, S, n_head, dk).transpose(0, 2, 1, 3)
    s = jnp.einsum("bhqd,bhkd->bhqk", qh, kh) / math.sqrt(dk)
    p = jax.nn.softmax(s, axis=-1)
    ctx = jnp.einsum("bhqk,bhkd->bhqd", p, vh).transpose(0, 2, 1, 3).reshape(B, S, D)
    attn_out = ctx @ params["wo"] + params["bo"]

    def ln(h, g, b):
        mu = jnp.mean(h, axis=-1, keepdims=True)
        var = jnp.mean((h - mu) ** 2, axis=-1, keepdims=True)
        return (h - mu) / jnp.sqrt(var + eps) * g + b

    h1 = ln(x + attn_out, params["ln1_g"], params["ln1_b"])
    f = jax.nn.relu(h1 @ params["w1"] + params["b1"]) @ params["w2"] + params["b2"]
    return ln(h1 + f, params["ln2_g"], params["ln2_b"])


def init_params(key, d_model, d_inner):
    ks = jax.random.split(key, 8)
    n = lambda k, shp: (0.02 * jax.random.normal(k, shp)).astype(jnp.float32)
    return {
        "wq": n(ks[0], (d_model, d_model)), "bq": jnp.zeros((1, d_model), jnp.float32),
        "wk": n(ks[1], (d_model, d_model)), "bk": jnp.zeros((1, d_model), jnp.float32),
        "wv": n(ks[2], (d_model, d_model)), "bv": jnp.zeros((1, d_model), jnp.float32),
        "wo": n(ks[3], (d_model, d_model)), "bo": jnp.zeros((1, d_model), jnp.float32),
        "ln1_g": jnp.ones((1, d_model), jnp.float32),
        "ln1_b": jnp.zeros((1, d_model), jnp.float32),
        "w1": n(ks[4], (d_model, d_inner)), "b1": jnp.zeros((1, d_inner), jnp.float32),
        "w2": n(ks[5], (d_inner, d_model)), "b2": jnp.zeros((1, d_model), jnp.float32),
        "ln2_g": jnp.ones((1, d_model), jnp.float32),
        "ln2_b": jnp.zeros((1, d_model), jnp.float32),
    }


if __name__ == "__main__":
    # Small shapes; S=16 with tq=8 exercises the multi-q-tile (grid=(B, 2)) path.
    B, S, d_model, n_head, d_inner = 2, 16, 32, 4, 64

    key = jax.random.PRNGKey(0)
    k_x, k_p = jax.random.split(key)
    x = jax.random.normal(k_x, (B, S, d_model), dtype=jnp.float32)
    params = init_params(k_p, d_model, d_inner)

    out = encoder_layer(x, params, n_head=n_head, tq=8)
    out = jax.block_until_ready(out)

    ref = encoder_layer_ref(x, params, n_head=n_head)
    assert out.shape == (B, S, d_model)
    # bf16 MXU operands (f32 accumulate) + approx reciprocal => loose tolerance.
    err = float(jnp.max(jnp.abs(out - ref)))
    assert err < 2e-2, f"mismatch vs pure-JAX reference: {err}"

    print("KERNEL_OK")
</pallas_src>

<mosaic_0001>
module attributes {stable_mosaic.version = 11 : i64} {
  func.func @_encoder_layer_kernel(%arg0: i32, %arg1: i32, %arg2: memref<1x8x32xf32, #tpu.memory_space<vmem>>, %arg3: memref<1x4x8x8xbf16, #tpu.memory_space<vmem>>, %arg4: memref<1x4x8x16xbf16, #tpu.memory_space<vmem>>, %arg5: memref<1x4x16x8xbf16, #tpu.memory_space<vmem>>, %arg6: memref<32x32xbf16, #tpu.memory_space<vmem>>, %arg7: memref<1x32xf32, #tpu.memory_space<vmem>>, %arg8: memref<1x32xf32, #tpu.memory_space<vmem>>, %arg9: memref<1x32xf32, #tpu.memory_space<vmem>>, %arg10: memref<32x64xbf16, #tpu.memory_space<vmem>>, %arg11: memref<1x64xf32, #tpu.memory_space<vmem>>, %arg12: memref<64x32xbf16, #tpu.memory_space<vmem>>, %arg13: memref<1x32xf32, #tpu.memory_space<vmem>>, %arg14: memref<1x32xf32, #tpu.memory_space<vmem>>, %arg15: memref<1x32xf32, #tpu.memory_space<vmem>>, %arg16: memref<1x8x32xf32, #tpu.memory_space<vmem>>, %arg17: memref<8x32xbf16, #tpu.memory_space<vmem>>) attributes {dimension_semantics = [#tpu.dimension_semantics<parallel>, #tpu.dimension_semantics<parallel>], iteration_bounds = array<i64: 2, 2>, scalar_prefetch = 0 : i64, scratch_operands = 1 : i64, tpu.core_type = #tpu.core_type<tc>, window_params = [{transform_indices = @transform_0, window_bounds = array<i64: 1, 8, 32>}, {transform_indices = @transform_1, window_bounds = array<i64: 1, 4, 8, 8>}, {transform_indices = @transform_2, window_bounds = array<i64: 1, 4, 8, 16>}, {transform_indices = @transform_3, window_bounds = array<i64: 1, 4, 16, 8>}, {pipeline_mode = #tpu.pipeline_mode<synchronous>, transform_indices = @transform_4, window_bounds = array<i64: 32, 32>}, {pipeline_mode = #tpu.pipeline_mode<synchronous>, transform_indices = @transform_5, window_bounds = array<i64: 1, 32>}, {pipeline_mode = #tpu.pipeline_mode<synchronous>, transform_indices = @transform_6, window_bounds = array<i64: 1, 32>}, {pipeline_mode = #tpu.pipeline_mode<synchronous>, transform_indices = @transform_7, window_bounds = array<i64: 1, 32>}, {pipeline_mode = #tpu.pipeline_mode<synchronous>, transform_indices = @transform_8, window_bounds = array<i64: 32, 64>}, {pipeline_mode = #tpu.pipeline_mode<synchronous>, transform_indices = @transform_9, window_bounds = array<i64: 1, 64>}, {pipeline_mode = #tpu.pipeline_mode<synchronous>, transform_indices = @transform_10, window_bounds = array<i64: 64, 32>}, {pipeline_mode = #tpu.pipeline_mode<synchronous>, transform_indices = @transform_11, window_bounds = array<i64: 1, 32>}, {pipeline_mode = #tpu.pipeline_mode<synchronous>, transform_indices = @transform_12, window_bounds = array<i64: 1, 32>}, {pipeline_mode = #tpu.pipeline_mode<synchronous>, transform_indices = @transform_13, window_bounds = array<i64: 1, 32>}, {transform_indices = @transform_14, window_bounds = array<i64: 1, 8, 32>}]} {
    %c0 = arith.constant 0 : index
    %c0_0 = arith.constant 0 : index
    %c0_1 = arith.constant 0 : index
    %c0_2 = arith.constant 0 : index
    %0 = vector.load %arg3[%c0, %c0_0, %c0_1, %c0_2] : memref<1x4x8x8xbf16, #tpu.memory_space<vmem>>, vector<1x1x8x8xbf16>
    %1 = vector.shape_cast %0 : vector<1x1x8x8xbf16> to vector<8x8xbf16>
    %c0_3 = arith.constant 0 : index
    %c0_4 = arith.constant 0 : index
    %c0_5 = arith.constant 0 : index
    %c0_6 = arith.constant 0 : index
    %2 = vector.load %arg4[%c0_3, %c0_4, %c0_5, %c0_6] : memref<1x4x8x16xbf16, #tpu.memory_space<vmem>>, vector<1x1x8x16xbf16>
    %3 = vector.shape_cast %2 : vector<1x1x8x16xbf16> to vector<8x16xbf16>
    %cst = arith.constant dense<0.000000e+00> : vector<8x16xf32>
    %4 = tpu.matmul %1, %3, %cst {dimension_numbers = #tpu.dot_dimension_numbers<[1], [0], [0], [1], [0, 0, 1, 1], [], []>} : vector<8x8xbf16>, vector<8x16xbf16>, vector<8x16xf32> -> vector<8x16xf32>
    %cst_7 = arith.constant dense<0xFF800000> : vector<8xf32>
    %5 = vector.multi_reduction <maximumf>, %4, %cst_7 [1] : vector<8x16xf32> to vector<8xf32>
    %6 = vector.shape_cast %5 : vector<8xf32> to vector<8x1xf32>
    %7 = vector.broadcast %6 : vector<8x1xf32> to vector<8x16xf32>
    %8 = arith.subf %4, %7 : vector<8x16xf32>
    %9 = math.exp %8 : vector<8x16xf32>
    %cst_8 = arith.constant dense<0.000000e+00> : vector<8xf32>
    %10 = vector.multi_reduction <add>, %9, %cst_8 [1] : vector<8x16xf32> to vector<8xf32>
    %11 = vector.shape_cast %10 : vector<8xf32> to vector<8x1xf32>
    %12 = arith.truncf %9 : vector<8x16xf32> to vector<8x16xbf16>
    %c0_9 = arith.constant 0 : index
    %c0_10 = arith.constant 0 : index
    %c0_11 = arith.constant 0 : index
    %c0_12 = arith.constant 0 : index
    %13 = vector.load %arg5[%c0_9, %c0_10, %c0_11, %c0_12] : memref<1x4x16x8xbf16, #tpu.memory_space<vmem>>, vector<1x1x16x8xbf16>
    %14 = vector.shape_cast %13 : vector<1x1x16x8xbf16> to vector<16x8xbf16>
    %cst_13 = arith.constant dense<0.000000e+00> : vector<8x8xf32>
    %15 = tpu.matmul %12, %14, %cst_13 {dimension_numbers = #tpu.dot_dimension_numbers<[1], [0], [0], [1], [0, 0, 1, 1], [], []>} : vector<8x16xbf16>, vector<16x8xbf16>, vector<8x8xf32> -> vector<8x8xf32>
    %16 = tpu.reciprocal %11 {approx = true} : vector<8x1xf32> -> vector<8x1xf32>
    %17 = vector.broadcast %16 : vector<8x1xf32> to vector<8x8xf32>
    %18 = arith.mulf %15, %17 : vector<8x8xf32>
    %19 = arith.truncf %18 : vector<8x8xf32> to vector<8x8xbf16>
    %c0_14 = arith.constant 0 : index
    %c0_15 = arith.constant 0 : index
    %20 = vector.load %arg17[%c0_14, %c0_15] : memref<8x32xbf16, #tpu.memory_space<vmem>>, vector<8x8xbf16>
    tpu.vector_store %arg17[%c0_14, %c0_15], %19 {strides = array<i32>} : memref<8x32xbf16, #tpu.memory_space<vmem>>, vector<8x8xbf16>,
    %c0_16 = arith.constant 0 : index
    %c1 = arith.constant 1 : index
    %c0_17 = arith.constant 0 : index
    %c0_18 = arith.constant 0 : index
    %21 = vector.load %arg3[%c0_16, %c1, %c0_17, %c0_18] : memref<1x4x8x8xbf16, #tpu.memory_space<vmem>>, vector<1x1x8x8xbf16>
    %22 = vector.shape_cast %21 : vector<1x1x8x8xbf16> to vector<8x8xbf16>
    %c0_19 = arith.constant 0 : index
    %c1_20 = arith.constant 1 : index
    %c0_21 = arith.constant 0 : index
    %c0_22 = arith.constant 0 : index
    %23 = vector.load %arg4[%c0_19, %c1_20, %c0_21, %c0_22] : memref<1x4x8x16xbf16, #tpu.memory_space<vmem>>, vector<1x1x8x16xbf16>
    %24 = vector.shape_cast %23 : vector<1x1x8x16xbf16> to vector<8x16xbf16>
    %cst_23 = arith.constant dense<0.000000e+00> : vector<8x16xf32>
    %25 = tpu.matmul %22, %24, %cst_23 {dimension_numbers = #tpu.dot_dimension_numbers<[1], [0], [0], [1], [0, 0, 1, 1], [], []>} : vector<8x8xbf16>, vector<8x16xbf16>, vector<8x16xf32> -> vector<8x16xf32>
    %cst_24 = arith.constant dense<0xFF800000> : vector<8xf32>
    %26 = vector.multi_reduction <maximumf>, %25, %cst_24 [1] : vector<8x16xf32> to vector<8xf32>
    %27 = vector.shape_cast %26 : vector<8xf32> to vector<8x1xf32>
    %28 = vector.broadcast %27 : vector<8x1xf32> to vector<8x16xf32>
    %29 = arith.subf %25, %28 : vector<8x16xf32>
    %30 = math.exp %29 : vector<8x16xf32>
    %cst_25 = arith.constant dense<0.000000e+00> : vector<8xf32>
    %31 = vector.multi_reduction <add>, %30, %cst_25 [1] : vector<8x16xf32> to vector<8xf32>
    %32 = vector.shape_cast %31 : vector<8xf32> to vector<8x1xf32>
    %33 = arith.truncf %30 : vector<8x16xf32> to vector<8x16xbf16>
    %c0_26 = arith.constant 0 : index
    %c1_27 = arith.constant 1 : index
    %c0_28 = arith.constant 0 : index
    %c0_29 = arith.constant 0 : index
    %34 = vector.load %arg5[%c0_26, %c1_27, %c0_28, %c0_29] : memref<1x4x16x8xbf16, #tpu.memory_space<vmem>>, vector<1x1x16x8xbf16>
    %35 = vector.shape_cast %34 : vector<1x1x16x8xbf16> to vector<16x8xbf16>
    %cst_30 = arith.constant dense<0.000000e+00> : vector<8x8xf32>
    %36 = tpu.matmul %33, %35, %cst_30 {dimension_numbers = #tpu.dot_dimension_numbers<[1], [0], [0], [1], [0, 0, 1, 1], [], []>} : vector<8x16xbf16>, vector<16x8xbf16>, vector<8x8xf32> -> vector<8x8xf32>
    %37 = tpu.reciprocal %32 {approx = true} : vector<8x1xf32> -> vector<8x1xf32>
    %38 = vector.broadcast %37 : vector<8x1xf32> to vector<8x8xf32>
    %39 = arith.mulf %36, %38 : vector<8x8xf32>
    %40 = arith.truncf %39 : vector<8x8xf32> to vector<8x8xbf16>
    %c0_31 = arith.constant 0 : index
    %c8 = arith.constant 8 : index
    %41 = vector.load %arg17[%c0_31, %c8] : memref<8x32xbf16, #tpu.memory_space<vmem>>, vector<8x8xbf16>
    tpu.vector_store %arg17[%c0_31, %c8], %40 {strides = array<i32>} : memref<8x32xbf16, #tpu.memory_space<vmem>>, vector<8x8xbf16>,
    %c0_32 = arith.constant 0 : index
    %c2 = arith.constant 2 : index
    %c0_33 = arith.constant 0 : index
    %c0_34 = arith.constant 0 : index
    %42 = vector.load %arg3[%c0_32, %c2, %c0_33, %c0_34] : memref<1x4x8x8xbf16, #tpu.memory_space<vmem>>, vector<1x1x8x8xbf16>
    %43 = vector.shape_cast %42 : vector<1x1x8x8xbf16> to vector<8x8xbf16>
    %c0_35 = arith.constant 0 : index
    %c2_36 = arith.constant 2 : index
    %c0_37 = arith.constant 0 : index
    %c0_38 = arith.constant 0 : index
    %44 = vector.load %arg4[%c0_35, %c2_36, %c0_37, %c0_38] : memref<1x4x8x16xbf16, #tpu.memory_space<vmem>>, vector<1x1x8x16xbf16>
    %45 = vector.shape_cast %44 : vector<1x1x8x16xbf16> to vector<8x16xbf16>
    %cst_39 = arith.constant dense<0.000000e+00> : vector<8x16xf32>
    %46 = tpu.matmul %43, %45, %cst_39 {dimension_numbers = #tpu.dot_dimension_numbers<[1], [0], [0], [1], [0, 0, 1, 1], [], []>} : vector<8x8xbf16>, vector<8x16xbf16>, vector<8x16xf32> -> vector<8x16xf32>
    %cst_40 = arith.constant dense<0xFF800000> : vector<8xf32>
    %47 = vector.multi_reduction <maximumf>, %46, %cst_40 [1] : vector<8x16xf32> to vector<8xf32>
    %48 = vector.shape_cast %47 : vector<8xf32> to vector<8x1xf32>
    %49 = vector.broadcast %48 : vector<8x1xf32> to vector<8x16xf32>
    %50 = arith.subf %46, %49 : vector<8x16xf32>
    %51 = math.exp %50 : vector<8x16xf32>
    %cst_41 = arith.constant dense<0.000000e+00> : vector<8xf32>
    %52 = vector.multi_reduction <add>, %51, %cst_41 [1] : vector<8x16xf32> to vector<8xf32>
    %53 = vector.shape_cast %52 : vector<8xf32> to vector<8x1xf32>
    %54 = arith.truncf %51 : vector<8x16xf32> to vector<8x16xbf16>
    %c0_42 = arith.constant 0 : index
    %c2_43 = arith.constant 2 : index
    %c0_44 = arith.constant 0 : index
    %c0_45 = arith.constant 0 : index
    %55 = vector.load %arg5[%c0_42, %c2_43, %c0_44, %c0_45] : memref<1x4x16x8xbf16, #tpu.memory_space<vmem>>, vector<1x1x16x8xbf16>
    %56 = vector.shape_cast %55 : vector<1x1x16x8xbf16> to vector<16x8xbf16>
    %cst_46 = arith.constant dense<0.000000e+00> : vector<8x8xf32>
    %57 = tpu.matmul %54, %56, %cst_46 {dimension_numbers = #tpu.dot_dimension_numbers<[1], [0], [0], [1], [0, 0, 1, 1], [], []>} : vector<8x16xbf16>, vector<16x8xbf16>, vector<8x8xf32> -> vector<8x8xf32>
    %58 = tpu.reciprocal %53 {approx = true} : vector<8x1xf32> -> vector<8x1xf32>
    %59 = vector.broadcast %58 : vector<8x1xf32> to vector<8x8xf32>
    %60 = arith.mulf %57, %59 : vector<8x8xf32>
    %61 = arith.truncf %60 : vector<8x8xf32> to vector<8x8xbf16>
    %c0_47 = arith.constant 0 : index
    %c16 = arith.constant 16 : index
    %62 = vector.load %arg17[%c0_47, %c16] : memref<8x32xbf16, #tpu.memory_space<vmem>>, vector<8x8xbf16>
    tpu.vector_store %arg17[%c0_47, %c16], %61 {strides = array<i32>} : memref<8x32xbf16, #tpu.memory_space<vmem>>, vector<8x8xbf16>,
    %c0_48 = arith.constant 0 : index
    %c3 = arith.constant 3 : index
    %c0_49 = arith.constant 0 : index
    %c0_50 = arith.constant 0 : index
    %63 = vector.load %arg3[%c0_48, %c3, %c0_49, %c0_50] : memref<1x4x8x8xbf16, #tpu.memory_space<vmem>>, vector<1x1x8x8xbf16>
    %64 = vector.shape_cast %63 : vector<1x1x8x8xbf16> to vector<8x8xbf16>
    %c0_51 = arith.constant 0 : index
    %c3_52 = arith.constant 3 : index
    %c0_53 = arith.constant 0 : index
    %c0_54 = arith.constant 0 : index
    %65 = vector.load %arg4[%c0_51, %c3_52, %c0_53, %c0_54] : memref<1x4x8x16xbf16, #tpu.memory_space<vmem>>, vector<1x1x8x16xbf16>
    %66 = vector.shape_cast %65 : vector<1x1x8x16xbf16> to vector<8x16xbf16>
    %cst_55 = arith.constant dense<0.000000e+00> : vector<8x16xf32>
    %67 = tpu.matmul %64, %66, %cst_55 {dimension_numbers = #tpu.dot_dimension_numbers<[1], [0], [0], [1], [0, 0, 1, 1], [], []>} : vector<8x8xbf16>, vector<8x16xbf16>, vector<8x16xf32> -> vector<8x16xf32>
    %cst_56 = arith.constant dense<0xFF800000> : vector<8xf32>
    %68 = vector.multi_reduction <maximumf>, %67, %cst_56 [1] : vector<8x16xf32> to vector<8xf32>
    %69 = vector.shape_cast %68 : vector<8xf32> to vector<8x1xf32>
    %70 = vector.broadcast %69 : vector<8x1xf32> to vector<8x16xf32>
    %71 = arith.subf %67, %70 : vector<8x16xf32>
    %72 = math.exp %71 : vector<8x16xf32>
    %cst_57 = arith.constant dense<0.000000e+00> : vector<8xf32>
    %73 = vector.multi_reduction <add>, %72, %cst_57 [1] : vector<8x16xf32> to vector<8xf32>
    %74 = vector.shape_cast %73 : vector<8xf32> to vector<8x1xf32>
    %75 = arith.truncf %72 : vector<8x16xf32> to vector<8x16xbf16>
    %c0_58 = arith.constant 0 : index
    %c3_59 = arith.constant 3 : index
    %c0_60 = arith.constant 0 : index
    %c0_61 = arith.constant 0 : index
    %76 = vector.load %arg5[%c0_58, %c3_59, %c0_60, %c0_61] : memref<1x4x16x8xbf16, #tpu.memory_space<vmem>>, vector<1x1x16x8xbf16>
    %77 = vector.shape_cast %76 : vector<1x1x16x8xbf16> to vector<16x8xbf16>
    %cst_62 = arith.constant dense<0.000000e+00> : vector<8x8xf32>
    %78 = tpu.matmul %75, %77, %cst_62 {dimension_numbers = #tpu.dot_dimension_numbers<[1], [0], [0], [1], [0, 0, 1, 1], [], []>} : vector<8x16xbf16>, vector<16x8xbf16>, vector<8x8xf32> -> vector<8x8xf32>
    %79 = tpu.reciprocal %74 {approx = true} : vector<8x1xf32> -> vector<8x1xf32>
    %80 = vector.broadcast %79 : vector<8x1xf32> to vector<8x8xf32>
    %81 = arith.mulf %78, %80 : vector<8x8xf32>
    %82 = arith.truncf %81 : vector<8x8xf32> to vector<8x8xbf16>
    %c0_63 = arith.constant 0 : index
    %c24 = arith.constant 24 : index
    %83 = vector.load %arg17[%c0_63, %c24] : memref<8x32xbf16, #tpu.memory_space<vmem>>, vector<8x8xbf16>
    tpu.vector_store %arg17[%c0_63, %c24], %82 {strides = array<i32>} : memref<8x32xbf16, #tpu.memory_space<vmem>>, vector<8x8xbf16>,
    %c0_64 = arith.constant 0 : index
    %c0_65 = arith.constant 0 : index
    %84 = vector.load %arg17[%c0_64, %c0_65] : memref<8x32xbf16, #tpu.memory_space<vmem>>, vector<8x32xbf16>
    %c0_66 = arith.constant 0 : index
    %c0_67 = arith.constant 0 : index
    %85 = vector.load %arg6[%c0_66, %c0_67] : memref<32x32xbf16, #tpu.memory_space<vmem>>, vector<32x32xbf16>
    %cst_68 = arith.constant dense<0.000000e+00> : vector<8x32xf32>
    %86 = tpu.matmul %84, %85, %cst_68 {dimension_numbers = #tpu.dot_dimension_numbers<[1], [0], [0], [1], [0, 0, 1, 1], [], []>} : vector<8x32xbf16>, vector<32x32xbf16>, vector<8x32xf32> -> vector<8x32xf32>
    %c0_69 = arith.constant 0 : index
    %c0_70 = arith.constant 0 : index
    %87 = vector.load %arg7[%c0_69, %c0_70] : memref<1x32xf32, #tpu.memory_space<vmem>>, vector<1x32xf32>
    %88 = vector.broadcast %87 : vector<1x32xf32> to vector<8x32xf32>
    %89 = arith.addf %86, %88 : vector<8x32xf32>
    %c0_71 = arith.constant 0 : index
    %c0_72 = arith.constant 0 : index
    %c0_73 = arith.constant 0 : index
    %90 = vector.load %arg2[%c0_71, %c0_72, %c0_73] : memref<1x8x32xf32, #tpu.memory_space<vmem>>, vector<1x8x32xf32>
    %91 = vector.shape_cast %90 : vector<1x8x32xf32> to vector<8x32xf32>
    %92 = arith.addf %91, %89 : vector<8x32xf32>
    %c0_74 = arith.constant 0 : index
    %c0_75 = arith.constant 0 : index
    %93 = vector.load %arg8[%c0_74, %c0_75] : memref<1x32xf32, #tpu.memory_space<vmem>>, vector<1x32xf32>
    %c0_76 = arith.constant 0 : index
    %c0_77 = arith.constant 0 : index
    %94 = vector.load %arg9[%c0_76, %c0_77] : memref<1x32xf32, #tpu.memory_space<vmem>>, vector<1x32xf32>
    %cst_78 = arith.constant dense<0.000000e+00> : vector<8xf32>
    %95 = vector.multi_reduction <add>, %92, %cst_78 [1] : vector<8x32xf32> to vector<8xf32>
    %96 = vector.shape_cast %95 : vector<8xf32> to vector<8x1xf32>
    %cst_79 = arith.constant 3.200000e+01 : f32
    %97 = vector.broadcast %cst_79 : f32 to vector<8x1xf32>
    %98 = arith.divf %96, %97 : vector<8x1xf32>
    %99 = vector.broadcast %98 : vector<8x1xf32> to vector<8x32xf32>
    %100 = arith.subf %92, %99 : vector<8x32xf32>
    %101 = arith.mulf %100, %100 : vector<8x32xf32>
    %cst_80 = arith.constant dense<0.000000e+00> : vector<8xf32>
    %102 = vector.multi_reduction <add>, %101, %cst_80 [1] : vector<8x32xf32> to vector<8xf32>
    %103 = vector.shape_cast %102 : vector<8xf32> to vector<8x1xf32>
    %cst_81 = arith.constant 3.200000e+01 : f32
    %104 = vector.broadcast %cst_81 : f32 to vector<8x1xf32>
    %105 = arith.divf %103, %104 : vector<8x1xf32>
    %106 = vector.broadcast %98 : vector<8x1xf32> to vector<8x32xf32>
    %107 = arith.subf %92, %106 : vector<8x32xf32>
    %cst_82 = arith.constant 9.99999997E-7 : f32
    %108 = vector.broadcast %cst_82 : f32 to vector<8x1xf32>
    %109 = arith.addf %105, %108 : vector<8x1xf32>
    %110 = math.rsqrt %109 : vector<8x1xf32>
    %111 = vector.broadcast %110 : vector<8x1xf32> to vector<8x32xf32>
    %112 = arith.mulf %107, %111 : vector<8x32xf32>
    %113 = vector.broadcast %93 : vector<1x32xf32> to vector<8x32xf32>
    %114 = arith.mulf %112, %113 : vector<8x32xf32>
    %115 = vector.broadcast %94 : vector<1x32xf32> to vector<8x32xf32>
    %116 = arith.addf %114, %115 : vector<8x32xf32>
    %117 = arith.truncf %116 : vector<8x32xf32> to vector<8x32xbf16>
    %c0_83 = arith.constant 0 : index
    %c0_84 = arith.constant 0 : index
    %118 = vector.load %arg10[%c0_83, %c0_84] : memref<32x64xbf16, #tpu.memory_space<vmem>>, vector<32x64xbf16>
    %cst_85 = arith.constant dense<0.000000e+00> : vector<8x64xf32>
    %119 = tpu.matmul %117, %118, %cst_85 {dimension_numbers = #tpu.dot_dimension_numbers<[1], [0], [0], [1], [0, 0, 1, 1], [], []>} : vector<8x32xbf16>, vector<32x64xbf16>, vector<8x64xf32> -> vector<8x64xf32>
    %c0_86 = arith.constant 0 : index
    %c0_87 = arith.constant 0 : index
    %120 = vector.load %arg11[%c0_86, %c0_87] : memref<1x64xf32, #tpu.memory_space<vmem>>, vector<1x64xf32>
    %121 = vector.broadcast %120 : vector<1x64xf32> to vector<8x64xf32>
    %122 = arith.addf %119, %121 : vector<8x64xf32>
    %cst_88 = arith.constant 0.000000e+00 : f32
    %123 = vector.broadcast %cst_88 : f32 to vector<8x64xf32>
    %124 = arith.maximumf %122, %123 : vector<8x64xf32>
    %125 = arith.truncf %124 : vector<8x64xf32> to vector<8x64xbf16>
    %c0_89 = arith.constant 0 : index
    %c0_90 = arith.constant 0 : index
    %126 = vector.load %arg12[%c0_89, %c0_90] : memref<64x32xbf16, #tpu.memory_space<vmem>>, vector<64x32xbf16>
    %cst_91 = arith.constant dense<0.000000e+00> : vector<8x32xf32>
    %127 = tpu.matmul %125, %126, %cst_91 {dimension_numbers = #tpu.dot_dimension_numbers<[1], [0], [0], [1], [0, 0, 1, 1], [], []>} : vector<8x64xbf16>, vector<64x32xbf16>, vector<8x32xf32> -> vector<8x32xf32>
    %c0_92 = arith.constant 0 : index
    %c0_93 = arith.constant 0 : index
    %128 = vector.load %arg13[%c0_92, %c0_93] : memref<1x32xf32, #tpu.memory_space<vmem>>, vector<1x32xf32>
    %129 = vector.broadcast %128 : vector<1x32xf32> to vector<8x32xf32>
    %130 = arith.addf %127, %129 : vector<8x32xf32>
    %131 = arith.addf %116, %130 : vector<8x32xf32>
    %c0_94 = arith.constant 0 : index
    %c0_95 = arith.constant 0 : index
    %132 = vector.load %arg14[%c0_94, %c0_95] : memref<1x32xf32, #tpu.memory_space<vmem>>, vector<1x32xf32>
    %c0_96 = arith.constant 0 : index
    %c0_97 = arith.constant 0 : index
    %133 = vector.load %arg15[%c0_96, %c0_97] : memref<1x32xf32, #tpu.memory_space<vmem>>, vector<1x32xf32>
    %cst_98 = arith.constant dense<0.000000e+00> : vector<8xf32>
    %134 = vector.multi_reduction <add>, %131, %cst_98 [1] : vector<8x32xf32> to vector<8xf32>
    %135 = vector.shape_cast %134 : vector<8xf32> to vector<8x1xf32>
    %cst_99 = arith.constant 3.200000e+01 : f32
    %136 = vector.broadcast %cst_99 : f32 to vector<8x1xf32>
    %137 = arith.divf %135, %136 : vector<8x1xf32>
    %138 = vector.broadcast %137 : vector<8x1xf32> to vector<8x32xf32>
    %139 = arith.subf %131, %138 : vector<8x32xf32>
    %140 = arith.mulf %139, %139 : vector<8x32xf32>
    %cst_100 = arith.constant dense<0.000000e+00> : vector<8xf32>
    %141 = vector.multi_reduction <add>, %140, %cst_100 [1] : vector<8x32xf32> to vector<8xf32>
    %142 = vector.shape_cast %141 : vector<8xf32> to vector<8x1xf32>
    %cst_101 = arith.constant 3.200000e+01 : f32
    %143 = vector.broadcast %cst_101 : f32 to vector<8x1xf32>
    %144 = arith.divf %142, %143 : vector<8x1xf32>
    %145 = vector.broadcast %137 : vector<8x1xf32> to vector<8x32xf32>
    %146 = arith.subf %131, %145 : vector<8x32xf32>
    %cst_102 = arith.constant 9.99999997E-7 : f32
    %147 = vector.broadcast %cst_102 : f32 to vector<8x1xf32>
    %148 = arith.addf %144, %147 : vector<8x1xf32>
    %149 = math.rsqrt %148 : vector<8x1xf32>
    %150 = vector.broadcast %149 : vector<8x1xf32> to vector<8x32xf32>
    %151 = arith.mulf %146, %150 : vector<8x32xf32>
    %152 = vector.broadcast %132 : vector<1x32xf32> to vector<8x32xf32>
    %153 = arith.mulf %151, %152 : vector<8x32xf32>
    %154 = vector.broadcast %133 : vector<1x32xf32> to vector<8x32xf32>
    %155 = arith.addf %153, %154 : vector<8x32xf32>
    %c0_103 = arith.constant 0 : index
    %c0_104 = arith.constant 0 : index
    %c0_105 = arith.constant 0 : index
    %156 = vector.load %arg16[%c0_103, %c0_104, %c0_105] : memref<1x8x32xf32, #tpu.memory_space<vmem>>, vector<1x8x32xf32>
    %157 = vector.shape_cast %156 : vector<1x8x32xf32> to vector<8x32xf32>
    %158 = vector.shape_cast %155 : vector<8x32xf32> to vector<1x8x32xf32>
    tpu.vector_store %arg16[%c0_103, %c0_104, %c0_105], %158 {strides = array<i32>} : memref<1x8x32xf32, #tpu.memory_space<vmem>>, vector<1x8x32xf32>,
    return
  }
  func.func @transform_0(%arg0: i32, %arg1: i32) -> (i32, i32, i32) {
    %c0_i32 = arith.constant 0 : i32
    %c0_i32_0 = arith.constant 0 : i32
    return %arg0, %arg1, %c0_i32 : i32, i32, i32
  }
  func.func @transform_1(%arg0: i32, %arg1: i32) -> (i32, i32, i32, i32) {
    %c0_i32 = arith.constant 0 : i32
    %c0_i32_0 = arith.constant 0 : i32
    %c0_i32_1 = arith.constant 0 : i32
    return %arg0, %c0_i32, %arg1, %c0_i32_0 : i32, i32, i32, i32
  }
  func.func @transform_2(%arg0: i32, %arg1: i32) -> (i32, i32, i32, i32) {
    %c0_i32 = arith.constant 0 : i32
    %c0_i32_0 = arith.constant 0 : i32
    %c0_i32_1 = arith.constant 0 : i32
    %c0_i32_2 = arith.constant 0 : i32
    return %arg0, %c0_i32, %c0_i32_0, %c0_i32_1 : i32, i32, i32, i32
  }
  func.func @transform_3(%arg0: i32, %arg1: i32) -> (i32, i32, i32, i32) {
    %c0_i32 = arith.constant 0 : i32
    %c0_i32_0 = arith.constant 0 : i32
    %c0_i32_1 = arith.constant 0 : i32
    %c0_i32_2 = arith.constant 0 : i32
    return %arg0, %c0_i32, %c0_i32_0, %c0_i32_1 : i32, i32, i32, i32
  }
  func.func @transform_4(%arg0: i32, %arg1: i32) -> (i32, i32) {
    %c0_i32 = arith.constant 0 : i32
    %c0_i32_0 = arith.constant 0 : i32
    %c0_i32_1 = arith.constant 0 : i32
    return %c0_i32, %c0_i32_0 : i32, i32
  }
  func.func @transform_5(%arg0: i32, %arg1: i32) -> (i32, i32) {
    %c0_i32 = arith.constant 0 : i32
    %c0_i32_0 = arith.constant 0 : i32
    %c0_i32_1 = arith.constant 0 : i32
    return %c0_i32, %c0_i32_0 : i32, i32
  }
  func.func @transform_6(%arg0: i32, %arg1: i32) -> (i32, i32) {
    %c0_i32 = arith.constant 0 : i32
    %c0_i32_0 = arith.constant 0 : i32
    %c0_i32_1 = arith.constant 0 : i32
    return %c0_i32, %c0_i32_0 : i32, i32
  }
  func.func @transform_7(%arg0: i32, %arg1: i32) -> (i32, i32) {
    %c0_i32 = arith.constant 0 : i32
    %c0_i32_0 = arith.constant 0 : i32
    %c0_i32_1 = arith.constant 0 : i32
    return %c0_i32, %c0_i32_0 : i32, i32
  }
  func.func @transform_8(%arg0: i32, %arg1: i32) -> (i32, i32) {
    %c0_i32 = arith.constant 0 : i32
    %c0_i32_0 = arith.constant 0 : i32
    %c0_i32_1 = arith.constant 0 : i32
    return %c0_i32, %c0_i32_0 : i32, i32
  }
  func.func @transform_9(%arg0: i32, %arg1: i32) -> (i32, i32) {
    %c0_i32 = arith.constant 0 : i32
    %c0_i32_0 = arith.constant 0 : i32
    %c0_i32_1 = arith.constant 0 : i32
    return %c0_i32, %c0_i32_0 : i32, i32
  }
  func.func @transform_10(%arg0: i32, %arg1: i32) -> (i32, i32) {
    %c0_i32 = arith.constant 0 : i32
    %c0_i32_0 = arith.constant 0 : i32
    %c0_i32_1 = arith.constant 0 : i32
    return %c0_i32, %c0_i32_0 : i32, i32
  }
  func.func @transform_11(%arg0: i32, %arg1: i32) -> (i32, i32) {
    %c0_i32 = arith.constant 0 : i32
    %c0_i32_0 = arith.constant 0 : i32
    %c0_i32_1 = arith.constant 0 : i32
    return %c0_i32, %c0_i32_0 : i32, i32
  }
  func.func @transform_12(%arg0: i32, %arg1: i32) -> (i32, i32) {
    %c0_i32 = arith.constant 0 : i32
    %c0_i32_0 = arith.constant 0 : i32
    %c0_i32_1 = arith.constant 0 : i32
    return %c0_i32, %c0_i32_0 : i32, i32
  }
  func.func @transform_13(%arg0: i32, %arg1: i32) -> (i32, i32) {
    %c0_i32 = arith.constant 0 : i32
    %c0_i32_0 = arith.constant 0 : i32
    %c0_i32_1 = arith.constant 0 : i32
    return %c0_i32, %c0_i32_0 : i32, i32
  }
  func.func @transform_14(%arg0: i32, %arg1: i32) -> (i32, i32, i32) {
    %c0_i32 = arith.constant 0 : i32
    %c0_i32_0 = arith.constant 0 : i32
    return %arg0, %arg1, %c0_i32 : i32, i32, i32
  }
}

module attributes {stable_mosaic.version = 11 : i64} {
  func.func @_encoder_layer_kernel(%arg0: i32, %arg1: i32, %arg2: memref<1x8x32xf32, #tpu.memory_space<vmem>>, %arg3: memref<1x4x8x8xbf16, #tpu.memory_space<vmem>>, %arg4: memref<1x4x8x16xbf16, #tpu.memory_space<vmem>>, %arg5: memref<1x4x16x8xbf16, #tpu.memory_space<vmem>>, %arg6: memref<32x32xbf16, #tpu.memory_space<vmem>>, %arg7: memref<1x32xf32, #tpu.memory_space<vmem>>, %arg8: memref<1x32xf32, #tpu.memory_space<vmem>>, %arg9: memref<1x32xf32, #tpu.memory_space<vmem>>, %arg10: memref<32x64xbf16, #tpu.memory_space<vmem>>, %arg11: memref<1x64xf32, #tpu.memory_space<vmem>>, %arg12: memref<64x32xbf16, #tpu.memory_space<vmem>>, %arg13: memref<1x32xf32, #tpu.memory_space<vmem>>, %arg14: memref<1x32xf32, #tpu.memory_space<vmem>>, %arg15: memref<1x32xf32, #tpu.memory_space<vmem>>, %arg16: memref<1x8x32xf32, #tpu.memory_space<vmem>>, %arg17: memref<8x32xbf16, #tpu.memory_space<vmem>>) attributes {dimension_semantics = [#tpu.dimension_semantics<parallel>, #tpu.dimension_semantics<parallel>], iteration_bounds = array<i64: 2, 2>, scalar_prefetch = 0 : i64, scratch_operands = 1 : i64, tpu.core_type = #tpu.core_type<tc>, window_params = [{transform_indices = @transform_0, window_bounds = array<i64: 1, 8, 32>}, {transform_indices = @transform_1, window_bounds = array<i64: 1, 4, 8, 8>}, {transform_indices = @transform_2, window_bounds = array<i64: 1, 4, 8, 16>}, {transform_indices = @transform_3, window_bounds = array<i64: 1, 4, 16, 8>}, {pipeline_mode = #tpu.pipeline_mode<synchronous>, transform_indices = @transform_4, window_bounds = array<i64: 32, 32>}, {pipeline_mode = #tpu.pipeline_mode<synchronous>, transform_indices = @transform_5, window_bounds = array<i64: 1, 32>}, {pipeline_mode = #tpu.pipeline_mode<synchronous>, transform_indices = @transform_6, window_bounds = array<i64: 1, 32>}, {pipeline_mode = #tpu.pipeline_mode<synchronous>, transform_indices = @transform_7, window_bounds = array<i64: 1, 32>}, {pipeline_mode = #tpu.pipeline_mode<synchronous>, transform_indices = @transform_8, window_bounds = array<i64: 32, 64>}, {pipeline_mode = #tpu.pipeline_mode<synchronous>, transform_indices = @transform_9, window_bounds = array<i64: 1, 64>}, {pipeline_mode = #tpu.pipeline_mode<synchronous>, transform_indices = @transform_10, window_bounds = array<i64: 64, 32>}, {pipeline_mode = #tpu.pipeline_mode<synchronous>, transform_indices = @transform_11, window_bounds = array<i64: 1, 32>}, {pipeline_mode = #tpu.pipeline_mode<synchronous>, transform_indices = @transform_12, window_bounds = array<i64: 1, 32>}, {pipeline_mode = #tpu.pipeline_mode<synchronous>, transform_indices = @transform_13, window_bounds = array<i64: 1, 32>}, {transform_indices = @transform_14, window_bounds = array<i64: 1, 8, 32>}]} {
    %c0 = arith.constant 0 : index
    %c0_0 = arith.constant 0 : index
    %c0_1 = arith.constant 0 : index
    %c0_2 = arith.constant 0 : index
    %0 = vector.load %arg3[%c0, %c0_0, %c0_1, %c0_2] : memref<1x4x8x8xbf16, #tpu.memory_space<vmem>>, vector<1x1x8x8xbf16>
    %1 = vector.shape_cast %0 : vector<1x1x8x8xbf16> to vector<8x8xbf16>
    %c0_3 = arith.constant 0 : index
    %c0_4 = arith.constant 0 : index
    %c0_5 = arith.constant 0 : index
    %c0_6 = arith.constant 0 : index
    %2 = vector.load %arg4[%c0_3, %c0_4, %c0_5, %c0_6] : memref<1x4x8x16xbf16, #tpu.memory_space<vmem>>, vector<1x1x8x16xbf16>
    %3 = vector.shape_cast %2 : vector<1x1x8x16xbf16> to vector<8x16xbf16>
    %cst = arith.constant dense<0.000000e+00> : vector<8x16xf32>
    %4 = tpu.matmul %1, %3, %cst {dimension_numbers = #tpu.dot_dimension_numbers<[1], [0], [0], [1], [0, 0, 1, 1], [], []>} : vector<8x8xbf16>, vector<8x16xbf16>, vector<8x16xf32> -> vector<8x16xf32>
    %cst_7 = arith.constant dense<0xFF800000> : vector<8xf32>
    %5 = vector.multi_reduction <maximumf>, %4, %cst_7 [1] : vector<8x16xf32> to vector<8xf32>
    %6 = vector.shape_cast %5 : vector<8xf32> to vector<8x1xf32>
    %7 = vector.broadcast %6 : vector<8x1xf32> to vector<8x16xf32>
    %8 = arith.subf %4, %7 : vector<8x16xf32>
    %9 = math.exp %8 : vector<8x16xf32>
    %cst_8 = arith.constant dense<0.000000e+00> : vector<8xf32>
    %10 = vector.multi_reduction <add>, %9, %cst_8 [1] : vector<8x16xf32> to vector<8xf32>
    %11 = vector.shape_cast %10 : vector<8xf32> to vector<8x1xf32>
    %12 = arith.truncf %9 : vector<8x16xf32> to vector<8x16xbf16>
    %c0_9 = arith.constant 0 : index
    %c0_10 = arith.constant 0 : index
    %c0_11 = arith.constant 0 : index
    %c0_12 = arith.constant 0 : index
    %13 = vector.load %arg5[%c0_9, %c0_10, %c0_11, %c0_12] : memref<1x4x16x8xbf16, #tpu.memory_space<vmem>>, vector<1x1x16x8xbf16>
    %14 = vector.shape_cast %13 : vector<1x1x16x8xbf16> to vector<16x8xbf16>
    %cst_13 = arith.constant dense<0.000000e+00> : vector<8x8xf32>
    %15 = tpu.matmul %12, %14, %cst_13 {dimension_numbers = #tpu.dot_dimension_numbers<[1], [0], [0], [1], [0, 0, 1, 1], [], []>} : vector<8x16xbf16>, vector<16x8xbf16>, vector<8x8xf32> -> vector<8x8xf32>
    %16 = tpu.reciprocal %11 {approx = true} : vector<8x1xf32> -> vector<8x1xf32>
    %17 = vector.broadcast %16 : vector<8x1xf32> to vector<8x8xf32>
    %18 = arith.mulf %15, %17 : vector<8x8xf32>
    %19 = arith.truncf %18 : vector<8x8xf32> to vector<8x8xbf16>
    %c0_14 = arith.constant 0 : index
    %c0_15 = arith.constant 0 : index
    %20 = vector.load %arg17[%c0_14, %c0_15] : memref<8x32xbf16, #tpu.memory_space<vmem>>, vector<8x8xbf16>
    tpu.vector_store %arg17[%c0_14, %c0_15], %19 {strides = array<i32>} : memref<8x32xbf16, #tpu.memory_space<vmem>>, vector<8x8xbf16>,
    %c0_16 = arith.constant 0 : index
    %c1 = arith.constant 1 : index
    %c0_17 = arith.constant 0 : index
    %c0_18 = arith.constant 0 : index
    %21 = vector.load %arg3[%c0_16, %c1, %c0_17, %c0_18] : memref<1x4x8x8xbf16, #tpu.memory_space<vmem>>, vector<1x1x8x8xbf16>
    %22 = vector.shape_cast %21 : vector<1x1x8x8xbf16> to vector<8x8xbf16>
    %c0_19 = arith.constant 0 : index
    %c1_20 = arith.constant 1 : index
    %c0_21 = arith.constant 0 : index
    %c0_22 = arith.constant 0 : index
    %23 = vector.load %arg4[%c0_19, %c1_20, %c0_21, %c0_22] : memref<1x4x8x16xbf16, #tpu.memory_space<vmem>>, vector<1x1x8x16xbf16>
    %24 = vector.shape_cast %23 : vector<1x1x8x16xbf16> to vector<8x16xbf16>
    %cst_23 = arith.constant dense<0.000000e+00> : vector<8x16xf32>
    %25 = tpu.matmul %22, %24, %cst_23 {dimension_numbers = #tpu.dot_dimension_numbers<[1], [0], [0], [1], [0, 0, 1, 1], [], []>} : vector<8x8xbf16>, vector<8x16xbf16>, vector<8x16xf32> -> vector<8x16xf32>
    %cst_24 = arith.constant dense<0xFF800000> : vector<8xf32>
    %26 = vector.multi_reduction <maximumf>, %25, %cst_24 [1] : vector<8x16xf32> to vector<8xf32>
    %27 = vector.shape_cast %26 : vector<8xf32> to vector<8x1xf32>
    %28 = vector.broadcast %27 : vector<8x1xf32> to vector<8x16xf32>
    %29 = arith.subf %25, %28 : vector<8x16xf32>
    %30 = math.exp %29 : vector<8x16xf32>
    %cst_25 = arith.constant dense<0.000000e+00> : vector<8xf32>
    %31 = vector.multi_reduction <add>, %30, %cst_25 [1] : vector<8x16xf32> to vector<8xf32>
    %32 = vector.shape_cast %31 : vector<8xf32> to vector<8x1xf32>
    %33 = arith.truncf %30 : vector<8x16xf32> to vector<8x16xbf16>
    %c0_26 = arith.constant 0 : index
    %c1_27 = arith.constant 1 : index
    %c0_28 = arith.constant 0 : index
    %c0_29 = arith.constant 0 : index
    %34 = vector.load %arg5[%c0_26, %c1_27, %c0_28, %c0_29] : memref<1x4x16x8xbf16, #tpu.memory_space<vmem>>, vector<1x1x16x8xbf16>
    %35 = vector.shape_cast %34 : vector<1x1x16x8xbf16> to vector<16x8xbf16>
    %cst_30 = arith.constant dense<0.000000e+00> : vector<8x8xf32>
    %36 = tpu.matmul %33, %35, %cst_30 {dimension_numbers = #tpu.dot_dimension_numbers<[1], [0], [0], [1], [0, 0, 1, 1], [], []>} : vector<8x16xbf16>, vector<16x8xbf16>, vector<8x8xf32> -> vector<8x8xf32>
    %37 = tpu.reciprocal %32 {approx = true} : vector<8x1xf32> -> vector<8x1xf32>
    %38 = vector.broadcast %37 : vector<8x1xf32> to vector<8x8xf32>
    %39 = arith.mulf %36, %38 : vector<8x8xf32>
    %40 = arith.truncf %39 : vector<8x8xf32> to vector<8x8xbf16>
    %c0_31 = arith.constant 0 : index
    %c8 = arith.constant 8 : index
    %41 = vector.load %arg17[%c0_31, %c8] : memref<8x32xbf16, #tpu.memory_space<vmem>>, vector<8x8xbf16>
    tpu.vector_store %arg17[%c0_31, %c8], %40 {strides = array<i32>} : memref<8x32xbf16, #tpu.memory_space<vmem>>, vector<8x8xbf16>,
    %c0_32 = arith.constant 0 : index
    %c2 = arith.constant 2 : index
    %c0_33 = arith.constant 0 : index
    %c0_34 = arith.constant 0 : index
    %42 = vector.load %arg3[%c0_32, %c2, %c0_33, %c0_34] : memref<1x4x8x8xbf16, #tpu.memory_space<vmem>>, vector<1x1x8x8xbf16>
    %43 = vector.shape_cast %42 : vector<1x1x8x8xbf16> to vector<8x8xbf16>
    %c0_35 = arith.constant 0 : index
    %c2_36 = arith.constant 2 : index
    %c0_37 = arith.constant 0 : index
    %c0_38 = arith.constant 0 : index
    %44 = vector.load %arg4[%c0_35, %c2_36, %c0_37, %c0_38] : memref<1x4x8x16xbf16, #tpu.memory_space<vmem>>, vector<1x1x8x16xbf16>
    %45 = vector.shape_cast %44 : vector<1x1x8x16xbf16> to vector<8x16xbf16>
    %cst_39 = arith.constant dense<0.000000e+00> : vector<8x16xf32>
    %46 = tpu.matmul %43, %45, %cst_39 {dimension_numbers = #tpu.dot_dimension_numbers<[1], [0], [0], [1], [0, 0, 1, 1], [], []>} : vector<8x8xbf16>, vector<8x16xbf16>, vector<8x16xf32> -> vector<8x16xf32>
    %cst_40 = arith.constant dense<0xFF800000> : vector<8xf32>
    %47 = vector.multi_reduction <maximumf>, %46, %cst_40 [1] : vector<8x16xf32> to vector<8xf32>
    %48 = vector.shape_cast %47 : vector<8xf32> to vector<8x1xf32>
    %49 = vector.broadcast %48 : vector<8x1xf32> to vector<8x16xf32>
    %50 = arith.subf %46, %49 : vector<8x16xf32>
    %51 = math.exp %50 : vector<8x16xf32>
    %cst_41 = arith.constant dense<0.000000e+00> : vector<8xf32>
    %52 = vector.multi_reduction <add>, %51, %cst_41 [1] : vector<8x16xf32> to vector<8xf32>
    %53 = vector.shape_cast %52 : vector<8xf32> to vector<8x1xf32>
    %54 = arith.truncf %51 : vector<8x16xf32> to vector<8x16xbf16>
    %c0_42 = arith.constant 0 : index
    %c2_43 = arith.constant 2 : index
    %c0_44 = arith.constant 0 : index
    %c0_45 = arith.constant 0 : index
    %55 = vector.load %arg5[%c0_42, %c2_43, %c0_44, %c0_45] : memref<1x4x16x8xbf16, #tpu.memory_space<vmem>>, vector<1x1x16x8xbf16>
    %56 = vector.shape_cast %55 : vector<1x1x16x8xbf16> to vector<16x8xbf16>
    %cst_46 = arith.constant dense<0.000000e+00> : vector<8x8xf32>
    %57 = tpu.matmul %54, %56, %cst_46 {dimension_numbers = #tpu.dot_dimension_numbers<[1], [0], [0], [1], [0, 0, 1, 1], [], []>} : vector<8x16xbf16>, vector<16x8xbf16>, vector<8x8xf32> -> vector<8x8xf32>
    %58 = tpu.reciprocal %53 {approx = true} : vector<8x1xf32> -> vector<8x1xf32>
    %59 = vector.broadcast %58 : vector<8x1xf32> to vector<8x8xf32>
    %60 = arith.mulf %57, %59 : vector<8x8xf32>
    %61 = arith.truncf %60 : vector<8x8xf32> to vector<8x8xbf16>
    %c0_47 = arith.constant 0 : index
    %c16 = arith.constant 16 : index
    %62 = vector.load %arg17[%c0_47, %c16] : memref<8x32xbf16, #tpu.memory_space<vmem>>, vector<8x8xbf16>
    tpu.vector_store %arg17[%c0_47, %c16], %61 {strides = array<i32>} : memref<8x32xbf16, #tpu.memory_space<vmem>>, vector<8x8xbf16>,
    %c0_48 = arith.constant 0 : index
    %c3 = arith.constant 3 : index
    %c0_49 = arith.constant 0 : index
    %c0_50 = arith.constant 0 : index
    %63 = vector.load %arg3[%c0_48, %c3, %c0_49, %c0_50] : memref<1x4x8x8xbf16, #tpu.memory_space<vmem>>, vector<1x1x8x8xbf16>
    %64 = vector.shape_cast %63 : vector<1x1x8x8xbf16> to vector<8x8xbf16>
    %c0_51 = arith.constant 0 : index
    %c3_52 = arith.constant 3 : index
    %c0_53 = arith.constant 0 : index
    %c0_54 = arith.constant 0 : index
    %65 = vector.load %arg4[%c0_51, %c3_52, %c0_53, %c0_54] : memref<1x4x8x16xbf16, #tpu.memory_space<vmem>>, vector<1x1x8x16xbf16>
    %66 = vector.shape_cast %65 : vector<1x1x8x16xbf16> to vector<8x16xbf16>
    %cst_55 = arith.constant dense<0.000000e+00> : vector<8x16xf32>
    %67 = tpu.matmul %64, %66, %cst_55 {dimension_numbers = #tpu.dot_dimension_numbers<[1], [0], [0], [1], [0, 0, 1, 1], [], []>} : vector<8x8xbf16>, vector<8x16xbf16>, vector<8x16xf32> -> vector<8x16xf32>
    %cst_56 = arith.constant dense<0xFF800000> : vector<8xf32>
    %68 = vector.multi_reduction <maximumf>, %67, %cst_56 [1] : vector<8x16xf32> to vector<8xf32>
    %69 = vector.shape_cast %68 : vector<8xf32> to vector<8x1xf32>
    %70 = vector.broadcast %69 : vector<8x1xf32> to vector<8x16xf32>
    %71 = arith.subf %67, %70 : vector<8x16xf32>
    %72 = math.exp %71 : vector<8x16xf32>
    %cst_57 = arith.constant dense<0.000000e+00> : vector<8xf32>
    %73 = vector.multi_reduction <add>, %72, %cst_57 [1] : vector<8x16xf32> to vector<8xf32>
    %74 = vector.shape_cast %73 : vector<8xf32> to vector<8x1xf32>
    %75 = arith.truncf %72 : vector<8x16xf32> to vector<8x16xbf16>
    %c0_58 = arith.constant 0 : index
    %c3_59 = arith.constant 3 : index
    %c0_60 = arith.constant 0 : index
    %c0_61 = arith.constant 0 : index
    %76 = vector.load %arg5[%c0_58, %c3_59, %c0_60, %c0_61] : memref<1x4x16x8xbf16, #tpu.memory_space<vmem>>, vector<1x1x16x8xbf16>
    %77 = vector.shape_cast %76 : vector<1x1x16x8xbf16> to vector<16x8xbf16>
    %cst_62 = arith.constant dense<0.000000e+00> : vector<8x8xf32>
    %78 = tpu.matmul %75, %77, %cst_62 {dimension_numbers = #tpu.dot_dimension_numbers<[1], [0], [0], [1], [0, 0, 1, 1], [], []>} : vector<8x16xbf16>, vector<16x8xbf16>, vector<8x8xf32> -> vector<8x8xf32>
    %79 = tpu.reciprocal %74 {approx = true} : vector<8x1xf32> -> vector<8x1xf32>
    %80 = vector.broadcast %79 : vector<8x1xf32> to vector<8x8xf32>
    %81 = arith.mulf %78, %80 : vector<8x8xf32>
    %82 = arith.truncf %81 : vector<8x8xf32> to vector<8x8xbf16>
    %c0_63 = arith.constant 0 : index
    %c24 = arith.constant 24 : index
    %83 = vector.load %arg17[%c0_63, %c24] : memref<8x32xbf16, #tpu.memory_space<vmem>>, vector<8x8xbf16>
    tpu.vector_store %arg17[%c0_63, %c24], %82 {strides = array<i32>} : memref<8x32xbf16, #tpu.memory_space<vmem>>, vector<8x8xbf16>,
    %c0_64 = arith.constant 0 : index
    %c0_65 = arith.constant 0 : index
    %84 = vector.load %arg17[%c0_64, %c0_65] : memref<8x32xbf16, #tpu.memory_space<vmem>>, vector<8x32xbf16>
    %c0_66 = arith.constant 0 : index
    %c0_67 = arith.constant 0 : index
    %85 = vector.load %arg6[%c0_66, %c0_67] : memref<32x32xbf16, #tpu.memory_space<vmem>>, vector<32x32xbf16>
    %cst_68 = arith.constant dense<0.000000e+00> : vector<8x32xf32>
    %86 = tpu.matmul %84, %85, %cst_68 {dimension_numbers = #tpu.dot_dimension_numbers<[1], [0], [0], [1], [0, 0, 1, 1], [], []>} : vector<8x32xbf16>, vector<32x32xbf16>, vector<8x32xf32> -> vector<8x32xf32>
    %c0_69 = arith.constant 0 : index
    %c0_70 = arith.constant 0 : index
    %87 = vector.load %arg7[%c0_69, %c0_70] : memref<1x32xf32, #tpu.memory_space<vmem>>, vector<1x32xf32>
    %88 = vector.broadcast %87 : vector<1x32xf32> to vector<8x32xf32>
    %89 = arith.addf %86, %88 : vector<8x32xf32>
    %c0_71 = arith.constant 0 : index
    %c0_72 = arith.constant 0 : index
    %c0_73 = arith.constant 0 : index
    %90 = vector.load %arg2[%c0_71, %c0_72, %c0_73] : memref<1x8x32xf32, #tpu.memory_space<vmem>>, vector<1x8x32xf32>
    %91 = vector.shape_cast %90 : vector<1x8x32xf32> to vector<8x32xf32>
    %92 = arith.addf %91, %89 : vector<8x32xf32>
    %c0_74 = arith.constant 0 : index
    %c0_75 = arith.constant 0 : index
    %93 = vector.load %arg8[%c0_74, %c0_75] : memref<1x32xf32, #tpu.memory_space<vmem>>, vector<1x32xf32>
    %c0_76 = arith.constant 0 : index
    %c0_77 = arith.constant 0 : index
    %94 = vector.load %arg9[%c0_76, %c0_77] : memref<1x32xf32, #tpu.memory_space<vmem>>, vector<1x32xf32>
    %cst_78 = arith.constant dense<0.000000e+00> : vector<8xf32>
    %95 = vector.multi_reduction <add>, %92, %cst_78 [1] : vector<8x32xf32> to vector<8xf32>
    %96 = vector.shape_cast %95 : vector<8xf32> to vector<8x1xf32>
    %cst_79 = arith.constant 3.200000e+01 : f32
    %97 = vector.broadcast %cst_79 : f32 to vector<8x1xf32>
    %98 = arith.divf %96, %97 : vector<8x1xf32>
    %99 = vector.broadcast %98 : vector<8x1xf32> to vector<8x32xf32>
    %100 = arith.subf %92, %99 : vector<8x32xf32>
    %101 = arith.mulf %100, %100 : vector<8x32xf32>
    %cst_80 = arith.constant dense<0.000000e+00> : vector<8xf32>
    %102 = vector.multi_reduction <add>, %101, %cst_80 [1] : vector<8x32xf32> to vector<8xf32>
    %103 = vector.shape_cast %102 : vector<8xf32> to vector<8x1xf32>
    %cst_81 = arith.constant 3.200000e+01 : f32
    %104 = vector.broadcast %cst_81 : f32 to vector<8x1xf32>
    %105 = arith.divf %103, %104 : vector<8x1xf32>
    %106 = vector.broadcast %98 : vector<8x1xf32> to vector<8x32xf32>
    %107 = arith.subf %92, %106 : vector<8x32xf32>
    %cst_82 = arith.constant 9.99999997E-7 : f32
    %108 = vector.broadcast %cst_82 : f32 to vector<8x1xf32>
    %109 = arith.addf %105, %108 : vector<8x1xf32>
    %110 = math.rsqrt %109 : vector<8x1xf32>
    %111 = vector.broadcast %110 : vector<8x1xf32> to vector<8x32xf32>
    %112 = arith.mulf %107, %111 : vector<8x32xf32>
    %113 = vector.broadcast %93 : vector<1x32xf32> to vector<8x32xf32>
    %114 = arith.mulf %112, %113 : vector<8x32xf32>
    %115 = vector.broadcast %94 : vector<1x32xf32> to vector<8x32xf32>
    %116 = arith.addf %114, %115 : vector<8x32xf32>
    %117 = arith.truncf %116 : vector<8x32xf32> to vector<8x32xbf16>
    %c0_83 = arith.constant 0 : index
    %c0_84 = arith.constant 0 : index
    %118 = vector.load %arg10[%c0_83, %c0_84] : memref<32x64xbf16, #tpu.memory_space<vmem>>, vector<32x64xbf16>
    %cst_85 = arith.constant dense<0.000000e+00> : vector<8x64xf32>
    %119 = tpu.matmul %117, %118, %cst_85 {dimension_numbers = #tpu.dot_dimension_numbers<[1], [0], [0], [1], [0, 0, 1, 1], [], []>} : vector<8x32xbf16>, vector<32x64xbf16>, vector<8x64xf32> -> vector<8x64xf32>
    %c0_86 = arith.constant 0 : index
    %c0_87 = arith.constant 0 : index
    %120 = vector.load %arg11[%c0_86, %c0_87] : memref<1x64xf32, #tpu.memory_space<vmem>>, vector<1x64xf32>
    %121 = vector.broadcast %120 : vector<1x64xf32> to vector<8x64xf32>
    %122 = arith.addf %119, %121 : vector<8x64xf32>
    %cst_88 = arith.constant 0.000000e+00 : f32
    %123 = vector.broadcast %cst_88 : f32 to vector<8x64xf32>
    %124 = arith.maximumf %122, %123 : vector<8x64xf32>
    %125 = arith.truncf %124 : vector<8x64xf32> to vector<8x64xbf16>
    %c0_89 = arith.constant 0 : index
    %c0_90 = arith.constant 0 : index
    %126 = vector.load %arg12[%c0_89, %c0_90] : memref<64x32xbf16, #tpu.memory_space<vmem>>, vector<64x32xbf16>
    %cst_91 = arith.constant dense<0.000000e+00> : vector<8x32xf32>
    %127 = tpu.matmul %125, %126, %cst_91 {dimension_numbers = #tpu.dot_dimension_numbers<[1], [0], [0], [1], [0, 0, 1, 1], [], []>} : vector<8x64xbf16>, vector<64x32xbf16>, vector<8x32xf32> -> vector<8x32xf32>
    %c0_92 = arith.constant 0 : index
    %c0_93 = arith.constant 0 : index
    %128 = vector.load %arg13[%c0_92, %c0_93] : memref<1x32xf32, #tpu.memory_space<vmem>>, vector<1x32xf32>
    %129 = vector.broadcast %128 : vector<1x32xf32> to vector<8x32xf32>
    %130 = arith.addf %127, %129 : vector<8x32xf32>
    %131 = arith.addf %116, %130 : vector<8x32xf32>
    %c0_94 = arith.constant 0 : index
    %c0_95 = arith.constant 0 : index
    %132 = vector.load %arg14[%c0_94, %c0_95] : memref<1x32xf32, #tpu.memory_space<vmem>>, vector<1x32xf32>
    %c0_96 = arith.constant 0 : index
    %c0_97 = arith.constant 0 : index
    %133 = vector.load %arg15[%c0_96, %c0_97] : memref<1x32xf32, #tpu.memory_space<vmem>>, vector<1x32xf32>
    %cst_98 = arith.constant dense<0.000000e+00> : vector<8xf32>
    %134 = vector.multi_reduction <add>, %131, %cst_98 [1] : vector<8x32xf32> to vector<8xf32>
    %135 = vector.shape_cast %134 : vector<8xf32> to vector<8x1xf32>
    %cst_99 = arith.constant 3.200000e+01 : f32
    %136 = vector.broadcast %cst_99 : f32 to vector<8x1xf32>
    %137 = arith.divf %135, %136 : vector<8x1xf32>
    %138 = vector.broadcast %137 : vector<8x1xf32> to vector<8x32xf32>
    %139 = arith.subf %131, %138 : vector<8x32xf32>
    %140 = arith.mulf %139, %139 : vector<8x32xf32>
    %cst_100 = arith.constant dense<0.000000e+00> : vector<8xf32>
    %141 = vector.multi_reduction <add>, %140, %cst_100 [1] : vector<8x32xf32> to vector<8xf32>
    %142 = vector.shape_cast %141 : vector<8xf32> to vector<8x1xf32>
    %cst_101 = arith.constant 3.200000e+01 : f32
    %143 = vector.broadcast %cst_101 : f32 to vector<8x1xf32>
    %144 = arith.divf %142, %143 : vector<8x1xf32>
    %145 = vector.broadcast %137 : vector<8x1xf32> to vector<8x32xf32>
    %146 = arith.subf %131, %145 : vector<8x32xf32>
    %cst_102 = arith.constant 9.99999997E-7 : f32
    %147 = vector.broadcast %cst_102 : f32 to vector<8x1xf32>
    %148 = arith.addf %144, %147 : vector<8x1xf32>
    %149 = math.rsqrt %148 : vector<8x1xf32>
    %150 = vector.broadcast %149 : vector<8x1xf32> to vector<8x32xf32>
    %151 = arith.mulf %146, %150 : vector<8x32xf32>
    %152 = vector.broadcast %132 : vector<1x32xf32> to vector<8x32xf32>
    %153 = arith.mulf %151, %152 : vector<8x32xf32>
    %154 = vector.broadcast %133 : vector<1x32xf32> to vector<8x32xf32>
    %155 = arith.addf %153, %154 : vector<8x32xf32>
    %c0_103 = arith.constant 0 : index
    %c0_104 = arith.constant 0 : index
    %c0_105 = arith.constant 0 : index
    %156 = vector.load %arg16[%c0_103, %c0_104, %c0_105] : memref<1x8x32xf32, #tpu.memory_space<vmem>>, vector<1x8x32xf32>
    %157 = vector.shape_cast %156 : vector<1x8x32xf32> to vector<8x32xf32>
    %158 = vector.shape_cast %155 : vector<8x32xf32> to vector<1x8x32xf32>
    tpu.vector_store %arg16[%c0_103, %c0_104, %c0_105], %158 {strides = array<i32>} : memref<1x8x32xf32, #tpu.memory_space<vmem>>, vector<1x8x32xf32>,
    return
  }
  func.func @transform_0(%arg0: i32, %arg1: i32) -> (i32, i32, i32) {
    %c0_i32 = arith.constant 0 : i32
    %c0_i32_0 = arith.constant 0 : i32
    return %arg0, %arg1, %c0_i32 : i32, i32, i32
  }
  func.func @transform_1(%arg0: i32, %arg1: i32) -> (i32, i32, i32, i32) {
    %c0_i32 = arith.constant 0 : i32
    %c0_i32_0 = arith.constant 0 : i32
    %c0_i32_1 = arith.constant 0 : i32
    return %arg0, %c0_i32, %arg1, %c0_i32_0 : i32, i32, i32, i32
  }
  func.func @transform_2(%arg0: i32, %arg1: i32) -> (i32, i32, i32, i32) {
    %c0_i32 = arith.constant 0 : i32
    %c0_i32_0 = arith.constant 0 : i32
    %c0_i32_1 = arith.constant 0 : i32
    %c0_i32_2 = arith.constant 0 : i32
    return %arg0, %c0_i32, %c0_i32_0, %c0_i32_1 : i32, i32, i32, i32
  }
  func.func @transform_3(%arg0: i32, %arg1: i32) -> (i32, i32, i32, i32) {
    %c0_i32 = arith.constant 0 : i32
    %c0_i32_0 = arith.constant 0 : i32
    %c0_i32_1 = arith.constant 0 : i32
    %c0_i32_2 = arith.constant 0 : i32
    return %arg0, %c0_i32, %c0_i32_0, %c0_i32_1 : i32, i32, i32, i32
  }
  func.func @transform_4(%arg0: i32, %arg1: i32) -> (i32, i32) {
    %c0_i32 = arith.constant 0 : i32
    %c0_i32_0 = arith.constant 0 : i32
    %c0_i32_1 = arith.constant 0 : i32
    return %c0_i32, %c0_i32_0 : i32, i32
  }
  func.func @transform_5(%arg0: i32, %arg1: i32) -> (i32, i32) {
    %c0_i32 = arith.constant 0 : i32
    %c0_i32_0 = arith.constant 0 : i32
    %c0_i32_1 = arith.constant 0 : i32
    return %c0_i32, %c0_i32_0 : i32, i32
  }
  func.func @transform_6(%arg0: i32, %arg1: i32) -> (i32, i32) {
    %c0_i32 = arith.constant 0 : i32
    %c0_i32_0 = arith.constant 0 : i32
    %c0_i32_1 = arith.constant 0 : i32
    return %c0_i32, %c0_i32_0 : i32, i32
  }
  func.func @transform_7(%arg0: i32, %arg1: i32) -> (i32, i32) {
    %c0_i32 = arith.constant 0 : i32
    %c0_i32_0 = arith.constant 0 : i32
    %c0_i32_1 = arith.constant 0 : i32
    return %c0_i32, %c0_i32_0 : i32, i32
  }
  func.func @transform_8(%arg0: i32, %arg1: i32) -> (i32, i32) {
    %c0_i32 = arith.constant 0 : i32
    %c0_i32_0 = arith.constant 0 : i32
    %c0_i32_1 = arith.constant 0 : i32
    return %c0_i32, %c0_i32_0 : i32, i32
  }
  func.func @transform_9(%arg0: i32, %arg1: i32) -> (i32, i32) {
    %c0_i32 = arith.constant 0 : i32
    %c0_i32_0 = arith.constant 0 : i32
    %c0_i32_1 = arith.constant 0 : i32
    return %c0_i32, %c0_i32_0 : i32, i32
  }
  func.func @transform_10(%arg0: i32, %arg1: i32) -> (i32, i32) {
    %c0_i32 = arith.constant 0 : i32
    %c0_i32_0 = arith.constant 0 : i32
    %c0_i32_1 = arith.constant 0 : i32
    return %c0_i32, %c0_i32_0 : i32, i32
  }
  func.func @transform_11(%arg0: i32, %arg1: i32) -> (i32, i32) {
    %c0_i32 = arith.constant 0 : i32
    %c0_i32_0 = arith.constant 0 : i32
    %c0_i32_1 = arith.constant 0 : i32
    return %c0_i32, %c0_i32_0 : i32, i32
  }
  func.func @transform_12(%arg0: i32, %arg1: i32) -> (i32, i32) {
    %c0_i32 = arith.constant 0 : i32
    %c0_i32_0 = arith.constant 0 : i32
    %c0_i32_1 = arith.constant 0 : i32
    return %c0_i32, %c0_i32_0 : i32, i32
  }
  func.func @transform_13(%arg0: i32, %arg1: i32) -> (i32, i32) {
    %c0_i32 = arith.constant 0 : i32
    %c0_i32_0 = arith.constant 0 : i32
    %c0_i32_1 = arith.constant 0 : i32
    return %c0_i32, %c0_i32_0 : i32, i32
  }
  func.func @transform_14(%arg0: i32, %arg1: i32) -> (i32, i32, i32) {
    %c0_i32 = arith.constant 0 : i32
    %c0_i32_0 = arith.constant 0 : i32
    return %arg0, %arg1, %c0_i32 : i32, i32, i32
  }
}

</mosaic_0001>

<llo_original>
// kernel: tpu_custom_call.1
$region0: #{tpu_custom_call.1}
  #allocation0 [shape = 'u32[]', space=smem, size = 0x4, offset = 0x4, fixed_abs, tag = 'smem constant byte address 0x4 - core index']
  #allocation1 [shape = 'u32[144,128]{1,0:T(1,128)}', space=vmem, size = 0x12000, scoped, tag = 'internal scratch']
  #allocation2 [shape = 'bf16[8,32]{1,0:T(8,128)(2,1)}', space=vmem, size = 0x800, scoped, tag = 'scratch operand']
  %s0 = inlined_call_operand.vmem [shape: f32[2,16,32], index: 0, kind: input, shape index: {}]
  %s1 = inlined_call_operand.vmem [shape: bf16[2,4,16,8], index: 1, kind: input, shape index: {}]
  %s2 = inlined_call_operand.vmem [shape: bf16[2,4,8,16], index: 2, kind: input, shape index: {}]
  %s3 = inlined_call_operand.vmem [shape: bf16[2,4,16,8], index: 3, kind: input, shape index: {}]
  %s4 = inlined_call_operand.vmem [shape: bf16[32,32], index: 4, kind: input, shape index: {}]
  %s5 = inlined_call_operand.vmem [shape: f32[1,32], index: 5, kind: input, shape index: {}]
  %s6 = inlined_call_operand.vmem [shape: f32[1,32], index: 6, kind: input, shape index: {}]
  %s7 = inlined_call_operand.vmem [shape: f32[1,32], index: 7, kind: input, shape index: {}]
  %s8 = inlined_call_operand.vmem [shape: bf16[32,64], index: 8, kind: input, shape index: {}]
  %s9 = inlined_call_operand.vmem [shape: f32[1,64], index: 9, kind: input, shape index: {}]
  %s10 = inlined_call_operand.vmem [shape: bf16[64,32], index: 10, kind: input, shape index: {}]
  %s11 = inlined_call_operand.vmem [shape: f32[1,32], index: 11, kind: input, shape index: {}]
  %s12 = inlined_call_operand.vmem [shape: f32[1,32], index: 12, kind: input, shape index: {}]
  %s13 = inlined_call_operand.vmem [shape: f32[1,32], index: 13, kind: input, shape index: {}]
  %s14 = inlined_call_operand.hbm [shape: f32[2,16,32], index: 14, kind: output, shape index: {}]
  %s15 = sld [smem:[#allocation0]]
  $region130: #{tpu_custom_call.1} parent=0
    _
  %s17 = ssub.s32 1, %s15
  %s18 = scalar_select 0, %s17, %s15
  $region1: #{tpu_custom_call.1} parent=0
    #allocation3 [shape = 'u8[16384]{0}', space=vmem, size = 0x4000, scoped, tag = 'input window, operand 1']
    #allocation4 [shape = 'u8[8192]{0}', space=vmem, size = 0x2000, scoped, tag = 'output window, operand 0']
    #allocation5 [shape = 's32[2]{0}', space=sflag, size = 0x8, scoped, tag = 'scoped memory for tpu_custom_call.1']
    %19 = vsyncpa [#allocation5], 0
    %s20 = scalar_lea.sflag [#allocation5], 1
    %21 = vsyncpa %s20, 0
    loop: start=0, step=1, limit=6
    $region2: #{tpu_custom_call.1} parent=1 // loop_pre_header
      _
    $region3: #{tpu_custom_call.1} parent=1 // loop_header
      %s23 = sphi 0, %s27
      %p24 = scmp.ge.s32.totalorder %s23, 6
      %s30 = sphi 0, %s42
      %s31 = sphi 0, %s38
      %s32 = sphi 0, %s30
      %s33 = sphi 0, %s31
      %s34 = sphi 0, %s32
      %s35 = sphi 0, %s33
      %s47 = sphi 0, %s49
      %s50 = sphi 0, %s47
      %s51 = sphi 0, %s50
      %s67 = sphi 0, %s51
      %s75 = sphi 0, %s77
      %s78 = sphi 0, %s75
      %s79 = sphi 0, %s78
      %s95 = sphi 0, %s79
      %s101 = sphi 0, %s103
      %s104 = sphi 0, %s101
      %s105 = sphi 0, %s104
      %s121 = sphi 0, %s105
      %s127 = sphi 0, %s129
      %s130 = sphi 0, %s127
      %s131 = sphi 0, %s130
      %s147 = sphi 0, %s131
      %s151 = sphi 0, %s151
      %s153 = sphi 0, %s151
      %s154 = sphi 0, %s153
      %s168 = sphi 0, %s154
      %s172 = sphi 0, %s172
      %s174 = sphi 0, %s172
      %s175 = sphi 0, %s174
      %s189 = sphi 0, %s175
      %s193 = sphi 0, %s193
      %s195 = sphi 0, %s193
      %s196 = sphi 0, %s195
      %s210 = sphi 0, %s196
      %s214 = sphi 0, %s214
      %s216 = sphi 0, %s214
      %s217 = sphi 0, %s216
      %s231 = sphi 0, %s217
      %s235 = sphi 0, %s235
      %s237 = sphi 0, %s235
      %s238 = sphi 0, %s237
      %s252 = sphi 0, %s238
      %s256 = sphi 0, %s256
      %s258 = sphi 0, %s256
      %s259 = sphi 0, %s258
      %s273 = sphi 0, %s259
      %s277 = sphi 0, %s277
      %s279 = sphi 0, %s277
      %s280 = sphi 0, %s279
      %s294 = sphi 0, %s280
      %s298 = sphi 0, %s298
      %s300 = sphi 0, %s298
      %s301 = sphi 0, %s300
      %s315 = sphi 0, %s301
      %s319 = sphi 0, %s319
      %s321 = sphi 0, %s319
      %s322 = sphi 0, %s321
      %s336 = sphi 0, %s322
      %s340 = sphi 0, %s340
      %s342 = sphi 0, %s340
      %s343 = sphi 0, %s342
      %s357 = sphi 0, %s343
      %s365 = sphi 0, %s367
      %s368 = sphi 0, %s365
      %s369 = sphi 0, %s368
      %s385 = sphi 0, %s369
    $region4: #{tpu_custom_call.1} parent=1 // loop_header_branch
      %26 = sbr.rel (%p24) target = $region8
    $region5: #{tpu_custom_call.1} parent=1 // loop_body
      %s28 = ssub.s32 %s23, 1
      %s29 = ssub.s32 %s23, 2
      %s36 = sadd.s32 1, %s31
      %p37 = scmp.ge.s32.totalorder %s36, 2
      %s38 = scalar_select %p37, 0, %s36
      %s39 = sadd.s32 1, %s30
      %s40 = scalar_select %p37, %s39, %s30
      %p41 = scmp.ge.s32.totalorder %s40, 2
      %s42 = scalar_select %p41, 0, %s40
      %s43 = ssub.s32 %s30, %s42
      %s44 = ssub.s32 %s31, %s38
      %s45 = sor.u32 %s43, %s44
      %p46 = scmp.eq.s32.totalorder %s45, 0
      %s48 = sadd.s32 %s47, 1
      %s49 = scalar_select %p46, %s47, %s48
      %p52 = pneg %p46
      %p53 = scmp.eq.s32.totalorder %s23, 3
      %p54 = por %p52, %p53
      %p55 = scmp.ne.s32.totalorder %s47, %s50
      %p56 = scmp.eq.s32.totalorder %s23, 0
      %p57 = por %p55, %p56
      %p58 = scmp.ne.s32.totalorder %s47, %s50
      %p59 = scmp.eq.s32.totalorder %s28, 3
      %p60 = por %p58, %p59
      %p61 = scmp.ne.s32.totalorder %s50, %s51
      %p62 = scmp.eq.s32.totalorder %s28, 0
      %p63 = por %p61, %p62
      %p64 = scmp.ne.s32.totalorder %s50, %s51
      %p65 = scmp.eq.s32.totalorder %s29, 3
      %p66 = por %p64, %p65
      %p68 = scmp.ne.s32.totalorder %s51, %s67
      %p69 = scmp.eq.s32.totalorder %s29, 0
      %p70 = por %p68, %p69
      %s71 = ssub.s32 %s30, %s42
      %s72 = ssub.s32 %s31, %s38
      %s73 = sor.u32 %s71, %s72
      %p74 = scmp.eq.s32.totalorder %s73, 0
      %s76 = sadd.s32 %s75, 1
      %s77 = scalar_select %p74, %s75, %s76
      %p80 = pneg %p74
      %p81 = scmp.eq.s32.totalorder %s23, 3
      %p82 = por %p80, %p81
      %p83 = scmp.ne.s32.totalorder %s75, %s78
      %p84 = scmp.eq.s32.totalorder %s23, 0
      %p85 = por %p83, %p84
      %p86 = scmp.ne.s32.totalorder %s75, %s78
      %p87 = scmp.eq.s32.totalorder %s28, 3
      %p88 = por %p86, %p87
      %p89 = scmp.ne.s32.totalorder %s78, %s79
      %p90 = scmp.eq.s32.totalorder %s28, 0
      %p91 = por %p89, %p90
      %p92 = scmp.ne.s32.totalorder %s78, %s79
      %p93 = scmp.eq.s32.totalorder %s29, 3
      %p94 = por %p92, %p93
      %p96 = scmp.ne.s32.totalorder %s79, %s95
      %p97 = scmp.eq.s32.totalorder %s29, 0
      %p98 = por %p96, %p97
      %s99 = ssub.s32 %s30, %s42
      %p100 = scmp.eq.s32.totalorder %s99, 0
      %s102 = sadd.s32 %s101, 1
      %s103 = scalar_select %p100, %s101, %s102
      %p106 = pneg %p100
      %p107 = scmp.eq.s32.totalorder %s23, 3
      %p108 = por %p106, %p107
      %p109 = scmp.ne.s32.totalorder %s101, %s104
      %p110 = scmp.eq.s32.totalorder %s23, 0
      %p111 = por %p109, %p110
      %p112 = scmp.ne.s32.totalorder %s101, %s104
      %p113 = scmp.eq.s32.totalorder %s28, 3
      %p114 = por %p112, %p113
      %p115 = scmp.ne.s32.totalorder %s104, %s105
      %p116 = scmp.eq.s32.totalorder %s28, 0
      %p117 = por %p115, %p116
      %p118 = scmp.ne.s32.totalorder %s104, %s105
      %p119 = scmp.eq.s32.totalorder %s29, 3
      %p120 = por %p118, %p119
      %p122 = scmp.ne.s32.totalorder %s105, %s121
      %p123 = scmp.eq.s32.totalorder %s29, 0
      %p124 = por %p122, %p123
      %s125 = ssub.s32 %s30, %s42
      %p126 = scmp.eq.s32.totalorder %s125, 0
      %s128 = sadd.s32 %s127, 1
      %s129 = scalar_select %p126, %s127, %s128
      %p132 = pneg %p126
      %p133 = scmp.eq.s32.totalorder %s23, 3
      %p134 = por %p132, %p133
      %p135 = scmp.ne.s32.totalorder %s127, %s130
      %p136 = scmp.eq.s32.totalorder %s23, 0
      %p137 = por %p135, %p136
      %p138 = scmp.ne.s32.totalorder %s127, %s130
      %p139 = scmp.eq.s32.totalorder %s28, 3
      %p140 = por %p138, %p139
      %p141 = scmp.ne.s32.totalorder %s130, %s131
      %p142 = scmp.eq.s32.totalorder %s28, 0
      %p143 = por %p141, %p142
      %p144 = scmp.ne.s32.totalorder %s130, %s131
      %p145 = scmp.eq.s32.totalorder %s29, 3
      %p146 = por %p144, %p145
      %p148 = scmp.ne.s32.totalorder %s131, %s147
      %p149 = scmp.eq.s32.totalorder %s29, 0
      %p150 = por %p148, %p149
      %s152 = sadd.s32 %s151, 1
      %p155 = scmp.eq.s32.totalorder %s23, 3
      %p156 = scmp.ne.s32.totalorder %s151, %s153
      %p157 = scmp.eq.s32.totalorder %s23, 0
      %p158 = por %p156, %p157
      %p159 = scmp.ne.s32.totalorder %s151, %s153
      %p160 = scmp.eq.s32.totalorder %s28, 3
      %p161 = por %p159, %p160
      %p162 = scmp.ne.s32.totalorder %s153, %s154
      %p163 = scmp.eq.s32.totalorder %s28, 0
      %p164 = por %p162, %p163
      %p165 = scmp.ne.s32.totalorder %s153, %s154
      %p166 = scmp.eq.s32.totalorder %s29, 3
      %p167 = por %p165, %p166
      %p169 = scmp.ne.s32.totalorder %s154, %s168
      %p170 = scmp.eq.s32.totalorder %s29, 0
      %p171 = por %p169, %p170
      %s173 = sadd.s32 %s172, 1
      %p176 = scmp.eq.s32.totalorder %s23, 3
      %p177 = scmp.ne.s32.totalorder %s172, %s174
      %p178 = scmp.eq.s32.totalorder %s23, 0
      %p179 = por %p177, %p178
      %p180 = scmp.ne.s32.totalorder %s172, %s174
      %p181 = scmp.eq.s32.totalorder %s28, 3
      %p182 = por %p180, %p181
      %p183 = scmp.ne.s32.totalorder %s174, %s175
      %p184 = scmp.eq.s32.totalorder %s28, 0
      %p185 = por %p183, %p184
      %p186 = scmp.ne.s32.totalorder %s174, %s175
      %p187 = scmp.eq.s32.totalorder %s29, 3
      %p188 = por %p186, %p187
      %p190 = scmp.ne.s32.totalorder %s175, %s189
      %p191 = scmp.eq.s32.totalorder %s29, 0
      %p192 = por %p190, %p191
      %s194 = sadd.s32 %s193, 1
      %p197 = scmp.eq.s32.totalorder %s23, 3
      %p198 = scmp.ne.s32.totalorder %s193, %s195
      %p199 = scmp.eq.s32.totalorder %s23, 0
      %p200 = por %p198, %p199
      %p201 = scmp.ne.s32.totalorder %s193, %s195
      %p202 = scmp.eq.s32.totalorder %s28, 3
      %p203 = por %p201, %p202
      %p204 = scmp.ne.s32.totalorder %s195, %s196
      %p205 = scmp.eq.s32.totalorder %s28, 0
      %p206 = por %p204, %p205
      %p207 = scmp.ne.s32.totalorder %s195, %s196
      %p208 = scmp.eq.s32.totalorder %s29, 3
      %p209 = por %p207, %p208
      %p211 = scmp.ne.s32.totalorder %s196, %s210
      %p212 = scmp.eq.s32.totalorder %s29, 0
      %p213 = por %p211, %p212
      %s215 = sadd.s32 %s214, 1
      %p218 = scmp.eq.s32.totalorder %s23, 3
      %p219 = scmp.ne.s32.totalorder %s214, %s216
      %p220 = scmp.eq.s32.totalorder %s23, 0
      %p221 = por %p219, %p220
      %p222 = scmp.ne.s32.totalorder %s214, %s216
      %p223 = scmp.eq.s32.totalorder %s28, 3
      %p224 = por %p222, %p223
      %p225 = scmp.ne.s32.totalorder %s216, %s217
      %p226 = scmp.eq.s32.totalorder %s28, 0
      %p227 = por %p225, %p226
      %p228 = scmp.ne.s32.totalorder %s216, %s217
      %p229 = scmp.eq.s32.totalorder %s29, 3
      %p230 = por %p228, %p229
      %p232 = scmp.ne.s32.totalorder %s217, %s231
      %p233 = scmp.eq.s32.totalorder %s29, 0
      %p234 = por %p232, %p233
      %s236 = sadd.s32 %s235, 1
      %p239 = scmp.eq.s32.totalorder %s23, 3
      %p240 = scmp.ne.s32.totalorder %s235, %s237
      %p241 = scmp.eq.s32.totalorder %s23, 0
      %p242 = por %p240, %p241
      %p243 = scmp.ne.s32.totalorder %s235, %s237
      %p244 = scmp.eq.s32.totalorder %s28, 3
      %p245 = por %p243, %p244
      %p246 = scmp.ne.s32.totalorder %s237, %s238
      %p247 = scmp.eq.s32.totalorder %s28, 0
      %p248 = por %p246, %p247
      %p249 = scmp.ne.s32.totalorder %s237, %s238
      %p250 = scmp.eq.s32.totalorder %s29, 3
      %p251 = por %p249, %p250
      %p253 = scmp.ne.s32.totalorder %s238, %s252
      %p254 = scmp.eq.s32.totalorder %s29, 0
      %p255 = por %p253, %p254
      %s257 = sadd.s32 %s256, 1
      %p260 = scmp.eq.s32.totalorder %s23, 3
      %p261 = scmp.ne.s32.totalorder %s256, %s258
      %p262 = scmp.eq.s32.totalorder %s23, 0
      %p263 = por %p261, %p262
      %p264 = scmp.ne.s32.totalorder %s256, %s258
      %p265 = scmp.eq.s32.totalorder %s28, 3
      %p266 = por %p264, %p265
      %p267 = scmp.ne.s32.totalorder %s258, %s259
      %p268 = scmp.eq.s32.totalorder %s28, 0
      %p269 = por %p267, %p268
      %p270 = scmp.ne.s32.totalorder %s258, %s259
      %p271 = scmp.eq.s32.totalorder %s29, 3
      %p272 = por %p270, %p271
      %p274 = scmp.ne.s32.totalorder %s259, %s273
      %p275 = scmp.eq.s32.totalorder %s29, 0
      %p276 = por %p274, %p275
      %s278 = sadd.s32 %s277, 1
      %p281 = scmp.eq.s32.totalorder %s23, 3
      %p282 = scmp.ne.s32.totalorder %s277, %s279
      %p283 = scmp.eq.s32.totalorder %s23, 0
      %p284 = por %p282, %p283
      %p285 = scmp.ne.s32.totalorder %s277, %s279
      %p286 = scmp.eq.s32.totalorder %s28, 3
      %p287 = por %p285, %p286
      %p288 = scmp.ne.s32.totalorder %s279, %s280
      %p289 = scmp.eq.s32.totalorder %s28, 0
      %p290 = por %p288, %p289
      %p291 = scmp.ne.s32.totalorder %s279, %s280
      %p292 = scmp.eq.s32.totalorder %s29, 3
      %p293 = por %p291, %p292
      %p295 = scmp.ne.s32.totalorder %s280, %s294
      %p296 = scmp.eq.s32.totalorder %s29, 0
      %p297 = por %p295, %p296
      %s299 = sadd.s32 %s298, 1
      %p302 = scmp.eq.s32.totalorder %s23, 3
      %p303 = scmp.ne.s32.totalorder %s298, %s300
      %p304 = scmp.eq.s32.totalorder %s23, 0
      %p305 = por %p303, %p304
      %p306 = scmp.ne.s32.totalorder %s298, %s300
      %p307 = scmp.eq.s32.totalorder %s28, 3
      %p308 = por %p306, %p307
      %p309 = scmp.ne.s32.totalorder %s300, %s301
      %p310 = scmp.eq.s32.totalorder %s28, 0
      %p311 = por %p309, %p310
      %p312 = scmp.ne.s32.totalorder %s300, %s301
      %p313 = scmp.eq.s32.totalorder %s29, 3
      %p314 = por %p312, %p313
      %p316 = scmp.ne.s32.totalorder %s301, %s315
      %p317 = scmp.eq.s32.totalorder %s29, 0
      %p318 = por %p316, %p317
      %s320 = sadd.s32 %s319, 1
      %p323 = scmp.eq.s32.totalorder %s23, 3
      %p324 = scmp.ne.s32.totalorder %s319, %s321
      %p325 = scmp.eq.s32.totalorder %s23, 0
      %p326 = por %p324, %p325
      %p327 = scmp.ne.s32.totalorder %s319, %s321
      %p328 = scmp.eq.s32.totalorder %s28, 3
      %p329 = por %p327, %p328
      %p330 = scmp.ne.s32.totalorder %s321, %s322
      %p331 = scmp.eq.s32.totalorder %s28, 0
      %p332 = por %p330, %p331
      %p333 = scmp.ne.s32.totalorder %s321, %s322
      %p334 = scmp.eq.s32.totalorder %s29, 3
      %p335 = por %p333, %p334
      %p337 = scmp.ne.s32.totalorder %s322, %s336
      %p338 = scmp.eq.s32.totalorder %s29, 0
      %p339 = por %p337, %p338
      %s341 = sadd.s32 %s340, 1
      %p344 = scmp.eq.s32.totalorder %s23, 3
      %p345 = scmp.ne.s32.totalorder %s340, %s342
      %p346 = scmp.eq.s32.totalorder %s23, 0
      %p347 = por %p345, %p346
      %p348 = scmp.ne.s32.totalorder %s340, %s342
      %p349 = scmp.eq.s32.totalorder %s28, 3
      %p350 = por %p348, %p349
      %p351 = scmp.ne.s32.totalorder %s342, %s343
      %p352 = scmp.eq.s32.totalorder %s28, 0
      %p353 = por %p351, %p352
      %p354 = scmp.ne.s32.totalorder %s342, %s343
      %p355 = scmp.eq.s32.totalorder %s29, 3
      %p356 = por %p354, %p355
      %p358 = scmp.ne.s32.totalorder %s343, %s357
      %p359 = scmp.eq.s32.totalorder %s29, 0
      %p360 = por %p358, %p359
      %s361 = ssub.s32 %s30, %s42
      %s362 = ssub.s32 %s31, %s38
      %s363 = sor.u32 %s361, %s362
      %p364 = scmp.eq.s32.totalorder %s363, 0
      %s366 = sadd.s32 %s365, 1
      %s367 = scalar_select %p364, %s365, %s366
      %p370 = pneg %p364
      %p371 = scmp.eq.s32.totalorder %s23, 3
      %p372 = por %p370, %p371
      %p373 = scmp.ne.s32.totalorder %s365, %s368
      %p374 = scmp.eq.s32.totalorder %s23, 0
      %p375 = por %p373, %p374
      %p376 = scmp.ne.s32.totalorder %s365, %s368
      %p377 = scmp.eq.s32.totalorder %s28, 3
      %p378 = por %p376, %p377
      %p379 = scmp.ne.s32.totalorder %s368, %s369
      %p380 = scmp.eq.s32.totalorder %s28, 0
      %p381 = por %p379, %p380
      %p382 = scmp.ne.s32.totalorder %s368, %s369
      %p383 = scmp.eq.s32.totalorder %s29, 3
      %p384 = por %p382, %p383
      %p386 = scmp.ne.s32.totalorder %s369, %s385
      %p387 = scmp.eq.s32.totalorder %s29, 0
      %p388 = por %p386, %p387
      %p389 = scmp.le.s32.totalorder 1, %s23
      %p390 = scmp.lt.s32.totalorder %s23, 5
      %p391 = pnand %p389, %p390
      %p392 = pneg %p391
      // Predicated region
      $region9: #{tpu_custom_call.1} parent=5 // pred_check
        _
      $region10: #{tpu_custom_call.1} parent=5 // pred_check_branch
        %394 = sbr.rel (%p391) target = $region12
      $region11: #{tpu_custom_call.1} parent=5 // pred_region
        %s395 = ssub.s32 %s23, 1
        // Predicated region
        $region13: #{tpu_custom_call.1} parent=11 // pred_check
          %p396 = pneg %p164
        $region14: #{tpu_custom_call.1} parent=11 // pred_check_branch
          %398 = sbr.rel (%p396) target = $region16
        $region15: #{tpu_custom_call.1} parent=11 // pred_region
          _
        $region16: #{tpu_custom_call.1} parent=11 // pred_fallthru
          _
        // Predicated region
        $region17: #{tpu_custom_call.1} parent=11 // pred_check
          %p399 = pneg %p185
        $region18: #{tpu_custom_call.1} parent=11 // pred_check_branch
          %401 = sbr.rel (%p399) target = $region20
        $region19: #{tpu_custom_call.1} parent=11 // pred_region
          _
        $region20: #{tpu_custom_call.1} parent=11 // pred_fallthru
          _
        // Predicated region
        $region21: #{tpu_custom_call.1} parent=11 // pred_check
          %p402 = pneg %p206
        $region22: #{tpu_custom_call.1} parent=11 // pred_check_branch
          %404 = sbr.rel (%p402) target = $region24
        $region23: #{tpu_custom_call.1} parent=11 // pred_region
          _
        $region24: #{tpu_custom_call.1} parent=11 // pred_fallthru
          _
        // Predicated region
        $region25: #{tpu_custom_call.1} parent=11 // pred_check
          %p405 = pneg %p227
        $region26: #{tpu_custom_call.1} parent=11 // pred_check_branch
          %407 = sbr.rel (%p405) target = $region28
        $region27: #{tpu_custom_call.1} parent=11 // pred_region
          _
        $region28: #{tpu_custom_call.1} parent=11 // pred_fallthru
          _
        // Predicated region
        $region29: #{tpu_custom_call.1} parent=11 // pred_check
          %p408 = pneg %p248
        $region30: #{tpu_custom_call.1} parent=11 // pred_check_branch
          %410 = sbr.rel (%p408) target = $region32
        $region31: #{tpu_custom_call.1} parent=11 // pred_region
          _
        $region32: #{tpu_custom_call.1} parent=11 // pred_fallthru
          _
        // Predicated region
        $region33: #{tpu_custom_call.1} parent=11 // pred_check
          %p411 = pneg %p269
        $region34: #{tpu_custom_call.1} parent=11 // pred_check_branch
          %413 = sbr.rel (%p411) target = $region36
        $region35: #{tpu_custom_call.1} parent=11 // pred_region
          _
        $region36: #{tpu_custom_call.1} parent=11 // pred_fallthru
          _
        // Predicated region
        $region37: #{tpu_custom_call.1} parent=11 // pred_check
          %p414 = pneg %p290
        $region38: #{tpu_custom_call.1} parent=11 // pred_check_branch
          %416 = sbr.rel (%p414) target = $region40
        $region39: #{tpu_custom_call.1} parent=11 // pred_region
          _
        $region40: #{tpu_custom_call.1} parent=11 // pred_fallthru
          _
        // Predicated region
        $region41: #{tpu_custom_call.1} parent=11 // pred_check
          %p417 = pneg %p311
        $region42: #{tpu_custom_call.1} parent=11 // pred_check_branch
          %419 = sbr.rel (%p417) target = $region44
        $region43: #{tpu_custom_call.1} parent=11 // pred_region
          _
        $region44: #{tpu_custom_call.1} parent=11 // pred_fallthru
          _
        // Predicated region
        $region45: #{tpu_custom_call.1} parent=11 // pred_check
          %p420 = pneg %p332
        $region46: #{tpu_custom_call.1} parent=11 // pred_check_branch
          %422 = sbr.rel (%p420) target = $region48
        $region47: #{tpu_custom_call.1} parent=11 // pred_region
          _
        $region48: #{tpu_custom_call.1} parent=11 // pred_fallthru
          _
        // Predicated region
        $region49: #{tpu_custom_call.1} parent=11 // pred_check
          %p423 = pneg %p353
        $region50: #{tpu_custom_call.1} parent=11 // pred_check_branch
          %425 = sbr.rel (%p423) target = $region52
        $region51: #{tpu_custom_call.1} parent=11 // pred_region
          _
        $region52: #{tpu_custom_call.1} parent=11 // pred_fallthru
          _
      $region12: #{tpu_custom_call.1} parent=5 // pred_fallthru
        _
      %p426 = scmp.lt.s32.totalorder %s23, 4
      // Predicated region
      $region53: #{tpu_custom_call.1} parent=5 // pred_check
        %p427 = pneg %p426
      $region54: #{tpu_custom_call.1} parent=5 // pred_check_branch
        %429 = sbr.rel (%p427) target = $region56
      $region55: #{tpu_custom_call.1} parent=5 // pred_region
        // Predicated region
        $region57: #{tpu_custom_call.1} parent=55 // pred_check
          %p430 = pneg %p57
        $region58: #{tpu_custom_call.1} parent=55 // pred_check_branch
          %432 = sbr.rel (%p430) target = $region60
        $region59: #{tpu_custom_call.1} parent=55 // pred_region
          %p433 = scmp.lt.s32.totalorder %s30, 1
          %s434 = scalar_select %p433, %s30, 1
          %p435 = scmp.lt.s32.totalorder %s31, 1
          %s436 = scalar_select %p435, %s31, 1
          %s437 = smul.addr %s434, 2
          %s438 = sadd.s32 %s436, %s437
          %s439 = smul.addr %s438, 8
          %s440 = scalar_lea.vmem %s0, %s439
        $region60: #{tpu_custom_call.1} parent=55 // pred_fallthru
          _
        // Predicated region
        $region61: #{tpu_custom_call.1} parent=55 // pred_check
          %p441 = pneg %p85
        $region62: #{tpu_custom_call.1} parent=55 // pred_check_branch
          %443 = sbr.rel (%p441) target = $region64
        $region63: #{tpu_custom_call.1} parent=55 // pred_region
          %s444 = sand.u32 %s75, 1
          %s445 = sand.u32 %s75, 1
          %s446 = smul.addr %s445, 16
          %s447 = scalar_lea.vmem [#allocation3], %s446
          %s448 = smul.addr %s30, 8
          %s449 = sadd.s32 %s31, %s448
          %s450 = smul.addr %s449, 4
          %s451 = scalar_lea.vmem %s1, %s450
          // Predicated region
          $region65: #{tpu_custom_call.1} parent=63 // pred_check
            _
          $region66: #{tpu_custom_call.1} parent=63 // pred_check_branch
            %453 = sbr.rel (0) target = $region68
          $region67: #{tpu_custom_call.1} parent=63 // pred_region
            // Predicated region
            $region69: #{tpu_custom_call.1} parent=67 // pred_check
              _
            $region70: #{tpu_custom_call.1} parent=67 // pred_check_branch
              %455 = sbr.rel target = $region72
            $region71: #{tpu_custom_call.1} parent=67 // pred_region
              // Predicated region
              $region84: #{tpu_custom_call.1} parent=71 // pred_check
                _
              $region85: #{tpu_custom_call.1} parent=71 // pred_check_branch
                %476 = sbr.rel (0) target = $region87
              $region86: #{tpu_custom_call.1} parent=71 // pred_region
                loop: start=0, step=1, limit=1
                $region88: #{tpu_custom_call.1} parent=86 // loop_pre_header
                  _
                $region89: #{tpu_custom_call.1} parent=86 // loop_header
                  %s478 = sphi 0, %s482
                  %p479 = scmp.ge.s32.totalorder %s478, 1
                  %s483 = sphi %s451, %s451
                  %s484 = sphi %s447, %s447
                $region90: #{tpu_custom_call.1} parent=86 // loop_header_branch
                  %481 = sbr.rel (%p479) target = $region94
                $region91: #{tpu_custom_call.1} parent=86 // loop_body
                  _
                $region92: #{tpu_custom_call.1} parent=86 // loop_footer
                  %s482 = sadd.s32 1, %s478
                $region93: #{tpu_custom_call.1} parent=86 // loop_footer_branch
                  %477 = sbr.rel target = $region89
                $region94: #{tpu_custom_call.1} parent=86 // loop_exit
                  _
                loop: start=0, step=1, limit=1
                $region95: #{tpu_custom_call.1} parent=86 // loop_pre_header
                  _
                $region96: #{tpu_custom_call.1} parent=86 // loop_header
                  %s487 = sphi 0, %s491
                  %p488 = scmp.ge.s32.totalorder %s487, 1
                  %s492 = sphi %s451, %s451
                  %s493 = sphi %s447, %s447
                $region97: #{tpu_custom_call.1} parent=86 // loop_header_branch
                  %490 = sbr.rel (%p488) target = $region101
                $region98: #{tpu_custom_call.1} parent=86 // loop_body
                  %v494 = vld [vmem:[%s492] sm:$0xf]
                  %495 = vst [vmem:[%s493] sm:$0xf] %v494
                  %v496 = vld [vmem:[%s492 + $0x8] sm:$0xf]
                  %497 = vst [vmem:[%s493 + $0x4] sm:$0xf] %v496
                  %v498 = vld [vmem:[%s492 + $0x10] sm:$0xf]
                  %499 = vst [vmem:[%s493 + $0x8] sm:$0xf] %v498
                  %v500 = vld [vmem:[%s492 + $0x18] sm:$0xf]
                  %501 = vst [vmem:[%s493 + $0xc] sm:$0xf] %v500
                $region99: #{tpu_custom_call.1} parent=86 // loop_footer
                  %s491 = sadd.s32 1, %s487
                $region100: #{tpu_custom_call.1} parent=86 // loop_footer_branch
                  %486 = sbr.rel target = $region96
                $region101: #{tpu_custom_call.1} parent=86 // loop_exit
                  _
              $region87: #{tpu_custom_call.1} parent=71 // pred_fallthru
                _
            $region72: #{tpu_custom_call.1} parent=67 // pred_fallthru
              _
            // Predicated region
            $region73: #{tpu_custom_call.1} parent=67 // pred_check
              _
            $region74: #{tpu_custom_call.1} parent=67 // pred_check_branch
              %457 = sbr.rel (0) target = $region76
            $region75: #{tpu_custom_call.1} parent=67 // pred_region
              loop: start=0, step=1, limit=1
              $region77: #{tpu_custom_call.1} parent=75 // loop_pre_header
                _
              $region78: #{tpu_custom_call.1} parent=75 // loop_header
                %s460 = sphi 0, %s464
                %p461 = scmp.ge.s32.totalorder %s460, 1
                %s465 = sphi %s451, %s451
                %s466 = sphi %s447, %s447
              $region79: #{tpu_custom_call.1} parent=75 // loop_header_branch
                %463 = sbr.rel (%p461) target = $region83
              $region80: #{tpu_custom_call.1} parent=75 // loop_body
                %v467 = vld [vmem:[%s465] sm:$0xf]
                %468 = vst [vmem:[%s466] sm:$0xf] %v467
                %v469 = vld [vmem:[%s465 + $0x8] sm:$0xf]
                %470 = vst [vmem:[%s466 + $0x4] sm:$0xf] %v469
                %v471 = vld [vmem:[%s465 + $0x10] sm:$0xf]
                %472 = vst [vmem:[%s466 + $0x8] sm:$0xf] %v471
                %v473 = vld [vmem:[%s465 + $0x18] sm:$0xf]
                %474 = vst [vmem:[%s466 + $0xc] sm:$0xf] %v473
              $region81: #{tpu_custom_call.1} parent=75 // loop_footer
                %s464 = sadd.s32 1, %s460
              $region82: #{tpu_custom_call.1} parent=75 // loop_footer_branch
                %459 = sbr.rel target = $region78
              $region83: #{tpu_custom_call.1} parent=75 // loop_exit
                _
            $region76: #{tpu_custom_call.1} parent=67 // pred_fallthru
              _
          $region68: #{tpu_custom_call.1} parent=63 // pred_fallthru
            _
          %502 = vnop
        $region64: #{tpu_custom_call.1} parent=55 // pred_fallthru
          _
        // Predicated region
        $region102: #{tpu_custom_call.1} parent=55 // pred_check
          %p503 = pneg %p111
        $region103: #{tpu_custom_call.1} parent=55 // pred_check_branch
          %505 = sbr.rel (%p503) target = $region105
        $region104: #{tpu_custom_call.1} parent=55 // pred_region
          %p506 = scmp.lt.s32.totalorder %s30, 1
          %s507 = scalar_select %p506, %s30, 1
          %s508 = smul.addr %s507, 4
          %s509 = smul.addr %s508, 4
          %s510 = scalar_lea.vmem %s2, %s509
        $region105: #{tpu_custom_call.1} parent=55 // pred_fallthru
          _
        // Predicated region
        $region106: #{tpu_custom_call.1} parent=55 // pred_check
          %p511 = pneg %p137
        $region107: #{tpu_custom_call.1} parent=55 // pred_check_branch
          %513 = sbr.rel (%p511) target = $region109
        $region108: #{tpu_custom_call.1} parent=55 // pred_region
          %p514 = scmp.lt.s32.totalorder %s30, 1
          %s515 = scalar_select %p514, %s30, 1
          %s516 = smul.addr %s515, 8
          %s517 = smul.addr %s516, 4
          %s518 = scalar_lea.vmem %s3, %s517
        $region109: #{tpu_custom_call.1} parent=55 // pred_fallthru
          _
      $region56: #{tpu_custom_call.1} parent=5 // pred_fallthru
        _
      %p519 = scmp.le.s32.totalorder 1, %s23
      %p520 = scmp.lt.s32.totalorder %s23, 5
      %p521 = pnand %p519, %p520
      %p522 = pneg %p521
      // Predicated region
      $region110: #{tpu_custom_call.1} parent=5 // pred_check
        _
      $region111: #{tpu_custom_call.1} parent=5 // pred_check_branch
        %524 = sbr.rel (%p521) target = $region113
      $region112: #{tpu_custom_call.1} parent=5 // pred_region
        %s525 = ssub.s32 %s23, 1
        %s526 = sand.u32 %s78, 1
        %s527 = sand.u32 %s78, 1
        %s528 = smul.addr %s527, 16
        %s529 = scalar_lea.vmem [#allocation3], %s528
        // Predicated region
        $region114: #{tpu_custom_call.1} parent=112 // pred_check
          %p530 = pneg %p91
        $region115: #{tpu_custom_call.1} parent=112 // pred_check_branch
          %532 = sbr.rel (%p530) target = $region117
        $region116: #{tpu_custom_call.1} parent=112 // pred_region
          _
        $region117: #{tpu_custom_call.1} parent=112 // pred_fallthru
          _
        %p533 = scmp.lt.s32.totalorder %s32, 1
        %s534 = scalar_select %p533, %s32, 1
        %p535 = scmp.lt.s32.totalorder %s33, 1
        %s536 = scalar_select %p535, %s33, 1
        %s537 = smul.addr %s534, 2
        %s538 = sadd.s32 %s536, %s537
        %s539 = smul.addr %s538, 8
        %s540 = scalar_lea.vmem %s0, %s539
        %p541 = pneg %p63
        %p542 = pneg %p60
        %s543 = sand.u32 %s78, 1
        %s544 = sand.u32 %s78, 1
        %s545 = smul.addr %s544, 16
        %s546 = scalar_lea.vmem [#allocation3], %s545
        %p547 = pneg %p91
        %p548 = pneg %p88
        %p549 = scmp.lt.s32.totalorder %s32, 1
        %s550 = scalar_select %p549, %s32, 1
        %s551 = smul.addr %s550, 4
        %s552 = smul.addr %s551, 4
        %s553 = scalar_lea.vmem %s2, %s552
        %p554 = pneg %p117
        %p555 = pneg %p114
        %p556 = scmp.lt.s32.totalorder %s32, 1
        %s557 = scalar_select %p556, %s32, 1
        %s558 = smul.addr %s557, 8
        %s559 = smul.addr %s558, 4
        %s560 = scalar_lea.vmem %s3, %s559
        %p561 = pneg %p143
        %p562 = pneg %p140
        %p563 = pneg %p164
        %p564 = pneg %p161
        %p565 = pneg %p185
        %p566 = pneg %p182
        %p567 = pneg %p206
        %p568 = pneg %p203
        %p569 = pneg %p227
        %p570 = pneg %p224
        %p571 = pneg %p248
        %p572 = pneg %p245
        %p573 = pneg %p269
        %p574 = pneg %p266
        %p575 = pneg %p290
        %p576 = pneg %p287
        %p577 = pneg %p311
        %p578 = pneg %p308
        %p579 = pneg %p332
        %p580 = pneg %p329
        %p581 = pneg %p353
        %p582 = pneg %p350
        %p583 = pneg %p381
        %p584 = pneg %p378
        %s585 = sand.u32 %s368, 1
        %s586 = scalar_lea.sflag [#allocation5], %s585
        %s587 = sand.u32 %s368, 1
        %s588 = smul.addr %s587, 8
        %s589 = scalar_lea.vmem [#allocation4], %s588
        %p590 = scmp.lt.s32.totalorder %s32, 1
        %s591 = scalar_select %p590, %s32, 1
        %p592 = scmp.lt.s32.totalorder %s33, 1
        %s593 = scalar_select %p592, %s33, 1
        %s594 = smul.addr %s591, 2
        %s595 = sadd.s32 %s593, %s594
        %s596 = smul.addr %s595, 8
        %s597 = scalar_lea.vmem %s0, %s596
        %p598 = scmp.lt.s32.totalorder %s32, 1
        %s599 = scalar_select %p598, %s32, 1
        %s600 = smul.addr %s599, 4
        %s601 = smul.addr %s600, 4
        %s602 = scalar_lea.vmem %s2, %s601
        %p603 = scmp.lt.s32.totalorder %s32, 1
        %s604 = scalar_select %p603, %s32, 1
        %s605 = smul.addr %s604, 8
        %s606 = smul.addr %s605, 4
        %s607 = scalar_lea.vmem %s3, %s606
        %v609 = vld [vmem:[%s529] sm:$0xf]
        %v610 = vld [vmem:[%s602] sm:$0xf]
        %vm611 = vcmask 64512
        %v613 = vsel %vm611, %v609, 0
        %vm615 = vcmask 1043456
        %v617 = vsel %vm615, %v610, 0
        %619 = vmatprep.subr.bf16.mxu0 0
        %620 = vmatpush1.bf16.msra.mxu0 %v617
        %621 = vmatprep.subr.bf16.mxu0 0
        %622 = vmatpush1.bf16.msra.mxu0 0
        %623 = vmatprep.subr.bf16.mxu0 0
        %624 = vmatpush1.bf16.msra.mxu0 0
        %625 = vmatprep.subr.bf16.mxu0 0
        %626 = vmatpush1.bf16.msra.mxu0 0
        %627 = vmatprep.subr.bf16.mxu0 0
        %628 = vmatpush1.bf16.msra.mxu0 0
        %629 = vmatprep.subr.bf16.mxu0 0
        %630 = vmatpush1.bf16.msra.mxu0 0
        %631 = vmatprep.subr.bf16.mxu0 0
        %632 = vmatpush1.bf16.msra.mxu0 0
        %633 = vmatprep.subr.bf16.mxu0 0
        %634 = vmatpush1.bf16.msra.mxu0 0
        %635 = vmatprep.subr.bf16.mxu0 0
        %636 = vmatpush1.bf16.msra.mxu0 0
        %637 = vmatprep.subr.bf16.mxu0 0
        %638 = vmatpush1.bf16.msra.mxu0 0
        %639 = vmatprep.subr.bf16.mxu0 0
        %640 = vmatpush1.bf16.msra.mxu0 0
        %641 = vmatprep.subr.bf16.mxu0 0
        %642 = vmatpush1.bf16.msra.mxu0 0
        %643 = vmatprep.subr.bf16.mxu0 0
        %644 = vmatpush1.bf16.msra.mxu0 0
        %645 = vmatprep.subr.bf16.mxu0 0
        %646 = vmatpush1.bf16.msra.mxu0 0
        %647 = vmatprep.subr.bf16.mxu0 0
        %648 = vmatpush1.bf16.msra.mxu0 0
        %649 = vmatprep.subr.bf16.mxu0 0
        %650 = vmatpush1.bf16.msra.mxu0 0
        %651 = vmatprep.mubr.bf16.mxu0 0
        %652 = vmatmul.mubr.bf16.gmra.mrb[0].mxu0 %v613
        %v653 = vpop.f32.mrb[0].mxu0
        %v654 = vadd.f32 0.0, %v653
        %v655 = vpop.f32.mrb[0].mxu0
        %v656 = vpop.f32.mrb[0].mxu0
        %v657 = vpop.f32.mrb[0].mxu0
        %658 = vdwg.mxu0
        %vm659 = vcmask 130048
        %v660 = vsel %vm659, %v654, -inf
        %661 = vmax.xlane.f32.xlu0 %v660
        %v662 = vpop.xlane.xlu0 %661
        %v663 = vsub.f32 %v654, %v662
        %v664 = vmul.f32 %v663, 1.442695
        %v665 = vpow.pop %v664
        %v666 = vsel %vm659, %v665, 0.0
        %667 = vadd.xlane.f32.xlu0 %v666
        %v668 = vpop.xlane.xlu0 %667
        %v669 = vpack.c.bf16 %v665, %v665
        %v670 = vld [vmem:[%s607] sm:$0xf]
        %v671 = vld [vmem:[%s607 + $0x4] sm:$0xf]
        %v674 = vunpack.c.l.b16 %v670
        %v675 = vunpack.c.l.b16 %v671
        %v676 = vpack.c.b16 %v675, %v674
        %v679 = vsel %vm659, %v669, 0
        %681 = vmatprep.subr.bf16.mxu0 0
        %682 = vmatpush1.bf16.msra.mxu0 %v676
        %683 = vmatprep.subr.bf16.mxu0 0
        %684 = vmatpush1.bf16.msra.mxu0 0
        %685 = vmatprep.subr.bf16.mxu0 0
        %686 = vmatpush1.bf16.msra.mxu0 0
        %687 = vmatprep.subr.bf16.mxu0 0
        %688 = vmatpush1.bf16.msra.mxu0 0
        %689 = vmatprep.subr.bf16.mxu0 0
        %690 = vmatpush1.bf16.msra.mxu0 0
        %691 = vmatprep.subr.bf16.mxu0 0
        %692 = vmatpush1.bf16.msra.mxu0 0
        %693 = vmatprep.subr.bf16.mxu0 0
        %694 = vmatpush1.bf16.msra.mxu0 0
        %695 = vmatprep.subr.bf16.mxu0 0
        %696 = vmatpush1.bf16.msra.mxu0 0
        %697 = vmatprep.subr.bf16.mxu0 0
        %698 = vmatpush1.bf16.msra.mxu0 0
        %699 = vmatprep.subr.bf16.mxu0 0
        %700 = vmatpush1.bf16.msra.mxu0 0
        %701 = vmatprep.subr.bf16.mxu0 0
        %702 = vmatpush1.bf16.msra.mxu0 0
        %703 = vmatprep.subr.bf16.mxu0 0
        %704 = vmatpush1.bf16.msra.mxu0 0
        %705 = vmatprep.subr.bf16.mxu0 0
        %706 = vmatpush1.bf16.msra.mxu0 0
        %707 = vmatprep.subr.bf16.mxu0 0
        %708 = vmatpush1.bf16.msra.mxu0 0
        %709 = vmatprep.subr.bf16.mxu0 0
        %710 = vmatpush1.bf16.msra.mxu0 0
        %711 = vmatprep.subr.bf16.mxu0 0
        %712 = vmatpush1.bf16.msra.mxu0 0
        %713 = vmatprep.mubr.bf16.mxu0 0
        %714 = vmatmul.mubr.bf16.gmra.mrb[0].mxu0 %v679
        %v715 = vpop.f32.mrb[0].mxu0
        %v716 = vadd.f32 0.0, %v715
        %v717 = vpop.f32.mrb[0].mxu0
        %v718 = vpop.f32.mrb[0].mxu0
        %v719 = vpop.f32.mrb[0].mxu0
        %720 = vdwg.mxu0
        %v721 = vrcp.pop %v668
        %v722 = vmul.f32 %v716, %v721
        %v723 = vpack.c.bf16 %v722, %v722
        %vm724 = vcmask 60416
        %725 = vst.msk [vmem:[#allocation2] sm:$0xf] %vm724, %v723
        %s726 = scalar_lea.vmem %s529, 4 [#allocation3]
        %v727 = vld [vmem:[%s726] sm:$0xf]
        %s728 = scalar_lea.vmem %s602, 4
        %v729 = vld [vmem:[%s728] sm:$0xf]
        %v731 = vsel %vm611, %v727, 0
        %v734 = vsel %vm615, %v729, 0
        %736 = vmatprep.subr.bf16.mxu0 0
        %737 = vmatpush1.bf16.msra.mxu0 %v734
        %738 = vmatprep.subr.bf16.mxu0 0
        %739 = vmatpush1.bf16.msra.mxu0 0
        %740 = vmatprep.subr.bf16.mxu0 0
        %741 = vmatpush1.bf16.msra.mxu0 0
        %742 = vmatprep.subr.bf16.mxu0 0
        %743 = vmatpush1.bf16.msra.mxu0 0
        %744 = vmatprep.subr.bf16.mxu0 0
        %745 = vmatpush1.bf16.msra.mxu0 0
        %746 = vmatprep.subr.bf16.mxu0 0
        %747 = vmatpush1.bf16.msra.mxu0 0
        %748 = vmatprep.subr.bf16.mxu0 0
        %749 = vmatpush1.bf16.msra.mxu0 0
        %750 = vmatprep.subr.bf16.mxu0 0
        %751 = vmatpush1.bf16.msra.mxu0 0
        %752 = vmatprep.subr.bf16.mxu0 0
        %753 = vmatpush1.bf16.msra.mxu0 0
        %754 = vmatprep.subr.bf16.mxu0 0
        %755 = vmatpush1.bf16.msra.mxu0 0
        %756 = vmatprep.subr.bf16.mxu0 0
        %757 = vmatpush1.bf16.msra.mxu0 0
        %758 = vmatprep.subr.bf16.mxu0 0
        %759 = vmatpush1.bf16.msra.mxu0 0
        %760 = vmatprep.subr.bf16.mxu0 0
        %761 = vmatpush1.bf16.msra.mxu0 0
        %762 = vmatprep.subr.bf16.mxu0 0
        %763 = vmatpush1.bf16.msra.mxu0 0
        %764 = vmatprep.subr.bf16.mxu0 0
        %765 = vmatpush1.bf16.msra.mxu0 0
        %766 = vmatprep.subr.bf16.mxu0 0
        %767 = vmatpush1.bf16.msra.mxu0 0
        %768 = vmatprep.mubr.bf16.mxu0 0
        %769 = vmatmul.mubr.bf16.gmra.mrb[0].mxu0 %v731
        %v770 = vpop.f32.mrb[0].mxu0
        %v771 = vadd.f32 0.0, %v770
        %v772 = vpop.f32.mrb[0].mxu0
        %v773 = vpop.f32.mrb[0].mxu0
        %v774 = vpop.f32.mrb[0].mxu0
        %775 = vdwg.mxu0
        %v776 = vsel %vm659, %v771, -inf
        %777 = vmax.xlane.f32.xlu0 %v776
        %v778 = vpop.xlane.xlu0 %777
        %v779 = vsub.f32 %v771, %v778
        %v780 = vmul.f32 %v779, 1.442695
        %v781 = vpow.pop %v780
        %v782 = vsel %vm659, %v781, 0.0
        %783 = vadd.xlane.f32.xlu0 %v782
        %v784 = vpop.xlane.xlu0 %783
        %v785 = vpack.c.bf16 %v781, %v781
        %s786 = scalar_lea.vmem %s607, 8
        %v787 = vld [vmem:[%s786] sm:$0xf]
        %v788 = vld [vmem:[%s786 + $0x4] sm:$0xf]
        %v791 = vunpack.c.l.b16 %v787
        %v792 = vunpack.c.l.b16 %v788
        %v793 = vpack.c.b16 %v792, %v791
        %v796 = vsel %vm659, %v785, 0
        %798 = vmatprep.subr.bf16.mxu0 0
        %799 = vmatpush1.bf16.msra.mxu0 %v793
        %800 = vmatprep.subr.bf16.mxu0 0
        %801 = vmatpush1.bf16.msra.mxu0 0
        %802 = vmatprep.subr.bf16.mxu0 0
        %803 = vmatpush1.bf16.msra.mxu0 0
        %804 = vmatprep.subr.bf16.mxu0 0
        %805 = vmatpush1.bf16.msra.mxu0 0
        %806 = vmatprep.subr.bf16.mxu0 0
        %807 = vmatpush1.bf16.msra.mxu0 0
        %808 = vmatprep.subr.bf16.mxu0 0
        %809 = vmatpush1.bf16.msra.mxu0 0
        %810 = vmatprep.subr.bf16.mxu0 0
        %811 = vmatpush1.bf16.msra.mxu0 0
        %812 = vmatprep.subr.bf16.mxu0 0
        %813 = vmatpush1.bf16.msra.mxu0 0
        %814 = vmatprep.subr.bf16.mxu0 0
        %815 = vmatpush1.bf16.msra.mxu0 0
        %816 = vmatprep.subr.bf16.mxu0 0
        %817 = vmatpush1.bf16.msra.mxu0 0
        %818 = vmatprep.subr.bf16.mxu0 0
        %819 = vmatpush1.bf16.msra.mxu0 0
        %820 = vmatprep.subr.bf16.mxu0 0
        %821 = vmatpush1.bf16.msra.mxu0 0
        %822 = vmatprep.subr.bf16.mxu0 0
        %823 = vmatpush1.bf16.msra.mxu0 0
        %824 = vmatprep.subr.bf16.mxu0 0
        %825 = vmatpush1.bf16.msra.mxu0 0
        %826 = vmatprep.subr.bf16.mxu0 0
        %827 = vmatpush1.bf16.msra.mxu0 0
        %828 = vmatprep.subr.bf16.mxu0 0
        %829 = vmatpush1.bf16.msra.mxu0 0
        %830 = vmatprep.mubr.bf16.mxu0 0
        %831 = vmatmul.mubr.bf16.gmra.mrb[0].mxu0 %v796
        %v832 = vpop.f32.mrb[0].mxu0
        %v833 = vadd.f32 0.0, %v832
        %v834 = vpop.f32.mrb[0].mxu0
        %v835 = vpop.f32.mrb[0].mxu0
        %v836 = vpop.f32.mrb[0].mxu0
        %837 = vdwg.mxu0
        %v838 = vrcp.pop %v784
        %v839 = vmul.f32 %v833, %v838
        %v840 = vpack.c.bf16 %v839, %v839
        %v842 = vunpack.c.l.b16 %v840
        %v843 = vpack.c.b16 %v842, %v842
        %844 = vrot.lane.b32.xlu0 %v843, 8
        %v845 = vpop.permute.xlu0 %844
        %vm847 = vcmask 126016
        %848 = vst.msk [vmem:[#allocation2] sm:$0xf] %vm847, %v845
        %s849 = scalar_lea.vmem %s529, 8 [#allocation3]
        %v850 = vld [vmem:[%s849] sm:$0xf]
        %s851 = scalar_lea.vmem %s602, 8
        %v852 = vld [vmem:[%s851] sm:$0xf]
        %v854 = vsel %vm611, %v850, 0
        %v857 = vsel %vm615, %v852, 0
        %859 = vmatprep.subr.bf16.mxu0 0
        %860 = vmatpush1.bf16.msra.mxu0 %v857
        %861 = vmatprep.subr.bf16.mxu0 0
        %862 = vmatpush1.bf16.msra.mxu0 0
        %863 = vmatprep.subr.bf16.mxu0 0
        %864 = vmatpush1.bf16.msra.mxu0 0
        %865 = vmatprep.subr.bf16.mxu0 0
        %866 = vmatpush1.bf16.msra.mxu0 0
        %867 = vmatprep.subr.bf16.mxu0 0
        %868 = vmatpush1.bf16.msra.mxu0 0
        %869 = vmatprep.subr.bf16.mxu0 0
        %870 = vmatpush1.bf16.msra.mxu0 0
        %871 = vmatprep.subr.bf16.mxu0 0
        %872 = vmatpush1.bf16.msra.mxu0 0
        %873 = vmatprep.subr.bf16.mxu0 0
        %874 = vmatpush1.bf16.msra.mxu0 0
        %875 = vmatprep.subr.bf16.mxu0 0
        %876 = vmatpush1.bf16.msra.mxu0 0
        %877 = vmatprep.subr.bf16.mxu0 0
        %878 = vmatpush1.bf16.msra.mxu0 0
        %879 = vmatprep.subr.bf16.mxu0 0
        %880 = vmatpush1.bf16.msra.mxu0 0
        %881 = vmatprep.subr.bf16.mxu0 0
        %882 = vmatpush1.bf16.msra.mxu0 0
        %883 = vmatprep.subr.bf16.mxu0 0
        %884 = vmatpush1.bf16.msra.mxu0 0
        %885 = vmatprep.subr.bf16.mxu0 0
        %886 = vmatpush1.bf16.msra.mxu0 0
        %887 = vmatprep.subr.bf16.mxu0 0
        %888 = vmatpush1.bf16.msra.mxu0 0
        %889 = vmatprep.subr.bf16.mxu0 0
        %890 = vmatpush1.bf16.msra.mxu0 0
        %891 = vmatprep.mubr.bf16.mxu0 0
        %892 = vmatmul.mubr.bf16.gmra.mrb[0].mxu0 %v854
        %v893 = vpop.f32.mrb[0].mxu0
        %v894 = vadd.f32 0.0, %v893
        %v895 = vpop.f32.mrb[0].mxu0
        %v896 = vpop.f32.mrb[0].mxu0
        %v897 = vpop.f32.mrb[0].mxu0
        %898 = vdwg.mxu0
        %v899 = vsel %vm659, %v894, -inf
        %900 = vmax.xlane.f32.xlu0 %v899
        %v901 = vpop.xlane.xlu0 %900
        %v902 = vsub.f32 %v894, %v901
        %v903 = vmul.f32 %v902, 1.442695
        %v904 = vpow.pop %v903
        %v905 = vsel %vm659, %v904, 0.0
        %906 = vadd.xlane.f32.xlu0 %v905
        %v907 = vpop.xlane.xlu0 %906
        %v908 = vpack.c.bf16 %v904, %v904
        %s909 = scalar_lea.vmem %s607, 16
        %v910 = vld [vmem:[%s909] sm:$0xf]
        %v911 = vld [vmem:[%s909 + $0x4] sm:$0xf]
        %v914 = vunpack.c.l.b16 %v910
        %v915 = vunpack.c.l.b16 %v911
        %v916 = vpack.c.b16 %v915, %v914
        %v919 = vsel %vm659, %v908, 0
        %921 = vmatprep.subr.bf16.mxu0 0
        %922 = vmatpush1.bf16.msra.mxu0 %v916
        %923 = vmatprep.subr.bf16.mxu0 0
        %924 = vmatpush1.bf16.msra.mxu0 0
        %925 = vmatprep.subr.bf16.mxu0 0
        %926 = vmatpush1.bf16.msra.mxu0 0
        %927 = vmatprep.subr.bf16.mxu0 0
        %928 = vmatpush1.bf16.msra.mxu0 0
        %929 = vmatprep.subr.bf16.mxu0 0
        %930 = vmatpush1.bf16.msra.mxu0 0
        %931 = vmatprep.subr.bf16.mxu0 0
        %932 = vmatpush1.bf16.msra.mxu0 0
        %933 = vmatprep.subr.bf16.mxu0 0
        %934 = vmatpush1.bf16.msra.mxu0 0
        %935 = vmatprep.subr.bf16.mxu0 0
        %936 = vmatpush1.bf16.msra.mxu0 0
        %937 = vmatprep.subr.bf16.mxu0 0
        %938 = vmatpush1.bf16.msra.mxu0 0
        %939 = vmatprep.subr.bf16.mxu0 0
        %940 = vmatpush1.bf16.msra.mxu0 0
        %941 = vmatprep.subr.bf16.mxu0 0
        %942 = vmatpush1.bf16.msra.mxu0 0
        %943 = vmatprep.subr.bf16.mxu0 0
        %944 = vmatpush1.bf16.msra.mxu0 0
        %945 = vmatprep.subr.bf16.mxu0 0
        %946 = vmatpush1.bf16.msra.mxu0 0
        %947 = vmatprep.subr.bf16.mxu0 0
        %948 = vmatpush1.bf16.msra.mxu0 0
        %949 = vmatprep.subr.bf16.mxu0 0
        %950 = vmatpush1.bf16.msra.mxu0 0
        %951 = vmatprep.subr.bf16.mxu0 0
        %952 = vmatpush1.bf16.msra.mxu0 0
        %953 = vmatprep.mubr.bf16.mxu0 0
        %954 = vmatmul.mubr.bf16.gmra.mrb[0].mxu0 %v919
        %v955 = vpop.f32.mrb[0].mxu0
        %v956 = vadd.f32 0.0, %v955
        %v957 = vpop.f32.mrb[0].mxu0
        %v958 = vpop.f32.mrb[0].mxu0
        %v959 = vpop.f32.mrb[0].mxu0
        %960 = vdwg.mxu0
        %v961 = vrcp.pop %v907
        %v962 = vmul.f32 %v956, %v961
        %v963 = vpack.c.bf16 %v962, %v962
        %v965 = vunpack.c.l.b16 %v963
        %v966 = vpack.c.b16 %v965, %v965
        %967 = vrot.lane.b32.xlu0 %v966, 16
        %v968 = vpop.permute.xlu0 %967
        %vm970 = vcmask 191616
        %971 = vst.msk [vmem:[#allocation2] sm:$0xf] %vm970, %v968
        %s972 = scalar_lea.vmem %s529, 12 [#allocation3]
        %v973 = vld [vmem:[%s972] sm:$0xf]
        %s974 = scalar_lea.vmem %s602, 12
        %v975 = vld [vmem:[%s974] sm:$0xf]
        %v977 = vsel %vm611, %v973, 0
        %v980 = vsel %vm615, %v975, 0
        %982 = vmatprep.subr.bf16.mxu0 0
        %983 = vmatpush1.bf16.msra.mxu0 %v980
        %984 = vmatprep.subr.bf16.mxu0 0
        %985 = vmatpush1.bf16.msra.mxu0 0
        %986 = vmatprep.subr.bf16.mxu0 0
        %987 = vmatpush1.bf16.msra.mxu0 0
        %988 = vmatprep.subr.bf16.mxu0 0
        %989 = vmatpush1.bf16.msra.mxu0 0
        %990 = vmatprep.subr.bf16.mxu0 0
        %991 = vmatpush1.bf16.msra.mxu0 0
        %992 = vmatprep.subr.bf16.mxu0 0
        %993 = vmatpush1.bf16.msra.mxu0 0
        %994 = vmatprep.subr.bf16.mxu0 0
        %995 = vmatpush1.bf16.msra.mxu0 0
        %996 = vmatprep.subr.bf16.mxu0 0
        %997 = vmatpush1.bf16.msra.mxu0 0
        %998 = vmatprep.subr.bf16.mxu0 0
        %999 = vmatpush1.bf16.msra.mxu0 0
        %1000 = vmatprep.subr.bf16.mxu0 0
        %1001 = vmatpush1.bf16.msra.mxu0 0
        %1002 = vmatprep.subr.bf16.mxu0 0
        %1003 = vmatpush1.bf16.msra.mxu0 0
        %1004 = vmatprep.subr.bf16.mxu0 0
        %1005 = vmatpush1.bf16.msra.mxu0 0
        %1006 = vmatprep.subr.bf16.mxu0 0
        %1007 = vmatpush1.bf16.msra.mxu0 0
        %1008 = vmatprep.subr.bf16.mxu0 0
        %1009 = vmatpush1.bf16.msra.mxu0 0
        %1010 = vmatprep.subr.bf16.mxu0 0
        %1011 = vmatpush1.bf16.msra.mxu0 0
        %1012 = vmatprep.subr.bf16.mxu0 0
        %1013 = vmatpush1.bf16.msra.mxu0 0
        %1014 = vmatprep.mubr.bf16.mxu0 0
        %1015 = vmatmul.mubr.bf16.gmra.mrb[0].mxu0 %v977
        %v1016 = vpop.f32.mrb[0].mxu0
        %v1017 = vadd.f32 0.0, %v1016
        %v1018 = vpop.f32.mrb[0].mxu0
        %v1019 = vpop.f32.mrb[0].mxu0
        %v1020 = vpop.f32.mrb[0].mxu0
        %1021 = vdwg.mxu0
        %v1022 = vsel %vm659, %v1017, -inf
        %1023 = vmax.xlane.f32.xlu0 %v1022
        %v1024 = vpop.xlane.xlu0 %1023
        %v1025 = vsub.f32 %v1017, %v1024
        %v1026 = vmul.f32 %v1025, 1.442695
        %v1027 = vpow.pop %v1026
        %v1028 = vsel %vm659, %v1027, 0.0
        %1029 = vadd.xlane.f32.xlu0 %v1028
        %v1030 = vpop.xlane.xlu0 %1029
        %v1031 = vpack.c.bf16 %v1027, %v1027
        %s1032 = scalar_lea.vmem %s607, 24
        %v1033 = vld [vmem:[%s1032] sm:$0xf]
        %v1034 = vld [vmem:[%s1032 + $0x4] sm:$0xf]
        %v1037 = vunpack.c.l.b16 %v1033
        %v1038 = vunpack.c.l.b16 %v1034
        %v1039 = vpack.c.b16 %v1038, %v1037
        %v1042 = vsel %vm659, %v1031, 0
        %1044 = vmatprep.subr.bf16.mxu0 0
        %1045 = vmatpush1.bf16.msra.mxu0 %v1039
        %1046 = vmatprep.subr.bf16.mxu0 0
        %1047 = vmatpush1.bf16.msra.mxu0 0
        %1048 = vmatprep.subr.bf16.mxu0 0
        %1049 = vmatpush1.bf16.msra.mxu0 0
        %1050 = vmatprep.subr.bf16.mxu0 0
        %1051 = vmatpush1.bf16.msra.mxu0 0
        %1052 = vmatprep.subr.bf16.mxu0 0
        %1053 = vmatpush1.bf16.msra.mxu0 0
        %1054 = vmatprep.subr.bf16.mxu0 0
        %1055 = vmatpush1.bf16.msra.mxu0 0
        %1056 = vmatprep.subr.bf16.mxu0 0
        %1057 = vmatpush1.bf16.msra.mxu0 0
        %1058 = vmatprep.subr.bf16.mxu0 0
        %1059 = vmatpush1.bf16.msra.mxu0 0
        %1060 = vmatprep.subr.bf16.mxu0 0
        %1061 = vmatpush1.bf16.msra.mxu0 0
        %1062 = vmatprep.subr.bf16.mxu0 0
        %1063 = vmatpush1.bf16.msra.mxu0 0
        %1064 = vmatprep.subr.bf16.mxu0 0
        %1065 = vmatpush1.bf16.msra.mxu0 0
        %1066 = vmatprep.subr.bf16.mxu0 0
        %1067 = vmatpush1.bf16.msra.mxu0 0
        %1068 = vmatprep.subr.bf16.mxu0 0
        %1069 = vmatpush1.bf16.msra.mxu0 0
        %1070 = vmatprep.subr.bf16.mxu0 0
        %1071 = vmatpush1.bf16.msra.mxu0 0
        %1072 = vmatprep.subr.bf16.mxu0 0
        %1073 = vmatpush1.bf16.msra.mxu0 0
        %1074 = vmatprep.subr.bf16.mxu0 0
        %1075 = vmatpush1.bf16.msra.mxu0 0
        %1076 = vmatprep.mubr.bf16.mxu0 0
        %1077 = vmatmul.mubr.bf16.gmra.mrb[0].mxu0 %v1042
        %v1078 = vpop.f32.mrb[0].mxu0
        %v1079 = vadd.f32 0.0, %v1078
        %v1080 = vpop.f32.mrb[0].mxu0
        %v1081 = vpop.f32.mrb[0].mxu0
        %v1082 = vpop.f32.mrb[0].mxu0
        %1083 = vdwg.mxu0
        %v1084 = vrcp.pop %v1030
        %v1085 = vmul.f32 %v1079, %v1084
        %v1086 = vpack.c.bf16 %v1085, %v1085
        %v1088 = vunpack.c.l.b16 %v1086
        %v1089 = vpack.c.b16 %v1088, %v1088
        %1090 = vrot.lane.b32.xlu0 %v1089, 24
        %v1091 = vpop.permute.xlu0 %1090
        %vm1093 = vcmask 257216
        %1094 = vst.msk [vmem:[#allocation2] sm:$0xf] %vm1093, %v1091
        %v1095 = vld [vmem:[#allocation2] sm:$0xf]
        %v1096 = vld [vmem:[%s4] sm:$0xf]
        %v1097 = vld [vmem:[%s4 + $0x4] sm:$0xf]
        %v1098 = vld [vmem:[%s4 + $0x8] sm:$0xf]
        %v1099 = vld [vmem:[%s4 + $0xc] sm:$0xf]
        %v1100 = vld [vmem:[%s5] sm:$0x1]
        %v1102 = vlaneseq
        %v1103 = vshrl.u32 %v1102, 7
        %v1104 = vsub.s32 0, %v1103
        %v1105 = vrot.slane %v1100, %v1104
        %v1111 = vunpack.c.l.b16 %v1096
        %v1112 = vunpack.c.l.b16 %v1097
        %v1113 = vunpack.c.l.b16 %v1098
        %v1114 = vunpack.c.l.b16 %v1099
        %v1115 = vpack.c.b16 %v1112, %v1111
        %v1116 = vpack.c.b16 %v1114, %v1113
        %vm1119 = vcmask 261120
        %v1121 = vsel %vm1119, %v1095, 0
        %1123 = vmatprep.subr.bf16.mxu0 0
        %1124 = vmatpush1.bf16.msra.mxu0 %v1115
        %1125 = vmatprep.subr.bf16.mxu0 0
        %1126 = vmatpush1.bf16.msra.mxu0 %v1116
        %1127 = vmatprep.subr.bf16.mxu0 0
        %1128 = vmatpush1.bf16.msra.mxu0 0
        %1129 = vmatprep.subr.bf16.mxu0 0
        %1130 = vmatpush1.bf16.msra.mxu0 0
        %1131 = vmatprep.subr.bf16.mxu0 0
        %1132 = vmatpush1.bf16.msra.mxu0 0
        %1133 = vmatprep.subr.bf16.mxu0 0
        %1134 = vmatpush1.bf16.msra.mxu0 0
        %1135 = vmatprep.subr.bf16.mxu0 0
        %1136 = vmatpush1.bf16.msra.mxu0 0
        %1137 = vmatprep.subr.bf16.mxu0 0
        %1138 = vmatpush1.bf16.msra.mxu0 0
        %1139 = vmatprep.subr.bf16.mxu0 0
        %1140 = vmatpush1.bf16.msra.mxu0 0
        %1141 = vmatprep.subr.bf16.mxu0 0
        %1142 = vmatpush1.bf16.msra.mxu0 0
        %1143 = vmatprep.subr.bf16.mxu0 0
        %1144 = vmatpush1.bf16.msra.mxu0 0
        %1145 = vmatprep.subr.bf16.mxu0 0
        %1146 = vmatpush1.bf16.msra.mxu0 0
        %1147 = vmatprep.subr.bf16.mxu0 0
        %1148 = vmatpush1.bf16.msra.mxu0 0
        %1149 = vmatprep.subr.bf16.mxu0 0
        %1150 = vmatpush1.bf16.msra.mxu0 0
        %1151 = vmatprep.subr.bf16.mxu0 0
        %1152 = vmatpush1.bf16.msra.mxu0 0
        %1153 = vmatprep.subr.bf16.mxu0 0
        %1154 = vmatpush1.bf16.msra.mxu0 0
        %1155 = vmatprep.mubr.bf16.mxu0 0
        %1156 = vmatmul.mubr.bf16.gmra.mrb[0].mxu0 %v1121
        %v1157 = vpop.f32.mrb[0].mxu0
        %v1158 = vadd.f32 %v1105, %v1157
        %v1159 = vpop.f32.mrb[0].mxu0
        %v1160 = vpop.f32.mrb[0].mxu0
        %v1161 = vpop.f32.mrb[0].mxu0
        %1162 = vdwg.mxu0
        %v1163 = vld [vmem:[%s597] sm:$0xff]
        %v1164 = vadd.f32 %v1163, %v1158
        %v1165 = vld [vmem:[%s6] sm:$0x1]
        %v1166 = vld [vmem:[%s7] sm:$0x1]
        %v1167 = vsel %vm1119, %v1164, 0.0
        %1168 = vadd.xlane.f32.xlu0 %v1167
        %v1169 = vpop.xlane.xlu0 %1168
        %v1170 = vrcp.pop 32.0
        %v1171 = vmul.f32 %v1169, %v1170
        %v1172 = vsub.f32 %v1164, %v1171
        %v1173 = vmul.f32 %v1172, %v1172
        %v1174 = vsel %vm1119, %v1173, 0.0
        %1175 = vadd.xlane.f32.xlu0 %v1174
        %v1176 = vpop.xlane.xlu0 %1175
        %v1177 = vmul.f32 %v1176, %v1170
        %v1178 = vadd.f32 %v1177, 1e-06
        %v1179 = vrsqrt.pop %v1178
        %v1180 = vmul.f32 %v1172, %v1179
        %v1182 = vlaneseq
        %v1183 = vshrl.u32 %v1182, 7
        %v1184 = vsub.s32 0, %v1183
        %v1185 = vrot.slane %v1165, %v1184
        %v1187 = vmul.f32 %v1180, %v1185
        %v1189 = vlaneseq
        %v1190 = vshrl.u32 %v1189, 7
        %v1191 = vsub.s32 0, %v1190
        %v1192 = vrot.slane %v1166, %v1191
        %v1194 = vadd.f32 %v1187, %v1192
        %v1195 = vpack.c.bf16 %v1194, %v1194
        %v1196 = vld [vmem:[%s8] sm:$0xf]
        %v1197 = vld [vmem:[%s8 + $0x4] sm:$0xf]
        %v1198 = vld [vmem:[%s8 + $0x8] sm:$0xf]
        %v1199 = vld [vmem:[%s8 + $0xc] sm:$0xf]
        %v1200 = vld [vmem:[%s9] sm:$0x1]
        %v1202 = vlaneseq
        %v1203 = vshrl.u32 %v1202, 7
        %v1204 = vsub.s32 0, %v1203
        %v1205 = vrot.slane %v1200, %v1204
        %v1211 = vunpack.c.l.b16 %v1196
        %v1212 = vunpack.c.l.b16 %v1197
        %v1213 = vunpack.c.l.b16 %v1198
        %v1214 = vunpack.c.l.b16 %v1199
        %v1215 = vpack.c.b16 %v1212, %v1211
        %v1216 = vpack.c.b16 %v1214, %v1213
        %v1220 = vsel %vm1119, %v1195, 0
        %1222 = vmatprep.subr.bf16.mxu0 0
        %1223 = vmatpush1.bf16.msra.mxu0 %v1215
        %1224 = vmatprep.subr.bf16.mxu0 0
        %1225 = vmatpush1.bf16.msra.mxu0 %v1216
        %1226 = vmatprep.subr.bf16.mxu0 0
        %1227 = vmatpush1.bf16.msra.mxu0 0
        %1228 = vmatprep.subr.bf16.mxu0 0
        %1229 = vmatpush1.bf16.msra.mxu0 0
        %1230 = vmatprep.subr.bf16.mxu0 0
        %1231 = vmatpush1.bf16.msra.mxu0 0
        %1232 = vmatprep.subr.bf16.mxu0 0
        %1233 = vmatpush1.bf16.msra.mxu0 0
        %1234 = vmatprep.subr.bf16.mxu0 0
        %1235 = vmatpush1.bf16.msra.mxu0 0
        %1236 = vmatprep.subr.bf16.mxu0 0
        %1237 = vmatpush1.bf16.msra.mxu0 0
        %1238 = vmatprep.subr.bf16.mxu0 0
        %1239 = vmatpush1.bf16.msra.mxu0 0
        %1240 = vmatprep.subr.bf16.mxu0 0
        %1241 = vmatpush1.bf16.msra.mxu0 0
        %1242 = vmatprep.subr.bf16.mxu0 0
        %1243 = vmatpush1.bf16.msra.mxu0 0
        %1244 = vmatprep.subr.bf16.mxu0 0
        %1245 = vmatpush1.bf16.msra.mxu0 0
        %1246 = vmatprep.subr.bf16.mxu0 0
        %1247 = vmatpush1.bf16.msra.mxu0 0
        %1248 = vmatprep.subr.bf16.mxu0 0
        %1249 = vmatpush1.bf16.msra.mxu0 0
        %1250 = vmatprep.subr.bf16.mxu0 0
        %1251 = vmatpush1.bf16.msra.mxu0 0
        %1252 = vmatprep.subr.bf16.mxu0 0
        %1253 = vmatpush1.bf16.msra.mxu0 0
        %1254 = vmatprep.mubr.bf16.mxu0 0
        %1255 = vmatmul.mubr.bf16.gmra.mrb[0].mxu0 %v1220
        %v1256 = vpop.f32.mrb[0].mxu0
        %v1257 = vadd.f32 %v1205, %v1256
        %v1258 = vpop.f32.mrb[0].mxu0
        %v1259 = vpop.f32.mrb[0].mxu0
        %v1260 = vpop.f32.mrb[0].mxu0
        %1261 = vdwg.mxu0
        %v1262 = vmax.f32 %v1257, 0.0
        %v1263 = vpack.c.bf16 %v1262, %v1262
        %v1264 = vld [vmem:[%s10] sm:$0xf]
        %v1265 = vld [vmem:[%s10 + $0x4] sm:$0xf]
        %v1266 = vld [vmem:[%s10 + $0x8] sm:$0xf]
        %v1267 = vld [vmem:[%s10 + $0xc] sm:$0xf]
        %v1268 = vld [vmem:[%s10 + $0x10] sm:$0xf]
        %v1269 = vld [vmem:[%s10 + $0x14] sm:$0xf]
        %v1270 = vld [vmem:[%s10 + $0x18] sm:$0xf]
        %v1271 = vld [vmem:[%s10 + $0x1c] sm:$0xf]
        %v1272 = vld [vmem:[%s11] sm:$0x1]
        %v1274 = vlaneseq
        %v1275 = vshrl.u32 %v1274, 7
        %v1276 = vsub.s32 0, %v1275
        %v1277 = vrot.slane %v1272, %v1276
        %v1287 = vunpack.c.l.b16 %v1264
        %v1288 = vunpack.c.l.b16 %v1265
        %v1289 = vunpack.c.l.b16 %v1266
        %v1290 = vunpack.c.l.b16 %v1267
        %v1291 = vunpack.c.l.b16 %v1268
        %v1292 = vunpack.c.l.b16 %v1269
        %v1293 = vunpack.c.l.b16 %v1270
        %v1294 = vunpack.c.l.b16 %v1271
        %v1295 = vpack.c.b16 %v1288, %v1287
        %v1296 = vpack.c.b16 %v1290, %v1289
        %v1297 = vpack.c.b16 %v1292, %v1291
        %v1298 = vpack.c.b16 %v1294, %v1293
        %vm1303 = vcmask 523264
        %v1305 = vsel %vm1303, %v1263, 0
        %1307 = vmatprep.subr.bf16.mxu0 0
        %1308 = vmatpush1.bf16.msra.mxu0 %v1295
        %1309 = vmatprep.subr.bf16.mxu0 0
        %1310 = vmatpush1.bf16.msra.mxu0 %v1296
        %1311 = vmatprep.subr.bf16.mxu0 0
        %1312 = vmatpush1.bf16.msra.mxu0 %v1297
        %1313 = vmatprep.subr.bf16.mxu0 0
        %1314 = vmatpush1.bf16.msra.mxu0 %v1298
        %1315 = vmatprep.subr.bf16.mxu0 0
        %1316 = vmatpush1.bf16.msra.mxu0 0
        %1317 = vmatprep.subr.bf16.mxu0 0
        %1318 = vmatpush1.bf16.msra.mxu0 0
        %1319 = vmatprep.subr.bf16.mxu0 0
        %1320 = vmatpush1.bf16.msra.mxu0 0
        %1321 = vmatprep.subr.bf16.mxu0 0
        %1322 = vmatpush1.bf16.msra.mxu0 0
        %1323 = vmatprep.subr.bf16.mxu0 0
        %1324 = vmatpush1.bf16.msra.mxu0 0
        %1325 = vmatprep.subr.bf16.mxu0 0
        %1326 = vmatpush1.bf16.msra.mxu0 0
        %1327 = vmatprep.subr.bf16.mxu0 0
        %1328 = vmatpush1.bf16.msra.mxu0 0
        %1329 = vmatprep.subr.bf16.mxu0 0
        %1330 = vmatpush1.bf16.msra.mxu0 0
        %1331 = vmatprep.subr.bf16.mxu0 0
        %1332 = vmatpush1.bf16.msra.mxu0 0
        %1333 = vmatprep.subr.bf16.mxu0 0
        %1334 = vmatpush1.bf16.msra.mxu0 0
        %1335 = vmatprep.subr.bf16.mxu0 0
        %1336 = vmatpush1.bf16.msra.mxu0 0
        %1337 = vmatprep.subr.bf16.mxu0 0
        %1338 = vmatpush1.bf16.msra.mxu0 0
        %1339 = vmatprep.mubr.bf16.mxu0 0
        %1340 = vmatmul.mubr.bf16.gmra.mrb[0].mxu0 %v1305
        %v1341 = vpop.f32.mrb[0].mxu0
        %v1342 = vadd.f32 %v1277, %v1341
        %v1343 = vpop.f32.mrb[0].mxu0
        %v1344 = vpop.f32.mrb[0].mxu0
        %v1345 = vpop.f32.mrb[0].mxu0
        %1346 = vdwg.mxu0
        %v1347 = vadd.f32 %v1194, %v1342
        %v1348 = vld [vmem:[%s12] sm:$0x1]
        %v1349 = vld [vmem:[%s13] sm:$0x1]
        %v1350 = vsel %vm1119, %v1347, 0.0
        %1351 = vadd.xlane.f32.xlu0 %v1350
        %v1352 = vpop.xlane.xlu0 %1351
        %v1353 = vmul.f32 %v1352, %v1170
        %v1354 = vsub.f32 %v1347, %v1353
        %v1355 = vmul.f32 %v1354, %v1354
        %v1356 = vsel %vm1119, %v1355, 0.0
        %1357 = vadd.xlane.f32.xlu0 %v1356
        %v1358 = vpop.xlane.xlu0 %1357
        %v1359 = vmul.f32 %v1358, %v1170
        %v1360 = vadd.f32 %v1359, 1e-06
        %v1361 = vrsqrt.pop %v1360
        %v1362 = vmul.f32 %v1354, %v1361
        %v1364 = vlaneseq
        %v1365 = vshrl.u32 %v1364, 7
        %v1366 = vsub.s32 0, %v1365
        %v1367 = vrot.slane %v1348, %v1366
        %v1369 = vmul.f32 %v1362, %v1367
        %v1371 = vlaneseq
        %v1372 = vshrl.u32 %v1371, 7
        %v1373 = vsub.s32 0, %v1372
        %v1374 = vrot.slane %v1349, %v1373
        %v1376 = vadd.f32 %v1369, %v1374
        %1377 = vst.msk [vmem:[%s589] sm:$0xff] %vm1119, %v1376
        %s1378 = sand.u32 %s368, 1
        %s1379 = scalar_lea.sflag [#allocation5], %s1378
        %s1380 = sand.u32 %s368, 1
        %s1381 = smul.addr %s1380, 8
        %s1382 = scalar_lea.vmem [#allocation4], %s1381
        // Predicated region
        $region118: #{tpu_custom_call.1} parent=112 // pred_check
          %p1383 = pneg %p378
        $region119: #{tpu_custom_call.1} parent=112 // pred_check_branch
          %1385 = sbr.rel (%p1383) target = $region121
        $region120: #{tpu_custom_call.1} parent=112 // pred_region
          %s1387 = ssub.s32 128, 128
          %1388 = vsyncadd %s1379, %s1387
          %s1389 = smul.addr %s32, 2
          %s1390 = sadd.s32 %s33, %s1389
          %s1391 = smul.addr %s1390, 128
          %s1392 = scalar_lea.hbm %s14, %s1391
          %s1394 = sshll.u32 %s1382, 4
          %s1395 = int_to_ptr.vmem [resolvable:$true] %s1394
          %1397 = dma.vmem_to_hbm [thread:$0]  %s1395, 128, %s1392, %s1379
        $region121: #{tpu_custom_call.1} parent=112 // pred_fallthru
          _
      $region113: #{tpu_custom_call.1} parent=5 // pred_fallthru
        _
      %p1398 = scmp.le.s32.totalorder 2, %s23
      // Predicated region
      $region122: #{tpu_custom_call.1} parent=5 // pred_check
        %p1399 = pneg %p1398
      $region123: #{tpu_custom_call.1} parent=5 // pred_check_branch
        %1401 = sbr.rel (%p1399) target = $region125
      $region124: #{tpu_custom_call.1} parent=5 // pred_region
        %s1402 = ssub.s32 %s23, 2
        // Predicated region
        $region126: #{tpu_custom_call.1} parent=124 // pred_check
          %p1403 = pneg %p384
        $region127: #{tpu_custom_call.1} parent=124 // pred_check_branch
          %1405 = sbr.rel (%p1403) target = $region129
        $region128: #{tpu_custom_call.1} parent=124 // pred_region
          %s1406 = sand.u32 %s369, 1
          %s1407 = scalar_lea.sflag [#allocation5], %s1406
          %s1408 = sand.u32 %s369, 1
          %s1409 = smul.addr %s1408, 8
          %s1410 = scalar_lea.vmem [#allocation4], %s1409
          %1411 = dma.done %s1407, 128
        $region129: #{tpu_custom_call.1} parent=124 // pred_fallthru
          _
      $region125: #{tpu_custom_call.1} parent=5 // pred_fallthru
        _
    $region6: #{tpu_custom_call.1} parent=1 // loop_footer
      %s27 = sadd.s32 1, %s23
    $region7: #{tpu_custom_call.1} parent=1 // loop_footer_branch
      %22 = sbr.rel target = $region3
    $region8: #{tpu_custom_call.1} parent=1 // loop_exit
      _
    %1412 = vsyncpa [#allocation5], 1
    %s1413 = scalar_lea.sflag [#allocation5], 1
    %1414 = vsyncpa %s1413, 1

// kernel: tpu_custom_call.1
$region0: #{tpu_custom_call.1}
  #allocation0 [shape = 'u32[]', space=smem, size = 0x4, offset = 0x4, fixed_abs, tag = 'smem constant byte address 0x4 - core index']
  #allocation1 [shape = 'u32[144,128]{1,0:T(1,128)}', space=vmem, size = 0x12000, scoped, tag = 'internal scratch']
  #allocation2 [shape = 'bf16[8,32]{1,0:T(8,128)(2,1)}', space=vmem, size = 0x800, scoped, tag = 'scratch operand']
  %s0 = inlined_call_operand.vmem [shape: f32[2,16,32], index: 0, kind: input, shape index: {}]
  %s1 = inlined_call_operand.vmem [shape: bf16[2,4,16,8], index: 1, kind: input, shape index: {}]
  %s2 = inlined_call_operand.vmem [shape: bf16[2,4,8,16], index: 2, kind: input, shape index: {}]
  %s3 = inlined_call_operand.vmem [shape: bf16[2,4,16,8], index: 3, kind: input, shape index: {}]
  %s4 = inlined_call_operand.vmem [shape: bf16[32,32], index: 4, kind: input, shape index: {}]
  %s5 = inlined_call_operand.vmem [shape: f32[1,32], index: 5, kind: input, shape index: {}]
  %s6 = inlined_call_operand.vmem [shape: f32[1,32], index: 6, kind: input, shape index: {}]
  %s7 = inlined_call_operand.vmem [shape: f32[1,32], index: 7, kind: input, shape index: {}]
  %s8 = inlined_call_operand.vmem [shape: bf16[32,64], index: 8, kind: input, shape index: {}]
  %s9 = inlined_call_operand.vmem [shape: f32[1,64], index: 9, kind: input, shape index: {}]
  %s10 = inlined_call_operand.vmem [shape: bf16[64,32], index: 10, kind: input, shape index: {}]
  %s11 = inlined_call_operand.vmem [shape: f32[1,32], index: 11, kind: input, shape index: {}]
  %s12 = inlined_call_operand.vmem [shape: f32[1,32], index: 12, kind: input, shape index: {}]
  %s13 = inlined_call_operand.vmem [shape: f32[1,32], index: 13, kind: input, shape index: {}]
  %s14 = inlined_call_operand.hbm [shape: f32[2,16,32], index: 14, kind: output, shape index: {}]
  %s15 = sld [smem:[#allocation0]]
  $region130: #{tpu_custom_call.1} parent=0
    _
  %s17 = ssub.s32 1, %s15
  %s18 = scalar_select 0, %s17, %s15
  $region1: #{tpu_custom_call.1} parent=0
    #allocation3 [shape = 'u8[16384]{0}', space=vmem, size = 0x4000, scoped, tag = 'input window, operand 1']
    #allocation4 [shape = 'u8[8192]{0}', space=vmem, size = 0x2000, scoped, tag = 'output window, operand 0']
    #allocation5 [shape = 's32[2]{0}', space=sflag, size = 0x8, scoped, tag = 'scoped memory for tpu_custom_call.1']
    %19 = vsyncpa [#allocation5], 0
    %s20 = scalar_lea.sflag [#allocation5], 1
    %21 = vsyncpa %s20, 0
    loop: start=0, step=1, limit=6
    $region2: #{tpu_custom_call.1} parent=1 // loop_pre_header
      _
    $region3: #{tpu_custom_call.1} parent=1 // loop_header
      %s23 = sphi 0, %s27
      %p24 = scmp.ge.s32.totalorder %s23, 6
      %s30 = sphi 0, %s42
      %s31 = sphi 0, %s38
      %s32 = sphi 0, %s30
      %s33 = sphi 0, %s31
      %s34 = sphi 0, %s32
      %s35 = sphi 0, %s33
      %s47 = sphi 0, %s49
      %s50 = sphi 0, %s47
      %s51 = sphi 0, %s50
      %s67 = sphi 0, %s51
      %s75 = sphi 0, %s77
      %s78 = sphi 0, %s75
      %s79 = sphi 0, %s78
      %s95 = sphi 0, %s79
      %s101 = sphi 0, %s103
      %s104 = sphi 0, %s101
      %s105 = sphi 0, %s104
      %s121 = sphi 0, %s105
      %s127 = sphi 0, %s129
      %s130 = sphi 0, %s127
      %s131 = sphi 0, %s130
      %s147 = sphi 0, %s131
      %s151 = sphi 0, %s151
      %s153 = sphi 0, %s151
      %s154 = sphi 0, %s153
      %s168 = sphi 0, %s154
      %s172 = sphi 0, %s172
      %s174 = sphi 0, %s172
      %s175 = sphi 0, %s174
      %s189 = sphi 0, %s175
      %s193 = sphi 0, %s193
      %s195 = sphi 0, %s193
      %s196 = sphi 0, %s195
      %s210 = sphi 0, %s196
      %s214 = sphi 0, %s214
      %s216 = sphi 0, %s214
      %s217 = sphi 0, %s216
      %s231 = sphi 0, %s217
      %s235 = sphi 0, %s235
      %s237 = sphi 0, %s235
      %s238 = sphi 0, %s237
      %s252 = sphi 0, %s238
      %s256 = sphi 0, %s256
      %s258 = sphi 0, %s256
      %s259 = sphi 0, %s258
      %s273 = sphi 0, %s259
      %s277 = sphi 0, %s277
      %s279 = sphi 0, %s277
      %s280 = sphi 0, %s279
      %s294 = sphi 0, %s280
      %s298 = sphi 0, %s298
      %s300 = sphi 0, %s298
      %s301 = sphi 0, %s300
      %s315 = sphi 0, %s301
      %s319 = sphi 0, %s319
      %s321 = sphi 0, %s319
      %s322 = sphi 0, %s321
      %s336 = sphi 0, %s322
      %s340 = sphi 0, %s340
      %s342 = sphi 0, %s340
      %s343 = sphi 0, %s342
      %s357 = sphi 0, %s343
      %s365 = sphi 0, %s367
      %s368 = sphi 0, %s365
      %s369 = sphi 0, %s368
      %s385 = sphi 0, %s369
    $region4: #{tpu_custom_call.1} parent=1 // loop_header_branch
      %26 = sbr.rel (%p24) target = $region8
    $region5: #{tpu_custom_call.1} parent=1 // loop_body
      %s28 = ssub.s32 %s23, 1
      %s29 = ssub.s32 %s23, 2
      %s36 = sadd.s32 1, %s31
      %p37 = scmp.ge.s32.totalorder %s36, 2
      %s38 = scalar_select %p37, 0, %s36
      %s39 = sadd.s32 1, %s30
      %s40 = scalar_select %p37, %s39, %s30
      %p41 = scmp.ge.s32.totalorder %s40, 2
      %s42 = scalar_select %p41, 0, %s40
      %s43 = ssub.s32 %s30, %s42
      %s44 = ssub.s32 %s31, %s38
      %s45 = sor.u32 %s43, %s44
      %p46 = scmp.eq.s32.totalorder %s45, 0
      %s48 = sadd.s32 %s47, 1
      %s49 = scalar_select %p46, %s47, %s48
      %p52 = pneg %p46
      %p53 = scmp.eq.s32.totalorder %s23, 3
      %p54 = por %p52, %p53
      %p55 = scmp.ne.s32.totalorder %s47, %s50
      %p56 = scmp.eq.s32.totalorder %s23, 0
      %p57 = por %p55, %p56
      %p58 = scmp.ne.s32.totalorder %s47, %s50
      %p59 = scmp.eq.s32.totalorder %s28, 3
      %p60 = por %p58, %p59
      %p61 = scmp.ne.s32.totalorder %s50, %s51
      %p62 = scmp.eq.s32.totalorder %s28, 0
      %p63 = por %p61, %p62
      %p64 = scmp.ne.s32.totalorder %s50, %s51
      %p65 = scmp.eq.s32.totalorder %s29, 3
      %p66 = por %p64, %p65
      %p68 = scmp.ne.s32.totalorder %s51, %s67
      %p69 = scmp.eq.s32.totalorder %s29, 0
      %p70 = por %p68, %p69
      %s71 = ssub.s32 %s30, %s42
      %s72 = ssub.s32 %s31, %s38
      %s73 = sor.u32 %s71, %s72
      %p74 = scmp.eq.s32.totalorder %s73, 0
      %s76 = sadd.s32 %s75, 1
      %s77 = scalar_select %p74, %s75, %s76
      %p80 = pneg %p74
      %p81 = scmp.eq.s32.totalorder %s23, 3
      %p82 = por %p80, %p81
      %p83 = scmp.ne.s32.totalorder %s75, %s78
      %p84 = scmp.eq.s32.totalorder %s23, 0
      %p85 = por %p83, %p84
      %p86 = scmp.ne.s32.totalorder %s75, %s78
      %p87 = scmp.eq.s32.totalorder %s28, 3
      %p88 = por %p86, %p87
      %p89 = scmp.ne.s32.totalorder %s78, %s79
      %p90 = scmp.eq.s32.totalorder %s28, 0
      %p91 = por %p89, %p90
      %p92 = scmp.ne.s32.totalorder %s78, %s79
      %p93 = scmp.eq.s32.totalorder %s29, 3
      %p94 = por %p92, %p93
      %p96 = scmp.ne.s32.totalorder %s79, %s95
      %p97 = scmp.eq.s32.totalorder %s29, 0
      %p98 = por %p96, %p97
      %s99 = ssub.s32 %s30, %s42
      %p100 = scmp.eq.s32.totalorder %s99, 0
      %s102 = sadd.s32 %s101, 1
      %s103 = scalar_select %p100, %s101, %s102
      %p106 = pneg %p100
      %p107 = scmp.eq.s32.totalorder %s23, 3
      %p108 = por %p106, %p107
      %p109 = scmp.ne.s32.totalorder %s101, %s104
      %p110 = scmp.eq.s32.totalorder %s23, 0
      %p111 = por %p109, %p110
      %p112 = scmp.ne.s32.totalorder %s101, %s104
      %p113 = scmp.eq.s32.totalorder %s28, 3
      %p114 = por %p112, %p113
      %p115 = scmp.ne.s32.totalorder %s104, %s105
      %p116 = scmp.eq.s32.totalorder %s28, 0
      %p117 = por %p115, %p116
      %p118 = scmp.ne.s32.totalorder %s104, %s105
      %p119 = scmp.eq.s32.totalorder %s29, 3
      %p120 = por %p118, %p119
      %p122 = scmp.ne.s32.totalorder %s105, %s121
      %p123 = scmp.eq.s32.totalorder %s29, 0
      %p124 = por %p122, %p123
      %s125 = ssub.s32 %s30, %s42
      %p126 = scmp.eq.s32.totalorder %s125, 0
      %s128 = sadd.s32 %s127, 1
      %s129 = scalar_select %p126, %s127, %s128
      %p132 = pneg %p126
      %p133 = scmp.eq.s32.totalorder %s23, 3
      %p134 = por %p132, %p133
      %p135 = scmp.ne.s32.totalorder %s127, %s130
      %p136 = scmp.eq.s32.totalorder %s23, 0
      %p137 = por %p135, %p136
      %p138 = scmp.ne.s32.totalorder %s127, %s130
      %p139 = scmp.eq.s32.totalorder %s28, 3
      %p140 = por %p138, %p139
      %p141 = scmp.ne.s32.totalorder %s130, %s131
      %p142 = scmp.eq.s32.totalorder %s28, 0
      %p143 = por %p141, %p142
      %p144 = scmp.ne.s32.totalorder %s130, %s131
      %p145 = scmp.eq.s32.totalorder %s29, 3
      %p146 = por %p144, %p145
      %p148 = scmp.ne.s32.totalorder %s131, %s147
      %p149 = scmp.eq.s32.totalorder %s29, 0
      %p150 = por %p148, %p149
      %s152 = sadd.s32 %s151, 1
      %p155 = scmp.eq.s32.totalorder %s23, 3
      %p156 = scmp.ne.s32.totalorder %s151, %s153
      %p157 = scmp.eq.s32.totalorder %s23, 0
      %p158 = por %p156, %p157
      %p159 = scmp.ne.s32.totalorder %s151, %s153
      %p160 = scmp.eq.s32.totalorder %s28, 3
      %p161 = por %p159, %p160
      %p162 = scmp.ne.s32.totalorder %s153, %s154
      %p163 = scmp.eq.s32.totalorder %s28, 0
      %p164 = por %p162, %p163
      %p165 = scmp.ne.s32.totalorder %s153, %s154
      %p166 = scmp.eq.s32.totalorder %s29, 3
      %p167 = por %p165, %p166
      %p169 = scmp.ne.s32.totalorder %s154, %s168
      %p170 = scmp.eq.s32.totalorder %s29, 0
      %p171 = por %p169, %p170
      %s173 = sadd.s32 %s172, 1
      %p176 = scmp.eq.s32.totalorder %s23, 3
      %p177 = scmp.ne.s32.totalorder %s172, %s174
      %p178 = scmp.eq.s32.totalorder %s23, 0
      %p179 = por %p177, %p178
      %p180 = scmp.ne.s32.totalorder %s172, %s174
      %p181 = scmp.eq.s32.totalorder %s28, 3
      %p182 = por %p180, %p181
      %p183 = scmp.ne.s32.totalorder %s174, %s175
      %p184 = scmp.eq.s32.totalorder %s28, 0
      %p185 = por %p183, %p184
      %p186 = scmp.ne.s32.totalorder %s174, %s175
      %p187 = scmp.eq.s32.totalorder %s29, 3
      %p188 = por %p186, %p187
      %p190 = scmp.ne.s32.totalorder %s175, %s189
      %p191 = scmp.eq.s32.totalorder %s29, 0
      %p192 = por %p190, %p191
      %s194 = sadd.s32 %s193, 1
      %p197 = scmp.eq.s32.totalorder %s23, 3
      %p198 = scmp.ne.s32.totalorder %s193, %s195
      %p199 = scmp.eq.s32.totalorder %s23, 0
      %p200 = por %p198, %p199
      %p201 = scmp.ne.s32.totalorder %s193, %s195
      %p202 = scmp.eq.s32.totalorder %s28, 3
      %p203 = por %p201, %p202
      %p204 = scmp.ne.s32.totalorder %s195, %s196
      %p205 = scmp.eq.s32.totalorder %s28, 0
      %p206 = por %p204, %p205
      %p207 = scmp.ne.s32.totalorder %s195, %s196
      %p208 = scmp.eq.s32.totalorder %s29, 3
      %p209 = por %p207, %p208
      %p211 = scmp.ne.s32.totalorder %s196, %s210
      %p212 = scmp.eq.s32.totalorder %s29, 0
      %p213 = por %p211, %p212
      %s215 = sadd.s32 %s214, 1
      %p218 = scmp.eq.s32.totalorder %s23, 3
      %p219 = scmp.ne.s32.totalorder %s214, %s216
      %p220 = scmp.eq.s32.totalorder %s23, 0
      %p221 = por %p219, %p220
      %p222 = scmp.ne.s32.totalorder %s214, %s216
      %p223 = scmp.eq.s32.totalorder %s28, 3
      %p224 = por %p222, %p223
      %p225 = scmp.ne.s32.totalorder %s216, %s217
      %p226 = scmp.eq.s32.totalorder %s28, 0
      %p227 = por %p225, %p226
      %p228 = scmp.ne.s32.totalorder %s216, %s217
      %p229 = scmp.eq.s32.totalorder %s29, 3
      %p230 = por %p228, %p229
      %p232 = scmp.ne.s32.totalorder %s217, %s231
      %p233 = scmp.eq.s32.totalorder %s29, 0
      %p234 = por %p232, %p233
      %s236 = sadd.s32 %s235, 1
      %p239 = scmp.eq.s32.totalorder %s23, 3
      %p240 = scmp.ne.s32.totalorder %s235, %s237
      %p241 = scmp.eq.s32.totalorder %s23, 0
      %p242 = por %p240, %p241
      %p243 = scmp.ne.s32.totalorder %s235, %s237
      %p244 = scmp.eq.s32.totalorder %s28, 3
      %p245 = por %p243, %p244
      %p246 = scmp.ne.s32.totalorder %s237, %s238
      %p247 = scmp.eq.s32.totalorder %s28, 0
      %p248 = por %p246, %p247
      %p249 = scmp.ne.s32.totalorder %s237, %s238
      %p250 = scmp.eq.s32.totalorder %s29, 3
      %p251 = por %p249, %p250
      %p253 = scmp.ne.s32.totalorder %s238, %s252
      %p254 = scmp.eq.s32.totalorder %s29, 0
      %p255 = por %p253, %p254
      %s257 = sadd.s32 %s256, 1
      %p260 = scmp.eq.s32.totalorder %s23, 3
      %p261 = scmp.ne.s32.totalorder %s256, %s258
      %p262 = scmp.eq.s32.totalorder %s23, 0
      %p263 = por %p261, %p262
      %p264 = scmp.ne.s32.totalorder %s256, %s258
      %p265 = scmp.eq.s32.totalorder %s28, 3
      %p266 = por %p264, %p265
      %p267 = scmp.ne.s32.totalorder %s258, %s259
      %p268 = scmp.eq.s32.totalorder %s28, 0
      %p269 = por %p267, %p268
      %p270 = scmp.ne.s32.totalorder %s258, %s259
      %p271 = scmp.eq.s32.totalorder %s29, 3
      %p272 = por %p270, %p271
      %p274 = scmp.ne.s32.totalorder %s259, %s273
      %p275 = scmp.eq.s32.totalorder %s29, 0
      %p276 = por %p274, %p275
      %s278 = sadd.s32 %s277, 1
      %p281 = scmp.eq.s32.totalorder %s23, 3
      %p282 = scmp.ne.s32.totalorder %s277, %s279
      %p283 = scmp.eq.s32.totalorder %s23, 0
      %p284 = por %p282, %p283
      %p285 = scmp.ne.s32.totalorder %s277, %s279
      %p286 = scmp.eq.s32.totalorder %s28, 3
      %p287 = por %p285, %p286
      %p288 = scmp.ne.s32.totalorder %s279, %s280
      %p289 = scmp.eq.s32.totalorder %s28, 0
      %p290 = por %p288, %p289
      %p291 = scmp.ne.s32.totalorder %s279, %s280
      %p292 = scmp.eq.s32.totalorder %s29, 3
      %p293 = por %p291, %p292
      %p295 = scmp.ne.s32.totalorder %s280, %s294
      %p296 = scmp.eq.s32.totalorder %s29, 0
      %p297 = por %p295, %p296
      %s299 = sadd.s32 %s298, 1
      %p302 = scmp.eq.s32.totalorder %s23, 3
      %p303 = scmp.ne.s32.totalorder %s298, %s300
      %p304 = scmp.eq.s32.totalorder %s23, 0
      %p305 = por %p303, %p304
      %p306 = scmp.ne.s32.totalorder %s298, %s300
      %p307 = scmp.eq.s32.totalorder %s28, 3
      %p308 = por %p306, %p307
      %p309 = scmp.ne.s32.totalorder %s300, %s301
      %p310 = scmp.eq.s32.totalorder %s28, 0
      %p311 = por %p309, %p310
      %p312 = scmp.ne.s32.totalorder %s300, %s301
      %p313 = scmp.eq.s32.totalorder %s29, 3
      %p314 = por %p312, %p313
      %p316 = scmp.ne.s32.totalorder %s301, %s315
      %p317 = scmp.eq.s32.totalorder %s29, 0
      %p318 = por %p316, %p317
      %s320 = sadd.s32 %s319, 1
      %p323 = scmp.eq.s32.totalorder %s23, 3
      %p324 = scmp.ne.s32.totalorder %s319, %s321
      %p325 = scmp.eq.s32.totalorder %s23, 0
      %p326 = por %p324, %p325
      %p327 = scmp.ne.s32.totalorder %s319, %s321
      %p328 = scmp.eq.s32.totalorder %s28, 3
      %p329 = por %p327, %p328
      %p330 = scmp.ne.s32.totalorder %s321, %s322
      %p331 = scmp.eq.s32.totalorder %s28, 0
      %p332 = por %p330, %p331
      %p333 = scmp.ne.s32.totalorder %s321, %s322
      %p334 = scmp.eq.s32.totalorder %s29, 3
      %p335 = por %p333, %p334
      %p337 = scmp.ne.s32.totalorder %s322, %s336
      %p338 = scmp.eq.s32.totalorder %s29, 0
      %p339 = por %p337, %p338
      %s341 = sadd.s32 %s340, 1
      %p344 = scmp.eq.s32.totalorder %s23, 3
      %p345 = scmp.ne.s32.totalorder %s340, %s342
      %p346 = scmp.eq.s32.totalorder %s23, 0
      %p347 = por %p345, %p346
      %p348 = scmp.ne.s32.totalorder %s340, %s342
      %p349 = scmp.eq.s32.totalorder %s28, 3
      %p350 = por %p348, %p349
      %p351 = scmp.ne.s32.totalorder %s342, %s343
      %p352 = scmp.eq.s32.totalorder %s28, 0
      %p353 = por %p351, %p352
      %p354 = scmp.ne.s32.totalorder %s342, %s343
      %p355 = scmp.eq.s32.totalorder %s29, 3
      %p356 = por %p354, %p355
      %p358 = scmp.ne.s32.totalorder %s343, %s357
      %p359 = scmp.eq.s32.totalorder %s29, 0
      %p360 = por %p358, %p359
      %s361 = ssub.s32 %s30, %s42
      %s362 = ssub.s32 %s31, %s38
      %s363 = sor.u32 %s361, %s362
      %p364 = scmp.eq.s32.totalorder %s363, 0
      %s366 = sadd.s32 %s365, 1
      %s367 = scalar_select %p364, %s365, %s366
      %p370 = pneg %p364
      %p371 = scmp.eq.s32.totalorder %s23, 3
      %p372 = por %p370, %p371
      %p373 = scmp.ne.s32.totalorder %s365, %s368
      %p374 = scmp.eq.s32.totalorder %s23, 0
      %p375 = por %p373, %p374
      %p376 = scmp.ne.s32.totalorder %s365, %s368
      %p377 = scmp.eq.s32.totalorder %s28, 3
      %p378 = por %p376, %p377
      %p379 = scmp.ne.s32.totalorder %s368, %s369
      %p380 = scmp.eq.s32.totalorder %s28, 0
      %p381 = por %p379, %p380
      %p382 = scmp.ne.s32.totalorder %s368, %s369
      %p383 = scmp.eq.s32.totalorder %s29, 3
      %p384 = por %p382, %p383
      %p386 = scmp.ne.s32.totalorder %s369, %s385
      %p387 = scmp.eq.s32.totalorder %s29, 0
      %p388 = por %p386, %p387
      %p389 = scmp.le.s32.totalorder 1, %s23
      %p390 = scmp.lt.s32.totalorder %s23, 5
      %p391 = pnand %p389, %p390
      %p392 = pneg %p391
      // Predicated region
      $region9: #{tpu_custom_call.1} parent=5 // pred_check
        _
      $region10: #{tpu_custom_call.1} parent=5 // pred_check_branch
        %394 = sbr.rel (%p391) target = $region12
      $region11: #{tpu_custom_call.1} parent=5 // pred_region
        %s395 = ssub.s32 %s23, 1
        // Predicated region
        $region13: #{tpu_custom_call.1} parent=11 // pred_check
          %p396 = pneg %p164
        $region14: #{tpu_custom_call.1} parent=11 // pred_check_branch
          %398 = sbr.rel (%p396) target = $region16
        $region15: #{tpu_custom_call.1} parent=11 // pred_region
          _
        $region16: #{tpu_custom_call.1} parent=11 // pred_fallthru
          _
        // Predicated region
        $region17: #{tpu_custom_call.1} parent=11 // pred_check
          %p399 = pneg %p185
        $region18: #{tpu_custom_call.1} parent=11 // pred_check_branch
          %401 = sbr.rel (%p399) target = $region20
        $region19: #{tpu_custom_call.1} parent=11 // pred_region
          _
        $region20: #{tpu_custom_call.1} parent=11 // pred_fallthru
          _
        // Predicated region
        $region21: #{tpu_custom_call.1} parent=11 // pred_check
          %p402 = pneg %p206
        $region22: #{tpu_custom_call.1} parent=11 // pred_check_branch
          %404 = sbr.rel (%p402) target = $region24
        $region23: #{tpu_custom_call.1} parent=11 // pred_region
          _
        $region24: #{tpu_custom_call.1} parent=11 // pred_fallthru
          _
        // Predicated region
        $region25: #{tpu_custom_call.1} parent=11 // pred_check
          %p405 = pneg %p227
        $region26: #{tpu_custom_call.1} parent=11 // pred_check_branch
          %407 = sbr.rel (%p405) target = $region28
        $region27: #{tpu_custom_call.1} parent=11 // pred_region
          _
        $region28: #{tpu_custom_call.1} parent=11 // pred_fallthru
          _
        // Predicated region
        $region29: #{tpu_custom_call.1} parent=11 // pred_check
          %p408 = pneg %p248
        $region30: #{tpu_custom_call.1} parent=11 // pred_check_branch
          %410 = sbr.rel (%p408) target = $region32
        $region31: #{tpu_custom_call.1} parent=11 // pred_region
          _
        $region32: #{tpu_custom_call.1} parent=11 // pred_fallthru
          _
        // Predicated region
        $region33: #{tpu_custom_call.1} parent=11 // pred_check
          %p411 = pneg %p269
        $region34: #{tpu_custom_call.1} parent=11 // pred_check_branch
          %413 = sbr.rel (%p411) target = $region36
        $region35: #{tpu_custom_call.1} parent=11 // pred_region
          _
        $region36: #{tpu_custom_call.1} parent=11 // pred_fallthru
          _
        // Predicated region
        $region37: #{tpu_custom_call.1} parent=11 // pred_check
          %p414 = pneg %p290
        $region38: #{tpu_custom_call.1} parent=11 // pred_check_branch
          %416 = sbr.rel (%p414) target = $region40
        $region39: #{tpu_custom_call.1} parent=11 // pred_region
          _
        $region40: #{tpu_custom_call.1} parent=11 // pred_fallthru
          _
        // Predicated region
        $region41: #{tpu_custom_call.1} parent=11 // pred_check
          %p417 = pneg %p311
        $region42: #{tpu_custom_call.1} parent=11 // pred_check_branch
          %419 = sbr.rel (%p417) target = $region44
        $region43: #{tpu_custom_call.1} parent=11 // pred_region
          _
        $region44: #{tpu_custom_call.1} parent=11 // pred_fallthru
          _
        // Predicated region
        $region45: #{tpu_custom_call.1} parent=11 // pred_check
          %p420 = pneg %p332
        $region46: #{tpu_custom_call.1} parent=11 // pred_check_branch
          %422 = sbr.rel (%p420) target = $region48
        $region47: #{tpu_custom_call.1} parent=11 // pred_region
          _
        $region48: #{tpu_custom_call.1} parent=11 // pred_fallthru
          _
        // Predicated region
        $region49: #{tpu_custom_call.1} parent=11 // pred_check
          %p423 = pneg %p353
        $region50: #{tpu_custom_call.1} parent=11 // pred_check_branch
          %425 = sbr.rel (%p423) target = $region52
        $region51: #{tpu_custom_call.1} parent=11 // pred_region
          _
        $region52: #{tpu_custom_call.1} parent=11 // pred_fallthru
          _
      $region12: #{tpu_custom_call.1} parent=5 // pred_fallthru
        _
      %p426 = scmp.lt.s32.totalorder %s23, 4
      // Predicated region
      $region53: #{tpu_custom_call.1} parent=5 // pred_check
        %p427 = pneg %p426
      $region54: #{tpu_custom_call.1} parent=5 // pred_check_branch
        %429 = sbr.rel (%p427) target = $region56
      $region55: #{tpu_custom_call.1} parent=5 // pred_region
        // Predicated region
        $region57: #{tpu_custom_call.1} parent=55 // pred_check
          %p430 = pneg %p57
        $region58: #{tpu_custom_call.1} parent=55 // pred_check_branch
          %432 = sbr.rel (%p430) target = $region60
        $region59: #{tpu_custom_call.1} parent=55 // pred_region
          %p433 = scmp.lt.s32.totalorder %s30, 1
          %s434 = scalar_select %p433, %s30, 1
          %p435 = scmp.lt.s32.totalorder %s31, 1
          %s436 = scalar_select %p435, %s31, 1
          %s437 = smul.addr %s434, 2
          %s438 = sadd.s32 %s436, %s437
          %s439 = smul.addr %s438, 8
          %s440 = scalar_lea.vmem %s0, %s439
        $region60: #{tpu_custom_call.1} parent=55 // pred_fallthru
          _
        // Predicated region
        $region61: #{tpu_custom_call.1} parent=55 // pred_check
          %p441 = pneg %p85
        $region62: #{tpu_custom_call.1} parent=55 // pred_check_branch
          %443 = sbr.rel (%p441) target = $region64
        $region63: #{tpu_custom_call.1} parent=55 // pred_region
          %s444 = sand.u32 %s75, 1
          %s445 = sand.u32 %s75, 1
          %s446 = smul.addr %s445, 16
          %s447 = scalar_lea.vmem [#allocation3], %s446
          %s448 = smul.addr %s30, 8
          %s449 = sadd.s32 %s31, %s448
          %s450 = smul.addr %s449, 4
          %s451 = scalar_lea.vmem %s1, %s450
          // Predicated region
          $region65: #{tpu_custom_call.1} parent=63 // pred_check
            _
          $region66: #{tpu_custom_call.1} parent=63 // pred_check_branch
            %453 = sbr.rel (0) target = $region68
          $region67: #{tpu_custom_call.1} parent=63 // pred_region
            // Predicated region
            $region69: #{tpu_custom_call.1} parent=67 // pred_check
              _
            $region70: #{tpu_custom_call.1} parent=67 // pred_check_branch
              %455 = sbr.rel target = $region72
            $region71: #{tpu_custom_call.1} parent=67 // pred_region
              // Predicated region
              $region84: #{tpu_custom_call.1} parent=71 // pred_check
                _
              $region85: #{tpu_custom_call.1} parent=71 // pred_check_branch
                %476 = sbr.rel (0) target = $region87
              $region86: #{tpu_custom_call.1} parent=71 // pred_region
                loop: start=0, step=1, limit=1
                $region88: #{tpu_custom_call.1} parent=86 // loop_pre_header
                  _
                $region89: #{tpu_custom_call.1} parent=86 // loop_header
                  %s478 = sphi 0, %s482
                  %p479 = scmp.ge.s32.totalorder %s478, 1
                  %s483 = sphi %s451, %s451
                  %s484 = sphi %s447, %s447
                $region90: #{tpu_custom_call.1} parent=86 // loop_header_branch
                  %481 = sbr.rel (%p479) target = $region94
                $region91: #{tpu_custom_call.1} parent=86 // loop_body
                  _
                $region92: #{tpu_custom_call.1} parent=86 // loop_footer
                  %s482 = sadd.s32 1, %s478
                $region93: #{tpu_custom_call.1} parent=86 // loop_footer_branch
                  %477 = sbr.rel target = $region89
                $region94: #{tpu_custom_call.1} parent=86 // loop_exit
                  _
                loop: start=0, step=1, limit=1
                $region95: #{tpu_custom_call.1} parent=86 // loop_pre_header
                  _
                $region96: #{tpu_custom_call.1} parent=86 // loop_header
                  %s487 = sphi 0, %s491
                  %p488 = scmp.ge.s32.totalorder %s487, 1
                  %s492 = sphi %s451, %s451
                  %s493 = sphi %s447, %s447
                $region97: #{tpu_custom_call.1} parent=86 // loop_header_branch
                  %490 = sbr.rel (%p488) target = $region101
                $region98: #{tpu_custom_call.1} parent=86 // loop_body
                  %v494 = vld [vmem:[%s492] sm:$0xf]
                  %495 = vst [vmem:[%s493] sm:$0xf] %v494
                  %v496 = vld [vmem:[%s492 + $0x8] sm:$0xf]
                  %497 = vst [vmem:[%s493 + $0x4] sm:$0xf] %v496
                  %v498 = vld [vmem:[%s492 + $0x10] sm:$0xf]
                  %499 = vst [vmem:[%s493 + $0x8] sm:$0xf] %v498
                  %v500 = vld [vmem:[%s492 + $0x18] sm:$0xf]
                  %501 = vst [vmem:[%s493 + $0xc] sm:$0xf] %v500
                $region99: #{tpu_custom_call.1} parent=86 // loop_footer
                  %s491 = sadd.s32 1, %s487
                $region100: #{tpu_custom_call.1} parent=86 // loop_footer_branch
                  %486 = sbr.rel target = $region96
                $region101: #{tpu_custom_call.1} parent=86 // loop_exit
                  _
              $region87: #{tpu_custom_call.1} parent=71 // pred_fallthru
                _
            $region72: #{tpu_custom_call.1} parent=67 // pred_fallthru
              _
            // Predicated region
            $region73: #{tpu_custom_call.1} parent=67 // pred_check
              _
            $region74: #{tpu_custom_call.1} parent=67 // pred_check_branch
              %457 = sbr.rel (0) target = $region76
            $region75: #{tpu_custom_call.1} parent=67 // pred_region
              loop: start=0, step=1, limit=1
              $region77: #{tpu_custom_call.1} parent=75 // loop_pre_header
                _
              $region78: #{tpu_custom_call.1} parent=75 // loop_header
                %s460 = sphi 0, %s464
                %p461 = scmp.ge.s32.totalorder %s460, 1
                %s465 = sphi %s451, %s451
                %s466 = sphi %s447, %s447
              $region79: #{tpu_custom_call.1} parent=75 // loop_header_branch
                %463 = sbr.rel (%p461) target = $region83
              $region80: #{tpu_custom_call.1} parent=75 // loop_body
                %v467 = vld [vmem:[%s465] sm:$0xf]
                %468 = vst [vmem:[%s466] sm:$0xf] %v467
                %v469 = vld [vmem:[%s465 + $0x8] sm:$0xf]
                %470 = vst [vmem:[%s466 + $0x4] sm:$0xf] %v469
                %v471 = vld [vmem:[%s465 + $0x10] sm:$0xf]
                %472 = vst [vmem:[%s466 + $0x8] sm:$0xf] %v471
                %v473 = vld [vmem:[%s465 + $0x18] sm:$0xf]
                %474 = vst [vmem:[%s466 + $0xc] sm:$0xf] %v473
              $region81: #{tpu_custom_call.1} parent=75 // loop_footer
                %s464 = sadd.s32 1, %s460
              $region82: #{tpu_custom_call.1} parent=75 // loop_footer_branch
                %459 = sbr.rel target = $region78
              $region83: #{tpu_custom_call.1} parent=75 // loop_exit
                _
            $region76: #{tpu_custom_call.1} parent=67 // pred_fallthru
              _
          $region68: #{tpu_custom_call.1} parent=63 // pred_fallthru
            _
          %502 = vnop
        $region64: #{tpu_custom_call.1} parent=55 // pred_fallthru
          _
        // Predicated region
        $region102: #{tpu_custom_call.1} parent=55 // pred_check
          %p503 = pneg %p111
        $region103: #{tpu_custom_call.1} parent=55 // pred_check_branch
          %505 = sbr.rel (%p503) target = $region105
        $region104: #{tpu_custom_call.1} parent=55 // pred_region
          %p506 = scmp.lt.s32.totalorder %s30, 1
          %s507 = scalar_select %p506, %s30, 1
          %s508 = smul.addr %s507, 4
          %s509 = smul.addr %s508, 4
          %s510 = scalar_lea.vmem %s2, %s509
        $region105: #{tpu_custom_call.1} parent=55 // pred_fallthru
          _
        // Predicated region
        $region106: #{tpu_custom_call.1} parent=55 // pred_check
          %p511 = pneg %p137
        $region107: #{tpu_custom_call.1} parent=55 // pred_check_branch
          %513 = sbr.rel (%p511) target = $region109
        $region108: #{tpu_custom_call.1} parent=55 // pred_region
          %p514 = scmp.lt.s32.totalorder %s30, 1
          %s515 = scalar_select %p514, %s30, 1
          %s516 = smul.addr %s515, 8
          %s517 = smul.addr %s516, 4
          %s518 = scalar_lea.vmem %s3, %s517
        $region109: #{tpu_custom_call.1} parent=55 // pred_fallthru
          _
      $region56: #{tpu_custom_call.1} parent=5 // pred_fallthru
        _
      %p519 = scmp.le.s32.totalorder 1, %s23
      %p520 = scmp.lt.s32.totalorder %s23, 5
      %p521 = pnand %p519, %p520
      %p522 = pneg %p521
      // Predicated region
      $region110: #{tpu_custom_call.1} parent=5 // pred_check
        _
      $region111: #{tpu_custom_call.1} parent=5 // pred_check_branch
        %524 = sbr.rel (%p521) target = $region113
      $region112: #{tpu_custom_call.1} parent=5 // pred_region
        %s525 = ssub.s32 %s23, 1
        %s526 = sand.u32 %s78, 1
        %s527 = sand.u32 %s78, 1
        %s528 = smul.addr %s527, 16
        %s529 = scalar_lea.vmem [#allocation3], %s528
        // Predicated region
        $region114: #{tpu_custom_call.1} parent=112 // pred_check
          %p530 = pneg %p91
        $region115: #{tpu_custom_call.1} parent=112 // pred_check_branch
          %532 = sbr.rel (%p530) target = $region117
        $region116: #{tpu_custom_call.1} parent=112 // pred_region
          _
        $region117: #{tpu_custom_call.1} parent=112 // pred_fallthru
          _
        %p533 = scmp.lt.s32.totalorder %s32, 1
        %s534 = scalar_select %p533, %s32, 1
        %p535 = scmp.lt.s32.totalorder %s33, 1
        %s536 = scalar_select %p535, %s33, 1
        %s537 = smul.addr %s534, 2
        %s538 = sadd.s32 %s536, %s537
        %s539 = smul.addr %s538, 8
        %s540 = scalar_lea.vmem %s0, %s539
        %p541 = pneg %p63
        %p542 = pneg %p60
        %s543 = sand.u32 %s78, 1
        %s544 = sand.u32 %s78, 1
        %s545 = smul.addr %s544, 16
        %s546 = scalar_lea.vmem [#allocation3], %s545
        %p547 = pneg %p91
        %p548 = pneg %p88
        %p549 = scmp.lt.s32.totalorder %s32, 1
        %s550 = scalar_select %p549, %s32, 1
        %s551 = smul.addr %s550, 4
        %s552 = smul.addr %s551, 4
        %s553 = scalar_lea.vmem %s2, %s552
        %p554 = pneg %p117
        %p555 = pneg %p114
        %p556 = scmp.lt.s32.totalorder %s32, 1
        %s557 = scalar_select %p556, %s32, 1
        %s558 = smul.addr %s557, 8
        %s559 = smul.addr %s558, 4
        %s560 = scalar_lea.vmem %s3, %s559
        %p561 = pneg %p143
        %p562 = pneg %p140
        %p563 = pneg %p164
        %p564 = pneg %p161
        %p565 = pneg %p185
        %p566 = pneg %p182
        %p567 = pneg %p206
        %p568 = pneg %p203
        %p569 = pneg %p227
        %p570 = pneg %p224
        %p571 = pneg %p248
        %p572 = pneg %p245
        %p573 = pneg %p269
        %p574 = pneg %p266
        %p575 = pneg %p290
        %p576 = pneg %p287
        %p577 = pneg %p311
        %p578 = pneg %p308
        %p579 = pneg %p332
        %p580 = pneg %p329
        %p581 = pneg %p353
        %p582 = pneg %p350
        %p583 = pneg %p381
        %p584 = pneg %p378
        %s585 = sand.u32 %s368, 1
        %s586 = scalar_lea.sflag [#allocation5], %s585
        %s587 = sand.u32 %s368, 1
        %s588 = smul.addr %s587, 8
        %s589 = scalar_lea.vmem [#allocation4], %s588
        %p590 = scmp.lt.s32.totalorder %s32, 1
        %s591 = scalar_select %p590, %s32, 1
        %p592 = scmp.lt.s32.totalorder %s33, 1
        %s593 = scalar_select %p592, %s33, 1
        %s594 = smul.addr %s591, 2
        %s595 = sadd.s32 %s593, %s594
        %s596 = smul.addr %s595, 8
        %s597 = scalar_lea.vmem %s0, %s596
        %p598 = scmp.lt.s32.totalorder %s32, 1
        %s599 = scalar_select %p598, %s32, 1
        %s600 = smul.addr %s599, 4
        %s601 = smul.addr %s600, 4
        %s602 = scalar_lea.vmem %s2, %s601
        %p603 = scmp.lt.s32.totalorder %s32, 1
        %s604 = scalar_select %p603, %s32, 1
        %s605 = smul.addr %s604, 8
        %s606 = smul.addr %s605, 4
        %s607 = scalar_lea.vmem %s3, %s606
        %v609 = vld [vmem:[%s529] sm:$0xf]
        %v610 = vld [vmem:[%s602] sm:$0xf]
        %vm611 = vcmask 64512
        %v613 = vsel %vm611, %v609, 0
        %vm615 = vcmask 1043456
        %v617 = vsel %vm615, %v610, 0
        %619 = vmatprep.subr.bf16.mxu0 0
        %620 = vmatpush1.bf16.msra.mxu0 %v617
        %621 = vmatprep.subr.bf16.mxu0 0
        %622 = vmatpush1.bf16.msra.mxu0 0
        %623 = vmatprep.subr.bf16.mxu0 0
        %624 = vmatpush1.bf16.msra.mxu0 0
        %625 = vmatprep.subr.bf16.mxu0 0
        %626 = vmatpush1.bf16.msra.mxu0 0
        %627 = vmatprep.subr.bf16.mxu0 0
        %628 = vmatpush1.bf16.msra.mxu0 0
        %629 = vmatprep.subr.bf16.mxu0 0
        %630 = vmatpush1.bf16.msra.mxu0 0
        %631 = vmatprep.subr.bf16.mxu0 0
        %632 = vmatpush1.bf16.msra.mxu0 0
        %633 = vmatprep.subr.bf16.mxu0 0
        %634 = vmatpush1.bf16.msra.mxu0 0
        %635 = vmatprep.subr.bf16.mxu0 0
        %636 = vmatpush1.bf16.msra.mxu0 0
        %637 = vmatprep.subr.bf16.mxu0 0
        %638 = vmatpush1.bf16.msra.mxu0 0
        %639 = vmatprep.subr.bf16.mxu0 0
        %640 = vmatpush1.bf16.msra.mxu0 0
        %641 = vmatprep.subr.bf16.mxu0 0
        %642 = vmatpush1.bf16.msra.mxu0 0
        %643 = vmatprep.subr.bf16.mxu0 0
        %644 = vmatpush1.bf16.msra.mxu0 0
        %645 = vmatprep.subr.bf16.mxu0 0
        %646 = vmatpush1.bf16.msra.mxu0 0
        %647 = vmatprep.subr.bf16.mxu0 0
        %648 = vmatpush1.bf16.msra.mxu0 0
        %649 = vmatprep.subr.bf16.mxu0 0
        %650 = vmatpush1.bf16.msra.mxu0 0
        %651 = vmatprep.mubr.bf16.mxu0 0
        %652 = vmatmul.mubr.bf16.gmra.mrb[0].mxu0 %v613
        %v653 = vpop.f32.mrb[0].mxu0
        %v654 = vadd.f32 0.0, %v653
        %v655 = vpop.f32.mrb[0].mxu0
        %v656 = vpop.f32.mrb[0].mxu0
        %v657 = vpop.f32.mrb[0].mxu0
        %658 = vdwg.mxu0
        %vm659 = vcmask 130048
        %v660 = vsel %vm659, %v654, -inf
        %661 = vmax.xlane.f32.xlu0 %v660
        %v662 = vpop.xlane.xlu0 %661
        %v663 = vsub.f32 %v654, %v662
        %v664 = vmul.f32 %v663, 1.442695
        %v665 = vpow.pop %v664
        %v666 = vsel %vm659, %v665, 0.0
        %667 = vadd.xlane.f32.xlu0 %v666
        %v668 = vpop.xlane.xlu0 %667
        %v669 = vpack.c.bf16 %v665, %v665
        %v670 = vld [vmem:[%s607] sm:$0xf]
        %v671 = vld [vmem:[%s607 + $0x4] sm:$0xf]
        %v674 = vunpack.c.l.b16 %v670
        %v675 = vunpack.c.l.b16 %v671
        %v676 = vpack.c.b16 %v675, %v674
        %v679 = vsel %vm659, %v669, 0
        %681 = vmatprep.subr.bf16.mxu0 0
        %682 = vmatpush1.bf16.msra.mxu0 %v676
        %683 = vmatprep.subr.bf16.mxu0 0
        %684 = vmatpush1.bf16.msra.mxu0 0
        %685 = vmatprep.subr.bf16.mxu0 0
        %686 = vmatpush1.bf16.msra.mxu0 0
        %687 = vmatprep.subr.bf16.mxu0 0
        %688 = vmatpush1.bf16.msra.mxu0 0
        %689 = vmatprep.subr.bf16.mxu0 0
        %690 = vmatpush1.bf16.msra.mxu0 0
        %691 = vmatprep.subr.bf16.mxu0 0
        %692 = vmatpush1.bf16.msra.mxu0 0
        %693 = vmatprep.subr.bf16.mxu0 0
        %694 = vmatpush1.bf16.msra.mxu0 0
        %695 = vmatprep.subr.bf16.mxu0 0
        %696 = vmatpush1.bf16.msra.mxu0 0
        %697 = vmatprep.subr.bf16.mxu0 0
        %698 = vmatpush1.bf16.msra.mxu0 0
        %699 = vmatprep.subr.bf16.mxu0 0
        %700 = vmatpush1.bf16.msra.mxu0 0
        %701 = vmatprep.subr.bf16.mxu0 0
        %702 = vmatpush1.bf16.msra.mxu0 0
        %703 = vmatprep.subr.bf16.mxu0 0
        %704 = vmatpush1.bf16.msra.mxu0 0
        %705 = vmatprep.subr.bf16.mxu0 0
        %706 = vmatpush1.bf16.msra.mxu0 0
        %707 = vmatprep.subr.bf16.mxu0 0
        %708 = vmatpush1.bf16.msra.mxu0 0
        %709 = vmatprep.subr.bf16.mxu0 0
        %710 = vmatpush1.bf16.msra.mxu0 0
        %711 = vmatprep.subr.bf16.mxu0 0
        %712 = vmatpush1.bf16.msra.mxu0 0
        %713 = vmatprep.mubr.bf16.mxu0 0
        %714 = vmatmul.mubr.bf16.gmra.mrb[0].mxu0 %v679
        %v715 = vpop.f32.mrb[0].mxu0
        %v716 = vadd.f32 0.0, %v715
        %v717 = vpop.f32.mrb[0].mxu0
        %v718 = vpop.f32.mrb[0].mxu0
        %v719 = vpop.f32.mrb[0].mxu0
        %720 = vdwg.mxu0
        %v721 = vrcp.pop %v668
        %v722 = vmul.f32 %v716, %v721
        %v723 = vpack.c.bf16 %v722, %v722
        %vm724 = vcmask 60416
        %725 = vst.msk [vmem:[#allocation2] sm:$0xf] %vm724, %v723
        %s726 = scalar_lea.vmem %s529, 4 [#allocation3]
        %v727 = vld [vmem:[%s726] sm:$0xf]
        %s728 = scalar_lea.vmem %s602, 4
        %v729 = vld [vmem:[%s728] sm:$0xf]
        %v731 = vsel %vm611, %v727, 0
        %v734 = vsel %vm615, %v729, 0
        %736 = vmatprep.subr.bf16.mxu0 0
        %737 = vmatpush1.bf16.msra.mxu0 %v734
        %738 = vmatprep.subr.bf16.mxu0 0
        %739 = vmatpush1.bf16.msra.mxu0 0
        %740 = vmatprep.subr.bf16.mxu0 0
        %741 = vmatpush1.bf16.msra.mxu0 0
        %742 = vmatprep.subr.bf16.mxu0 0
        %743 = vmatpush1.bf16.msra.mxu0 0
        %744 = vmatprep.subr.bf16.mxu0 0
        %745 = vmatpush1.bf16.msra.mxu0 0
        %746 = vmatprep.subr.bf16.mxu0 0
        %747 = vmatpush1.bf16.msra.mxu0 0
        %748 = vmatprep.subr.bf16.mxu0 0
        %749 = vmatpush1.bf16.msra.mxu0 0
        %750 = vmatprep.subr.bf16.mxu0 0
        %751 = vmatpush1.bf16.msra.mxu0 0
        %752 = vmatprep.subr.bf16.mxu0 0
        %753 = vmatpush1.bf16.msra.mxu0 0
        %754 = vmatprep.subr.bf16.mxu0 0
        %755 = vmatpush1.bf16.msra.mxu0 0
        %756 = vmatprep.subr.bf16.mxu0 0
        %757 = vmatpush1.bf16.msra.mxu0 0
        %758 = vmatprep.subr.bf16.mxu0 0
        %759 = vmatpush1.bf16.msra.mxu0 0
        %760 = vmatprep.subr.bf16.mxu0 0
        %761 = vmatpush1.bf16.msra.mxu0 0
        %762 = vmatprep.subr.bf16.mxu0 0
        %763 = vmatpush1.bf16.msra.mxu0 0
        %764 = vmatprep.subr.bf16.mxu0 0
        %765 = vmatpush1.bf16.msra.mxu0 0
        %766 = vmatprep.subr.bf16.mxu0 0
        %767 = vmatpush1.bf16.msra.mxu0 0
        %768 = vmatprep.mubr.bf16.mxu0 0
        %769 = vmatmul.mubr.bf16.gmra.mrb[0].mxu0 %v731
        %v770 = vpop.f32.mrb[0].mxu0
        %v771 = vadd.f32 0.0, %v770
        %v772 = vpop.f32.mrb[0].mxu0
        %v773 = vpop.f32.mrb[0].mxu0
        %v774 = vpop.f32.mrb[0].mxu0
        %775 = vdwg.mxu0
        %v776 = vsel %vm659, %v771, -inf
        %777 = vmax.xlane.f32.xlu0 %v776
        %v778 = vpop.xlane.xlu0 %777
        %v779 = vsub.f32 %v771, %v778
        %v780 = vmul.f32 %v779, 1.442695
        %v781 = vpow.pop %v780
        %v782 = vsel %vm659, %v781, 0.0
        %783 = vadd.xlane.f32.xlu0 %v782
        %v784 = vpop.xlane.xlu0 %783
        %v785 = vpack.c.bf16 %v781, %v781
        %s786 = scalar_lea.vmem %s607, 8
        %v787 = vld [vmem:[%s786] sm:$0xf]
        %v788 = vld [vmem:[%s786 + $0x4] sm:$0xf]
        %v791 = vunpack.c.l.b16 %v787
        %v792 = vunpack.c.l.b16 %v788
        %v793 = vpack.c.b16 %v792, %v791
        %v796 = vsel %vm659, %v785, 0
        %798 = vmatprep.subr.bf16.mxu0 0
        %799 = vmatpush1.bf16.msra.mxu0 %v793
        %800 = vmatprep.subr.bf16.mxu0 0
        %801 = vmatpush1.bf16.msra.mxu0 0
        %802 = vmatprep.subr.bf16.mxu0 0
        %803 = vmatpush1.bf16.msra.mxu0 0
        %804 = vmatprep.subr.bf16.mxu0 0
        %805 = vmatpush1.bf16.msra.mxu0 0
        %806 = vmatprep.subr.bf16.mxu0 0
        %807 = vmatpush1.bf16.msra.mxu0 0
        %808 = vmatprep.subr.bf16.mxu0 0
        %809 = vmatpush1.bf16.msra.mxu0 0
        %810 = vmatprep.subr.bf16.mxu0 0
        %811 = vmatpush1.bf16.msra.mxu0 0
        %812 = vmatprep.subr.bf16.mxu0 0
        %813 = vmatpush1.bf16.msra.mxu0 0
        %814 = vmatprep.subr.bf16.mxu0 0
        %815 = vmatpush1.bf16.msra.mxu0 0
        %816 = vmatprep.subr.bf16.mxu0 0
        %817 = vmatpush1.bf16.msra.mxu0 0
        %818 = vmatprep.subr.bf16.mxu0 0
        %819 = vmatpush1.bf16.msra.mxu0 0
        %820 = vmatprep.subr.bf16.mxu0 0
        %821 = vmatpush1.bf16.msra.mxu0 0
        %822 = vmatprep.subr.bf16.mxu0 0
        %823 = vmatpush1.bf16.msra.mxu0 0
        %824 = vmatprep.subr.bf16.mxu0 0
        %825 = vmatpush1.bf16.msra.mxu0 0
        %826 = vmatprep.subr.bf16.mxu0 0
        %827 = vmatpush1.bf16.msra.mxu0 0
        %828 = vmatprep.subr.bf16.mxu0 0
        %829 = vmatpush1.bf16.msra.mxu0 0
        %830 = vmatprep.mubr.bf16.mxu0 0
        %831 = vmatmul.mubr.bf16.gmra.mrb[0].mxu0 %v796
        %v832 = vpop.f32.mrb[0].mxu0
        %v833 = vadd.f32 0.0, %v832
        %v834 = vpop.f32.mrb[0].mxu0
        %v835 = vpop.f32.mrb[0].mxu0
        %v836 = vpop.f32.mrb[0].mxu0
        %837 = vdwg.mxu0
        %v838 = vrcp.pop %v784
        %v839 = vmul.f32 %v833, %v838
        %v840 = vpack.c.bf16 %v839, %v839
        %v842 = vunpack.c.l.b16 %v840
        %v843 = vpack.c.b16 %v842, %v842
        %844 = vrot.lane.b32.xlu0 %v843, 8
        %v845 = vpop.permute.xlu0 %844
        %vm847 = vcmask 126016
        %848 = vst.msk [vmem:[#allocation2] sm:$0xf] %vm847, %v845
        %s849 = scalar_lea.vmem %s529, 8 [#allocation3]
        %v850 = vld [vmem:[%s849] sm:$0xf]
        %s851 = scalar_lea.vmem %s602, 8
        %v852 = vld [vmem:[%s851] sm:$0xf]
        %v854 = vsel %vm611, %v850, 0
        %v857 = vsel %vm615, %v852, 0
        %859 = vmatprep.subr.bf16.mxu0 0
        %860 = vmatpush1.bf16.msra.mxu0 %v857
        %861 = vmatprep.subr.bf16.mxu0 0
        %862 = vmatpush1.bf16.msra.mxu0 0
        %863 = vmatprep.subr.bf16.mxu0 0
        %864 = vmatpush1.bf16.msra.mxu0 0
        %865 = vmatprep.subr.bf16.mxu0 0
        %866 = vmatpush1.bf16.msra.mxu0 0
        %867 = vmatprep.subr.bf16.mxu0 0
        %868 = vmatpush1.bf16.msra.mxu0 0
        %869 = vmatprep.subr.bf16.mxu0 0
        %870 = vmatpush1.bf16.msra.mxu0 0
        %871 = vmatprep.subr.bf16.mxu0 0
        %872 = vmatpush1.bf16.msra.mxu0 0
        %873 = vmatprep.subr.bf16.mxu0 0
        %874 = vmatpush1.bf16.msra.mxu0 0
        %875 = vmatprep.subr.bf16.mxu0 0
        %876 = vmatpush1.bf16.msra.mxu0 0
        %877 = vmatprep.subr.bf16.mxu0 0
        %878 = vmatpush1.bf16.msra.mxu0 0
        %879 = vmatprep.subr.bf16.mxu0 0
        %880 = vmatpush1.bf16.msra.mxu0 0
        %881 = vmatprep.subr.bf16.mxu0 0
        %882 = vmatpush1.bf16.msra.mxu0 0
        %883 = vmatprep.subr.bf16.mxu0 0
        %884 = vmatpush1.bf16.msra.mxu0 0
        %885 = vmatprep.subr.bf16.mxu0 0
        %886 = vmatpush1.bf16.msra.mxu0 0
        %887 = vmatprep.subr.bf16.mxu0 0
        %888 = vmatpush1.bf16.msra.mxu0 0
        %889 = vmatprep.subr.bf16.mxu0 0
        %890 = vmatpush1.bf16.msra.mxu0 0
        %891 = vmatprep.mubr.bf16.mxu0 0
        %892 = vmatmul.mubr.bf16.gmra.mrb[0].mxu0 %v854
        %v893 = vpop.f32.mrb[0].mxu0
        %v894 = vadd.f32 0.0, %v893
        %v895 = vpop.f32.mrb[0].mxu0
        %v896 = vpop.f32.mrb[0].mxu0
        %v897 = vpop.f32.mrb[0].mxu0
        %898 = vdwg.mxu0
        %v899 = vsel %vm659, %v894, -inf
        %900 = vmax.xlane.f32.xlu0 %v899
        %v901 = vpop.xlane.xlu0 %900
        %v902 = vsub.f32 %v894, %v901
        %v903 = vmul.f32 %v902, 1.442695
        %v904 = vpow.pop %v903
        %v905 = vsel %vm659, %v904, 0.0
        %906 = vadd.xlane.f32.xlu0 %v905
        %v907 = vpop.xlane.xlu0 %906
        %v908 = vpack.c.bf16 %v904, %v904
        %s909 = scalar_lea.vmem %s607, 16
        %v910 = vld [vmem:[%s909] sm:$0xf]
        %v911 = vld [vmem:[%s909 + $0x4] sm:$0xf]
        %v914 = vunpack.c.l.b16 %v910
        %v915 = vunpack.c.l.b16 %v911
        %v916 = vpack.c.b16 %v915, %v914
        %v919 = vsel %vm659, %v908, 0
        %921 = vmatprep.subr.bf16.mxu0 0
        %922 = vmatpush1.bf16.msra.mxu0 %v916
        %923 = vmatprep.subr.bf16.mxu0 0
        %924 = vmatpush1.bf16.msra.mxu0 0
        %925 = vmatprep.subr.bf16.mxu0 0
        %926 = vmatpush1.bf16.msra.mxu0 0
        %927 = vmatprep.subr.bf16.mxu0 0
        %928 = vmatpush1.bf16.msra.mxu0 0
        %929 = vmatprep.subr.bf16.mxu0 0
        %930 = vmatpush1.bf16.msra.mxu0 0
        %931 = vmatprep.subr.bf16.mxu0 0
        %932 = vmatpush1.bf16.msra.mxu0 0
        %933 = vmatprep.subr.bf16.mxu0 0
        %934 = vmatpush1.bf16.msra.mxu0 0
        %935 = vmatprep.subr.bf16.mxu0 0
        %936 = vmatpush1.bf16.msra.mxu0 0
        %937 = vmatprep.subr.bf16.mxu0 0
        %938 = vmatpush1.bf16.msra.mxu0 0
        %939 = vmatprep.subr.bf16.mxu0 0
        %940 = vmatpush1.bf16.msra.mxu0 0
        %941 = vmatprep.subr.bf16.mxu0 0
        %942 = vmatpush1.bf16.msra.mxu0 0
        %943 = vmatprep.subr.bf16.mxu0 0
        %944 = vmatpush1.bf16.msra.mxu0 0
        %945 = vmatprep.subr.bf16.mxu0 0
        %946 = vmatpush1.bf16.msra.mxu0 0
        %947 = vmatprep.subr.bf16.mxu0 0
        %948 = vmatpush1.bf16.msra.mxu0 0
        %949 = vmatprep.subr.bf16.mxu0 0
        %950 = vmatpush1.bf16.msra.mxu0 0
        %951 = vmatprep.subr.bf16.mxu0 0
        %952 = vmatpush1.bf16.msra.mxu0 0
        %953 = vmatprep.mubr.bf16.mxu0 0
        %954 = vmatmul.mubr.bf16.gmra.mrb[0].mxu0 %v919
        %v955 = vpop.f32.mrb[0].mxu0
        %v956 = vadd.f32 0.0, %v955
        %v957 = vpop.f32.mrb[0].mxu0
        %v958 = vpop.f32.mrb[0].mxu0
        %v959 = vpop.f32.mrb[0].mxu0
        %960 = vdwg.mxu0
        %v961 = vrcp.pop %v907
        %v962 = vmul.f32 %v956, %v961
        %v963 = vpack.c.bf16 %v962, %v962
        %v965 = vunpack.c.l.b16 %v963
        %v966 = vpack.c.b16 %v965, %v965
        %967 = vrot.lane.b32.xlu0 %v966, 16
        %v968 = vpop.permute.xlu0 %967
        %vm970 = vcmask 191616
        %971 = vst.msk [vmem:[#allocation2] sm:$0xf] %vm970, %v968
        %s972 = scalar_lea.vmem %s529, 12 [#allocation3]
        %v973 = vld [vmem:[%s972] sm:$0xf]
        %s974 = scalar_lea.vmem %s602, 12
        %v975 = vld [vmem:[%s974] sm:$0xf]
        %v977 = vsel %vm611, %v973, 0
        %v980 = vsel %vm615, %v975, 0
        %982 = vmatprep.subr.bf16.mxu0 0
        %983 = vmatpush1.bf16.msra.mxu0 %v980
        %984 = vmatprep.subr.bf16.mxu0 0
        %985 = vmatpush1.bf16.msra.mxu0 0
        %986 = vmatprep.subr.bf16.mxu0 0
        %987 = vmatpush1.bf16.msra.mxu0 0
        %988 = vmatprep.subr.bf16.mxu0 0
        %989 = vmatpush1.bf16.msra.mxu0 0
        %990 = vmatprep.subr.bf16.mxu0 0
        %991 = vmatpush1.bf16.msra.mxu0 0
        %992 = vmatprep.subr.bf16.mxu0 0
        %993 = vmatpush1.bf16.msra.mxu0 0
        %994 = vmatprep.subr.bf16.mxu0 0
        %995 = vmatpush1.bf16.msra.mxu0 0
        %996 = vmatprep.subr.bf16.mxu0 0
        %997 = vmatpush1.bf16.msra.mxu0 0
        %998 = vmatprep.subr.bf16.mxu0 0
        %999 = vmatpush1.bf16.msra.mxu0 0
        %1000 = vmatprep.subr.bf16.mxu0 0
        %1001 = vmatpush1.bf16.msra.mxu0 0
        %1002 = vmatprep.subr.bf16.mxu0 0
        %1003 = vmatpush1.bf16.msra.mxu0 0
        %1004 = vmatprep.subr.bf16.mxu0 0
        %1005 = vmatpush1.bf16.msra.mxu0 0
        %1006 = vmatprep.subr.bf16.mxu0 0
        %1007 = vmatpush1.bf16.msra.mxu0 0
        %1008 = vmatprep.subr.bf16.mxu0 0
        %1009 = vmatpush1.bf16.msra.mxu0 0
        %1010 = vmatprep.subr.bf16.mxu0 0
        %1011 = vmatpush1.bf16.msra.mxu0 0
        %1012 = vmatprep.subr.bf16.mxu0 0
        %1013 = vmatpush1.bf16.msra.mxu0 0
        %1014 = vmatprep.mubr.bf16.mxu0 0
        %1015 = vmatmul.mubr.bf16.gmra.mrb[0].mxu0 %v977
        %v1016 = vpop.f32.mrb[0].mxu0
        %v1017 = vadd.f32 0.0, %v1016
        %v1018 = vpop.f32.mrb[0].mxu0
        %v1019 = vpop.f32.mrb[0].mxu0
        %v1020 = vpop.f32.mrb[0].mxu0
        %1021 = vdwg.mxu0
        %v1022 = vsel %vm659, %v1017, -inf
        %1023 = vmax.xlane.f32.xlu0 %v1022
        %v1024 = vpop.xlane.xlu0 %1023
        %v1025 = vsub.f32 %v1017, %v1024
        %v1026 = vmul.f32 %v1025, 1.442695
        %v1027 = vpow.pop %v1026
        %v1028 = vsel %vm659, %v1027, 0.0
        %1029 = vadd.xlane.f32.xlu0 %v1028
        %v1030 = vpop.xlane.xlu0 %1029
        %v1031 = vpack.c.bf16 %v1027, %v1027
        %s1032 = scalar_lea.vmem %s607, 24
        %v1033 = vld [vmem:[%s1032] sm:$0xf]
        %v1034 = vld [vmem:[%s1032 + $0x4] sm:$0xf]
        %v1037 = vunpack.c.l.b16 %v1033
        %v1038 = vunpack.c.l.b16 %v1034
        %v1039 = vpack.c.b16 %v1038, %v1037
        %v1042 = vsel %vm659, %v1031, 0
        %1044 = vmatprep.subr.bf16.mxu0 0
        %1045 = vmatpush1.bf16.msra.mxu0 %v1039
        %1046 = vmatprep.subr.bf16.mxu0 0
        %1047 = vmatpush1.bf16.msra.mxu0 0
        %1048 = vmatprep.subr.bf16.mxu0 0
        %1049 = vmatpush1.bf16.msra.mxu0 0
        %1050 = vmatprep.subr.bf16.mxu0 0
        %1051 = vmatpush1.bf16.msra.mxu0 0
        %1052 = vmatprep.subr.bf16.mxu0 0
        %1053 = vmatpush1.bf16.msra.mxu0 0
        %1054 = vmatprep.subr.bf16.mxu0 0
        %1055 = vmatpush1.bf16.msra.mxu0 0
        %1056 = vmatprep.subr.bf16.mxu0 0
        %1057 = vmatpush1.bf16.msra.mxu0 0
        %1058 = vmatprep.subr.bf16.mxu0 0
        %1059 = vmatpush1.bf16.msra.mxu0 0
        %1060 = vmatprep.subr.bf16.mxu0 0
        %1061 = vmatpush1.bf16.msra.mxu0 0
        %1062 = vmatprep.subr.bf16.mxu0 0
        %1063 = vmatpush1.bf16.msra.mxu0 0
        %1064 = vmatprep.subr.bf16.mxu0 0
        %1065 = vmatpush1.bf16.msra.mxu0 0
        %1066 = vmatprep.subr.bf16.mxu0 0
        %1067 = vmatpush1.bf16.msra.mxu0 0
        %1068 = vmatprep.subr.bf16.mxu0 0
        %1069 = vmatpush1.bf16.msra.mxu0 0
        %1070 = vmatprep.subr.bf16.mxu0 0
        %1071 = vmatpush1.bf16.msra.mxu0 0
        %1072 = vmatprep.subr.bf16.mxu0 0
        %1073 = vmatpush1.bf16.msra.mxu0 0
        %1074 = vmatprep.subr.bf16.mxu0 0
        %1075 = vmatpush1.bf16.msra.mxu0 0
        %1076 = vmatprep.mubr.bf16.mxu0 0
        %1077 = vmatmul.mubr.bf16.gmra.mrb[0].mxu0 %v1042
        %v1078 = vpop.f32.mrb[0].mxu0
        %v1079 = vadd.f32 0.0, %v1078
        %v1080 = vpop.f32.mrb[0].mxu0
        %v1081 = vpop.f32.mrb[0].mxu0
        %v1082 = vpop.f32.mrb[0].mxu0
        %1083 = vdwg.mxu0
        %v1084 = vrcp.pop %v1030
        %v1085 = vmul.f32 %v1079, %v1084
        %v1086 = vpack.c.bf16 %v1085, %v1085
        %v1088 = vunpack.c.l.b16 %v1086
        %v1089 = vpack.c.b16 %v1088, %v1088
        %1090 = vrot.lane.b32.xlu0 %v1089, 24
        %v1091 = vpop.permute.xlu0 %1090
        %vm1093 = vcmask 257216
        %1094 = vst.msk [vmem:[#allocation2] sm:$0xf] %vm1093, %v1091
        %v1095 = vld [vmem:[#allocation2] sm:$0xf]
        %v1096 = vld [vmem:[%s4] sm:$0xf]
        %v1097 = vld [vmem:[%s4 + $0x4] sm:$0xf]
        %v1098 = vld [vmem:[%s4 + $0x8] sm:$0xf]
        %v1099 = vld [vmem:[%s4 + $0xc] sm:$0xf]
        %v1100 = vld [vmem:[%s5] sm:$0x1]
        %v1102 = vlaneseq
        %v1103 = vshrl.u32 %v1102, 7
        %v1104 = vsub.s32 0, %v1103
        %v1105 = vrot.slane %v1100, %v1104
        %v1111 = vunpack.c.l.b16 %v1096
        %v1112 = vunpack.c.l.b16 %v1097
        %v1113 = vunpack.c.l.b16 %v1098
        %v1114 = vunpack.c.l.b16 %v1099
        %v1115 = vpack.c.b16 %v1112, %v1111
        %v1116 = vpack.c.b16 %v1114, %v1113
        %vm1119 = vcmask 261120
        %v1121 = vsel %vm1119, %v1095, 0
        %1123 = vmatprep.subr.bf16.mxu0 0
        %1124 = vmatpush1.bf16.msra.mxu0 %v1115
        %1125 = vmatprep.subr.bf16.mxu0 0
        %1126 = vmatpush1.bf16.msra.mxu0 %v1116
        %1127 = vmatprep.subr.bf16.mxu0 0
        %1128 = vmatpush1.bf16.msra.mxu0 0
        %1129 = vmatprep.subr.bf16.mxu0 0
        %1130 = vmatpush1.bf16.msra.mxu0 0
        %1131 = vmatprep.subr.bf16.mxu0 0
        %1132 = vmatpush1.bf16.msra.mxu0 0
        %1133 = vmatprep.subr.bf16.mxu0 0
        %1134 = vmatpush1.bf16.msra.mxu0 0
        %1135 = vmatprep.subr.bf16.mxu0 0
        %1136 = vmatpush1.bf16.msra.mxu0 0
        %1137 = vmatprep.subr.bf16.mxu0 0
        %1138 = vmatpush1.bf16.msra.mxu0 0
        %1139 = vmatprep.subr.bf16.mxu0 0
        %1140 = vmatpush1.bf16.msra.mxu0 0
        %1141 = vmatprep.subr.bf16.mxu0 0
        %1142 = vmatpush1.bf16.msra.mxu0 0
        %1143 = vmatprep.subr.bf16.mxu0 0
        %1144 = vmatpush1.bf16.msra.mxu0 0
        %1145 = vmatprep.subr.bf16.mxu0 0
        %1146 = vmatpush1.bf16.msra.mxu0 0
        %1147 = vmatprep.subr.bf16.mxu0 0
        %1148 = vmatpush1.bf16.msra.mxu0 0
        %1149 = vmatprep.subr.bf16.mxu0 0
        %1150 = vmatpush1.bf16.msra.mxu0 0
        %1151 = vmatprep.subr.bf16.mxu0 0
        %1152 = vmatpush1.bf16.msra.mxu0 0
        %1153 = vmatprep.subr.bf16.mxu0 0
        %1154 = vmatpush1.bf16.msra.mxu0 0
        %1155 = vmatprep.mubr.bf16.mxu0 0
        %1156 = vmatmul.mubr.bf16.gmra.mrb[0].mxu0 %v1121
        %v1157 = vpop.f32.mrb[0].mxu0
        %v1158 = vadd.f32 %v1105, %v1157
        %v1159 = vpop.f32.mrb[0].mxu0
        %v1160 = vpop.f32.mrb[0].mxu0
        %v1161 = vpop.f32.mrb[0].mxu0
        %1162 = vdwg.mxu0
        %v1163 = vld [vmem:[%s597] sm:$0xff]
        %v1164 = vadd.f32 %v1163, %v1158
        %v1165 = vld [vmem:[%s6] sm:$0x1]
        %v1166 = vld [vmem:[%s7] sm:$0x1]
        %v1167 = vsel %vm1119, %v1164, 0.0
        %1168 = vadd.xlane.f32.xlu0 %v1167
        %v1169 = vpop.xlane.xlu0 %1168
        %v1170 = vrcp.pop 32.0
        %v1171 = vmul.f32 %v1169, %v1170
        %v1172 = vsub.f32 %v1164, %v1171
        %v1173 = vmul.f32 %v1172, %v1172
        %v1174 = vsel %vm1119, %v1173, 0.0
        %1175 = vadd.xlane.f32.xlu0 %v1174
        %v1176 = vpop.xlane.xlu0 %1175
        %v1177 = vmul.f32 %v1176, %v1170
        %v1178 = vadd.f32 %v1177, 1e-06
        %v1179 = vrsqrt.pop %v1178
        %v1180 = vmul.f32 %v1172, %v1179
        %v1182 = vlaneseq
        %v1183 = vshrl.u32 %v1182, 7
        %v1184 = vsub.s32 0, %v1183
        %v1185 = vrot.slane %v1165, %v1184
        %v1187 = vmul.f32 %v1180, %v1185
        %v1189 = vlaneseq
        %v1190 = vshrl.u32 %v1189, 7
        %v1191 = vsub.s32 0, %v1190
        %v1192 = vrot.slane %v1166, %v1191
        %v1194 = vadd.f32 %v1187, %v1192
        %v1195 = vpack.c.bf16 %v1194, %v1194
        %v1196 = vld [vmem:[%s8] sm:$0xf]
        %v1197 = vld [vmem:[%s8 + $0x4] sm:$0xf]
        %v1198 = vld [vmem:[%s8 + $0x8] sm:$0xf]
        %v1199 = vld [vmem:[%s8 + $0xc] sm:$0xf]
        %v1200 = vld [vmem:[%s9] sm:$0x1]
        %v1202 = vlaneseq
        %v1203 = vshrl.u32 %v1202, 7
        %v1204 = vsub.s32 0, %v1203
        %v1205 = vrot.slane %v1200, %v1204
        %v1211 = vunpack.c.l.b16 %v1196
        %v1212 = vunpack.c.l.b16 %v1197
        %v1213 = vunpack.c.l.b16 %v1198
        %v1214 = vunpack.c.l.b16 %v1199
        %v1215 = vpack.c.b16 %v1212, %v1211
        %v1216 = vpack.c.b16 %v1214, %v1213
        %v1220 = vsel %vm1119, %v1195, 0
        %1222 = vmatprep.subr.bf16.mxu0 0
        %1223 = vmatpush1.bf16.msra.mxu0 %v1215
        %1224 = vmatprep.subr.bf16.mxu0 0
        %1225 = vmatpush1.bf16.msra.mxu0 %v1216
        %1226 = vmatprep.subr.bf16.mxu0 0
        %1227 = vmatpush1.bf16.msra.mxu0 0
        %1228 = vmatprep.subr.bf16.mxu0 0
        %1229 = vmatpush1.bf16.msra.mxu0 0
        %1230 = vmatprep.subr.bf16.mxu0 0
        %1231 = vmatpush1.bf16.msra.mxu0 0
        %1232 = vmatprep.subr.bf16.mxu0 0
        %1233 = vmatpush1.bf16.msra.mxu0 0
        %1234 = vmatprep.subr.bf16.mxu0 0
        %1235 = vmatpush1.bf16.msra.mxu0 0
        %1236 = vmatprep.subr.bf16.mxu0 0
        %1237 = vmatpush1.bf16.msra.mxu0 0
        %1238 = vmatprep.subr.bf16.mxu0 0
        %1239 = vmatpush1.bf16.msra.mxu0 0
        %1240 = vmatprep.subr.bf16.mxu0 0
        %1241 = vmatpush1.bf16.msra.mxu0 0
        %1242 = vmatprep.subr.bf16.mxu0 0
        %1243 = vmatpush1.bf16.msra.mxu0 0
        %1244 = vmatprep.subr.bf16.mxu0 0
        %1245 = vmatpush1.bf16.msra.mxu0 0
        %1246 = vmatprep.subr.bf16.mxu0 0
        %1247 = vmatpush1.bf16.msra.mxu0 0
        %1248 = vmatprep.subr.bf16.mxu0 0
        %1249 = vmatpush1.bf16.msra.mxu0 0
        %1250 = vmatprep.subr.bf16.mxu0 0
        %1251 = vmatpush1.bf16.msra.mxu0 0
        %1252 = vmatprep.subr.bf16.mxu0 0
        %1253 = vmatpush1.bf16.msra.mxu0 0
        %1254 = vmatprep.mubr.bf16.mxu0 0
        %1255 = vmatmul.mubr.bf16.gmra.mrb[0].mxu0 %v1220
        %v1256 = vpop.f32.mrb[0].mxu0
        %v1257 = vadd.f32 %v1205, %v1256
        %v1258 = vpop.f32.mrb[0].mxu0
        %v1259 = vpop.f32.mrb[0].mxu0
        %v1260 = vpop.f32.mrb[0].mxu0
        %1261 = vdwg.mxu0
        %v1262 = vmax.f32 %v1257, 0.0
        %v1263 = vpack.c.bf16 %v1262, %v1262
        %v1264 = vld [vmem:[%s10] sm:$0xf]
        %v1265 = vld [vmem:[%s10 + $0x4] sm:$0xf]
        %v1266 = vld [vmem:[%s10 + $0x8] sm:$0xf]
        %v1267 = vld [vmem:[%s10 + $0xc] sm:$0xf]
        %v1268 = vld [vmem:[%s10 + $0x10] sm:$0xf]
        %v1269 = vld [vmem:[%s10 + $0x14] sm:$0xf]
        %v1270 = vld [vmem:[%s10 + $0x18] sm:$0xf]
        %v1271 = vld [vmem:[%s10 + $0x1c] sm:$0xf]
        %v1272 = vld [vmem:[%s11] sm:$0x1]
        %v1274 = vlaneseq
        %v1275 = vshrl.u32 %v1274, 7
        %v1276 = vsub.s32 0, %v1275
        %v1277 = vrot.slane %v1272, %v1276
        %v1287 = vunpack.c.l.b16 %v1264
        %v1288 = vunpack.c.l.b16 %v1265
        %v1289 = vunpack.c.l.b16 %v1266
        %v1290 = vunpack.c.l.b16 %v1267
        %v1291 = vunpack.c.l.b16 %v1268
        %v1292 = vunpack.c.l.b16 %v1269
        %v1293 = vunpack.c.l.b16 %v1270
        %v1294 = vunpack.c.l.b16 %v1271
        %v1295 = vpack.c.b16 %v1288, %v1287
        %v1296 = vpack.c.b16 %v1290, %v1289
        %v1297 = vpack.c.b16 %v1292, %v1291
        %v1298 = vpack.c.b16 %v1294, %v1293
        %vm1303 = vcmask 523264
        %v1305 = vsel %vm1303, %v1263, 0
        %1307 = vmatprep.subr.bf16.mxu0 0
        %1308 = vmatpush1.bf16.msra.mxu0 %v1295
        %1309 = vmatprep.subr.bf16.mxu0 0
        %1310 = vmatpush1.bf16.msra.mxu0 %v1296
        %1311 = vmatprep.subr.bf16.mxu0 0
        %1312 = vmatpush1.bf16.msra.mxu0 %v1297
        %1313 = vmatprep.subr.bf16.mxu0 0
        %1314 = vmatpush1.bf16.msra.mxu0 %v1298
        %1315 = vmatprep.subr.bf16.mxu0 0
        %1316 = vmatpush1.bf16.msra.mxu0 0
        %1317 = vmatprep.subr.bf16.mxu0 0
        %1318 = vmatpush1.bf16.msra.mxu0 0
        %1319 = vmatprep.subr.bf16.mxu0 0
        %1320 = vmatpush1.bf16.msra.mxu0 0
        %1321 = vmatprep.subr.bf16.mxu0 0
        %1322 = vmatpush1.bf16.msra.mxu0 0
        %1323 = vmatprep.subr.bf16.mxu0 0
        %1324 = vmatpush1.bf16.msra.mxu0 0
        %1325 = vmatprep.subr.bf16.mxu0 0
        %1326 = vmatpush1.bf16.msra.mxu0 0
        %1327 = vmatprep.subr.bf16.mxu0 0
        %1328 = vmatpush1.bf16.msra.mxu0 0
        %1329 = vmatprep.subr.bf16.mxu0 0
        %1330 = vmatpush1.bf16.msra.mxu0 0
        %1331 = vmatprep.subr.bf16.mxu0 0
        %1332 = vmatpush1.bf16.msra.mxu0 0
        %1333 = vmatprep.subr.bf16.mxu0 0
        %1334 = vmatpush1.bf16.msra.mxu0 0
        %1335 = vmatprep.subr.bf16.mxu0 0
        %1336 = vmatpush1.bf16.msra.mxu0 0
        %1337 = vmatprep.subr.bf16.mxu0 0
        %1338 = vmatpush1.bf16.msra.mxu0 0
        %1339 = vmatprep.mubr.bf16.mxu0 0
        %1340 = vmatmul.mubr.bf16.gmra.mrb[0].mxu0 %v1305
        %v1341 = vpop.f32.mrb[0].mxu0
        %v1342 = vadd.f32 %v1277, %v1341
        %v1343 = vpop.f32.mrb[0].mxu0
        %v1344 = vpop.f32.mrb[0].mxu0
        %v1345 = vpop.f32.mrb[0].mxu0
        %1346 = vdwg.mxu0
        %v1347 = vadd.f32 %v1194, %v1342
        %v1348 = vld [vmem:[%s12] sm:$0x1]
        %v1349 = vld [vmem:[%s13] sm:$0x1]
        %v1350 = vsel %vm1119, %v1347, 0.0
        %1351 = vadd.xlane.f32.xlu0 %v1350
        %v1352 = vpop.xlane.xlu0 %1351
        %v1353 = vmul.f32 %v1352, %v1170
        %v1354 = vsub.f32 %v1347, %v1353
        %v1355 = vmul.f32 %v1354, %v1354
        %v1356 = vsel %vm1119, %v1355, 0.0
        %1357 = vadd.xlane.f32.xlu0 %v1356
        %v1358 = vpop.xlane.xlu0 %1357
        %v1359 = vmul.f32 %v1358, %v1170
        %v1360 = vadd.f32 %v1359, 1e-06
        %v1361 = vrsqrt.pop %v1360
        %v1362 = vmul.f32 %v1354, %v1361
        %v1364 = vlaneseq
        %v1365 = vshrl.u32 %v1364, 7
        %v1366 = vsub.s32 0, %v1365
        %v1367 = vrot.slane %v1348, %v1366
        %v1369 = vmul.f32 %v1362, %v1367
        %v1371 = vlaneseq
        %v1372 = vshrl.u32 %v1371, 7
        %v1373 = vsub.s32 0, %v1372
        %v1374 = vrot.slane %v1349, %v1373
        %v1376 = vadd.f32 %v1369, %v1374
        %1377 = vst.msk [vmem:[%s589] sm:$0xff] %vm1119, %v1376
        %s1378 = sand.u32 %s368, 1
        %s1379 = scalar_lea.sflag [#allocation5], %s1378
        %s1380 = sand.u32 %s368, 1
        %s1381 = smul.addr %s1380, 8
        %s1382 = scalar_lea.vmem [#allocation4], %s1381
        // Predicated region
        $region118: #{tpu_custom_call.1} parent=112 // pred_check
          %p1383 = pneg %p378
        $region119: #{tpu_custom_call.1} parent=112 // pred_check_branch
          %1385 = sbr.rel (%p1383) target = $region121
        $region120: #{tpu_custom_call.1} parent=112 // pred_region
          %s1387 = ssub.s32 128, 128
          %1388 = vsyncadd %s1379, %s1387
          %s1389 = smul.addr %s32, 2
          %s1390 = sadd.s32 %s33, %s1389
          %s1391 = smul.addr %s1390, 128
          %s1392 = scalar_lea.hbm %s14, %s1391
          %s1394 = sshll.u32 %s1382, 4
          %s1395 = int_to_ptr.vmem [resolvable:$true] %s1394
          %1397 = dma.vmem_to_hbm [thread:$0]  %s1395, 128, %s1392, %s1379
        $region121: #{tpu_custom_call.1} parent=112 // pred_fallthru
          _
      $region113: #{tpu_custom_call.1} parent=5 // pred_fallthru
        _
      %p1398 = scmp.le.s32.totalorder 2, %s23
      // Predicated region
      $region122: #{tpu_custom_call.1} parent=5 // pred_check
        %p1399 = pneg %p1398
      $region123: #{tpu_custom_call.1} parent=5 // pred_check_branch
        %1401 = sbr.rel (%p1399) target = $region125
      $region124: #{tpu_custom_call.1} parent=5 // pred_region
        %s1402 = ssub.s32 %s23, 2
        // Predicated region
        $region126: #{tpu_custom_call.1} parent=124 // pred_check
          %p1403 = pneg %p384
        $region127: #{tpu_custom_call.1} parent=124 // pred_check_branch
          %1405 = sbr.rel (%p1403) target = $region129
        $region128: #{tpu_custom_call.1} parent=124 // pred_region
          %s1406 = sand.u32 %s369, 1
          %s1407 = scalar_lea.sflag [#allocation5], %s1406
          %s1408 = sand.u32 %s369, 1
          %s1409 = smul.addr %s1408, 8
          %s1410 = scalar_lea.vmem [#allocation4], %s1409
          %1411 = dma.done %s1407, 128
        $region129: #{tpu_custom_call.1} parent=124 // pred_fallthru
          _
      $region125: #{tpu_custom_call.1} parent=5 // pred_fallthru
        _
    $region6: #{tpu_custom_call.1} parent=1 // loop_footer
      %s27 = sadd.s32 1, %s23
    $region7: #{tpu_custom_call.1} parent=1 // loop_footer_branch
      %22 = sbr.rel target = $region3
    $region8: #{tpu_custom_call.1} parent=1 // loop_exit
      _
    %1412 = vsyncpa [#allocation5], 1
    %s1413 = scalar_lea.sflag [#allocation5], 1
    %1414 = vsyncpa %s1413, 1

</llo_original>
